<compile_context>
chip_gen: v7x
topology: tpu7x:2x2x1
jax: 0.10.0
libtpu: 0.0.40
codegen_flags: <defaults>
</compile_context>

<pallas_src>
import functools

import jax
import jax.numpy as jnp
from jax import lax
from jax.experimental import pallas as pl
from jax.experimental.pallas import tpu as pltpu

EPS = 1e-5
_PER_TAP_MIN_CIN = 256   # per review: skip the 9x patches concat for wide channels


# ---------------------------------------------------------------------------
# Generation-aware VMEM limit / conv tile budget.
# ---------------------------------------------------------------------------
def _query_vmem_capacity_bytes():
    try:
        info = pltpu.get_tpu_info()
        return int(getattr(info, "vmem_capacity_bytes", 64 * 1024 * 1024))
    except Exception:          # query unavailable -> conservative (v7x-like) default
        return 64 * 1024 * 1024


_VMEM_CAP = _query_vmem_capacity_bytes()
# ~96 MiB scoped limit on 128 MiB parts (v5e/v6e), ~48 MiB on 64 MiB parts (v7x).
_VMEM_LIMIT = int(min((_VMEM_CAP * 3) // 4, 100 * 1024 * 1024))
# per-tile bf16 im2col patches budget
_CONV_TILE_BYTES = 8 * 1024 * 1024 if _VMEM_CAP >= 96 * 1024 * 1024 else 4 * 1024 * 1024


def _compiler_params(grid_rank):
    return pltpu.CompilerParams(
        dimension_semantics=("parallel",) * grid_rank,
        vmem_limit_bytes=_VMEM_LIMIT)


# ---------------------------------------------------------------------------
# Kernel 1/2: (optional fused BN+ReLU of the previous stage) -> 3x3 'same'
# conv as MXU matmul(s) -> pre-BN output tile (bf16) + per-tile [sum, sum_sq].
# ---------------------------------------------------------------------------
def _conv_bn_stats_kernel(x_ref, scale_ref, shift_ref, w_ref, z_ref, st_ref,
                          *, ksize, th, H, W, pre_bn_relu):
    Cin = x_ref.shape[-1]
    Cout = w_ref.shape[-1]
    pad = (ksize - 1) // 2
    tin = th + 2 * pad            # input rows feeding th output rows
    Wp = W + 2 * pad

    t = pl.program_id(1)
    row0 = pl.multiple_of(t * th, th)            # start row in padded coords
    xt = x_ref[0, pl.ds(row0, tin), :, :]        # (tin, Wp, Cin) bf16

    if pre_bn_relu:
        # BN+ReLU of the previous conv (scale/shift precomputed in f32), then
        # re-zero the spatial zero-pad border (relu(shift) may be nonzero there).
        act = jnp.maximum(xt.astype(jnp.float32) * scale_ref[0] + shift_ref[0], 0.0)
        grow = row0 + lax.broadcasted_iota(jnp.int32, (tin, Wp, 1), 0)
        gcol = lax.broadcasted_iota(jnp.int32, (tin, Wp, 1), 1)
        interior = ((grow >= pad) & (grow < H + pad) &
                    (gcol >= pad) & (gcol < W + pad))
        xt = jnp.where(interior, act, 0.0).astype(jnp.bfloat16)

    taps = [(kh, kw) for kh in range(ksize) for kw in range(ksize)]
    if Cin >= _PER_TAP_MIN_CIN:
        # Wide channels: accumulate per-tap matmuls, no 9x patches buffer.
        acc = jnp.zeros((th * W, Cout), jnp.float32)
        for i, (kh, kw) in enumerate(taps):
            lhs = xt[kh:kh + th, kw:kw + W, :].reshape(th * W, Cin)
            acc = acc + jnp.dot(lhs, w_ref[i * Cin:(i + 1) * Cin, :],
                                preferred_element_type=jnp.float32)
    else:
        # im2col: one (th*W, K*K*Cin) x (K*K*Cin, Cout) MXU matmul, bf16 operands.
        cols = [xt[kh:kh + th, kw:kw + W, :].reshape(th * W, Cin) for kh, kw in taps]
        patches = cols[0] if len(cols) == 1 else jnp.concatenate(cols, axis=-1)
        acc = jnp.dot(patches, w_ref[...], preferred_element_type=jnp.float32)

    # TODO(synk): for Cout < 128 this store is lane-masked; making it lane-dense
    # needs an in-kernel minor-dim relayout (acc -> (th, W*Cout)). Dense already
    # for Cout >= 128 layers.
    z_ref[0] = acc.astype(jnp.bfloat16)                         # (th*W, Cout)
    st_ref[0, 0] = jnp.concatenate(
        [jnp.sum(acc, axis=0, keepdims=True),
         jnp.sum(acc * acc, axis=0, keepdims=True)], axis=0)    # (2, Cout)


def _conv_bn_stats_call(xpad, scale, shift, w2d, *, ksize, H, W, th, pre_bn_relu):
    N, Hp, Wp, Cin = xpad.shape
    Cout = w2d.shape[-1]
    HT = H // th
    kern = functools.partial(_conv_bn_stats_kernel, ksize=ksize, th=th, H=H, W=W,
                             pre_bn_relu=pre_bn_relu)
    z, st = pl.pallas_call(
        kern,
        grid=(N, HT),
        in_specs=[
            # Whole padded image per batch element; the block index is constant
            # across the inner row-tile axis so the DMA is not re-issued per tile.
            pl.BlockSpec((1, Hp, Wp, Cin), lambda b, t: (b, 0, 0, 0)),
            pl.BlockSpec((1, Cin), lambda b, t: (0, 0)),
            pl.BlockSpec((1, Cin), lambda b, t: (0, 0)),
            pl.BlockSpec((ksize * ksize * Cin, Cout), lambda b, t: (0, 0)),
        ],
        out_specs=[
            pl.BlockSpec((1, th * W, Cout), lambda b, t: (b, t, 0)),
            pl.BlockSpec((1, 1, 2, Cout), lambda b, t: (b, t, 0, 0)),
        ],
        out_shape=[
            jax.ShapeDtypeStruct((N, H * W, Cout), jnp.bfloat16),
            jax.ShapeDtypeStruct((N, HT, 2, Cout), jnp.float32),
        ],
        compiler_params=_compiler_params(2),
    )(xpad, scale, shift, w2d)
    return z, st


# ---------------------------------------------------------------------------
# Kernel 3: BN2 + residual add + ReLU on a lane-dense (N*H, W*C) view.
# ---------------------------------------------------------------------------
def _bn_add_relu_kernel(z_ref, res_ref, scale_ref, shift_ref, o_ref):
    z = z_ref[...].astype(jnp.float32)
    o_ref[...] = jnp.maximum(z * scale_ref[...] + shift_ref[...] + res_ref[...], 0.0)


def _pick_row_tile(rows, max_rows=1024):
    if rows <= max_rows:
        return rows
    best = None
    for t in range(8, max_rows + 1, 8):
        if rows % t == 0:
            best = t
    if best is not None:
        return best
    return (max_rows // 8) * 8        # cdiv grid masks the ragged tail


def _bn_add_relu_call(z2, res_nhwc, scale, shift):
    N, H, W, C = res_nhwc.shape
    rows, lanes = N * H, W * C
    zf = z2.reshape(rows, lanes)          # (N, H*W, C) -> (N*H, W*C): free regroup
    rf = res_nhwc.reshape(rows, lanes)
    sc = jnp.tile(scale, (1, W))
    sh = jnp.tile(shift, (1, W))
    tr = _pick_row_tile(rows)
    out = pl.pallas_call(
        _bn_add_relu_kernel,
        grid=(pl.cdiv(rows, tr),),
        in_specs=[
            pl.BlockSpec((tr, lanes), lambda i: (i, 0)),
            pl.BlockSpec((tr, lanes), lambda i: (i, 0)),
            pl.BlockSpec((1, lanes), lambda i: (0, 0)),
            pl.BlockSpec((1, lanes), lambda i: (0, 0)),
        ],
        out_specs=pl.BlockSpec((tr, lanes), lambda i: (i, 0)),
        out_shape=jax.ShapeDtypeStruct((rows, lanes), jnp.float32),
        compiler_params=_compiler_params(1),
    )(zf, rf, sc, sh)
    return out.reshape(N, H, W, C)


# ---------------------------------------------------------------------------
# Helpers: BN scale/shift from partial stats, conv row-tile selection.
# ---------------------------------------------------------------------------
def _bn_affine(stats, gamma, beta, count):
    """Training-mode BatchNorm (biased variance) folded to per-channel scale/shift."""
    s = jnp.sum(stats, axis=(0, 1))                   # (2, C): [sum, sum_sq]
    mean = s[0] / count
    var = jnp.maximum(s[1] / count - mean * mean, 0.0)
    # TODO(synk): E[x^2]-E[x]^2 is cancellation-prone at very large N*H*W; use a
    # shifted/Welford accumulation if tolerances tighten at production scale.
    inv = lax.rsqrt(var + EPS)
    scale = gamma * inv
    shift = beta - mean * scale
    return (scale.reshape(1, -1).astype(jnp.float32),
            shift.reshape(1, -1).astype(jnp.float32))


def _pick_conv_row_tile(H, W, Cin, ksize, override=None):
    """Largest multiple-of-8 row tile dividing H whose bf16 im2col patches block
    fits the generation-aware budget (whole H if no such divisor exists)."""
    if override is not None:
        if H % override != 0 or (override % 8 != 0 and override != H):
            raise ValueError("row_tile must divide H and be a multiple of 8 (or equal H)")
        return override
    bytes_per_row = max(1, W * ksize * ksize * Cin * 2)     # bf16 patches row
    max_th = max(8, _CONV_TILE_BYTES // bytes_per_row)
    best = None
    for t in range(8, H + 1, 8):
        if H % t == 0 and t <= max_th:
            best = t
    return best if best is not None else H


# ---------------------------------------------------------------------------
# Wrappers: NHWC fast path + NCHW interface matching the PyTorch module.
# ---------------------------------------------------------------------------
def resblock_forward_nhwc(x, w1_oihw, g1, b1, w2_oihw, g2, b2, row_tile=None):
    """ResBlock forward on NHWC activations (avoids layout transposes).
    Conv weights in PyTorch OIHW layout; training-mode BatchNorm."""
    N, H, W, Cin = x.shape
    Cout, _, KH, KW = w1_oihw.shape
    # TODO(synk): stride>1 / downsample projection path not implemented — module
    # defaults are stride=1, downsample=None, so the identity add needs Cin == Cout.
    p = (KH - 1) // 2
    count = N * H * W

    # (Cout, Cin, KH, KW) -> (KH*KW*Cin, Cout), matching the im2col tap order, bf16.
    w1 = jnp.transpose(w1_oihw, (2, 3, 1, 0)).reshape(KH * KW * Cin, Cout).astype(jnp.bfloat16)
    w2 = jnp.transpose(w2_oihw, (2, 3, 1, 0)).reshape(KH * KW * Cout, Cout).astype(jnp.bfloat16)

    # conv1: zero-pre-padded bf16 input (one cheap XLA op), no fused pre-BN.
    x1p = jnp.pad(x.astype(jnp.bfloat16), ((0, 0), (p, p), (p, p), (0, 0)))
    th1 = _pick_conv_row_tile(H, W, Cin, KH, row_tile)
    ones = jnp.ones((1, Cin), jnp.float32)
    zeros = jnp.zeros((1, Cin), jnp.float32)
    z1, st1 = _conv_bn_stats_call(x1p, ones, zeros, w1, ksize=KH, H=H, W=W,
                                  th=th1, pre_bn_relu=False)
    scale1, shift1 = _bn_affine(st1, g1, b1, count)

    # conv2 with BN1 + ReLU fused into the operand build (z1 stays pre-BN bf16).
    z1p = jnp.pad(z1.reshape(N, H, W, Cout), ((0, 0), (p, p), (p, p), (0, 0)))
    th2 = _pick_conv_row_tile(H, W, Cout, KH, row_tile)
    z2, st2 = _conv_bn_stats_call(z1p, scale1, shift1, w2, ksize=KH, H=H, W=W,
                                  th=th2, pre_bn_relu=True)
    scale2, shift2 = _bn_affine(st2, g2, b2, count)

    # BN2 + identity add + ReLU (lane-dense elementwise epilogue).
    return _bn_add_relu_call(z2, x, scale2, shift2)


@functools.partial(jax.jit, static_argnames=("row_tile",))
def resblock_forward(x_nchw, w1_oihw, g1, b1, w2_oihw, g2, b2, row_tile=None):
    """NCHW wrapper matching the PyTorch module interface."""
    # TODO(synk): each transpose costs a full HBM read+write; callers that can
    # produce/consume NHWC should call resblock_forward_nhwc directly.
    x = jnp.transpose(x_nchw, (0, 2, 3, 1))
    y = resblock_forward_nhwc(x, w1_oihw, g1, b1, w2_oihw, g2, b2, row_tile=row_tile)
    return jnp.transpose(y, (0, 3, 1, 2))


# ---------------------------------------------------------------------------
# Pure-JAX reference mirroring the PyTorch forward (training-mode BN).
# conv_dtype=bfloat16 mirrors the kernel's bf16 MXU operands.
# ---------------------------------------------------------------------------
def _ref_resblock(x, w1, g1, b1, w2, g2, b2, conv_dtype=jnp.float32):
    p = (w1.shape[-1] - 1) // 2

    def conv(a, w):
        return lax.conv_general_dilated(
            a.astype(conv_dtype).astype(jnp.float32),
            w.astype(conv_dtype).astype(jnp.float32),
            window_strides=(1, 1), padding=((p, p), (p, p)),
            dimension_numbers=("NCHW", "OIHW", "NCHW"),
            precision=lax.Precision.HIGHEST)

    def bn(a, g, b):
        mean = jnp.mean(a, axis=(0, 2, 3), keepdims=True)
        var = jnp.mean((a - mean) ** 2, axis=(0, 2, 3), keepdims=True)
        return ((a - mean) * lax.rsqrt(var + EPS)
                * g.reshape(1, -1, 1, 1) + b.reshape(1, -1, 1, 1))

    out = jax.nn.relu(bn(conv(x, w1), g1, b1))
    out = bn(conv(out, w2), g2, b2) + x
    return jax.nn.relu(out)


if __name__ == "__main__":
    N, C, H, W, F = 2, 8, 16, 16, 3                 # C_in == C_out (identity add)
    key = jax.random.PRNGKey(0)
    kx, k1, k2 = jax.random.split(key, 3)
    x = jax.random.normal(kx, (N, C, H, W), jnp.float32)
    # conv weights: PyTorch nn.Conv2d layout (C_out, C_in, F, F), bias=False
    w1 = 0.1 * jax.random.normal(k1, (C, C, F, F), jnp.float32)
    w2 = 0.1 * jax.random.normal(k2, (C, C, F, F), jnp.float32)
    # BatchNorm2d default init: weight=1, bias=0
    g1 = jnp.ones((C,), jnp.float32); b1 = jnp.zeros((C,), jnp.float32)
    g2 = jnp.ones((C,), jnp.float32); b2 = jnp.zeros((C,), jnp.float32)

    out = resblock_forward(x, w1, g1, b1, w2, g2, b2)
    jax.block_until_ready(out)
    assert out.shape == (N, C, H, W)

    # Exercise the multi-row-tile conv path (grid=(N, H//8)) as well.
    out_tiled = resblock_forward(x, w1, g1, b1, w2, g2, b2, row_tile=8)
    jax.block_until_ready(out_tiled)
    tile_err = float(jnp.max(jnp.abs(out - out_tiled)))
    assert tile_err < 1e-3, f"row-tiled path mismatch: {tile_err}"

    # Check against a reference using the same bf16 conv operands (z1/z2 are
    # additionally stored in bf16 in the kernel, hence the slightly wider tol).
    ref_bf16 = _ref_resblock(x, w1, g1, b1, w2, g2, b2, conv_dtype=jnp.bfloat16)
    err_b = float(jnp.max(jnp.abs(out - ref_bf16)))
    assert err_b < 4e-2, f"max err vs bf16-operand reference: {err_b}"

    # Loose sanity check vs the full-f32 PyTorch-semantics reference.
    ref_f32 = _ref_resblock(x, w1, g1, b1, w2, g2, b2, conv_dtype=jnp.float32)
    err_f = float(jnp.max(jnp.abs(out - ref_f32)))
    assert err_f < 0.25, f"max err vs f32 reference: {err_f}"

    print("KERNEL_OK")
</pallas_src>

<mosaic_0001>
module attributes {stable_mosaic.version = 11 : i64} {
  func.func @_conv_bn_stats_kernel(%arg0: i32, %arg1: i32, %arg2: memref<1x18x18x8xbf16, #tpu.memory_space<vmem>>, %arg3: memref<1x8xf32, #tpu.memory_space<vmem>>, %arg4: memref<1x8xf32, #tpu.memory_space<vmem>>, %arg5: memref<72x8xbf16, #tpu.memory_space<vmem>>, %arg6: memref<1x256x8xbf16, #tpu.memory_space<vmem>>, %arg7: memref<1x1x2x8xf32, #tpu.memory_space<vmem>>) attributes {dimension_semantics = [#tpu.dimension_semantics<parallel>, #tpu.dimension_semantics<parallel>], iteration_bounds = array<i64: 2, 1>, scalar_prefetch = 0 : i64, scratch_operands = 0 : i64, tpu.core_type = #tpu.core_type<tc>, window_params = [{transform_indices = @transform_0, window_bounds = array<i64: 1, 18, 18, 8>}, {pipeline_mode = #tpu.pipeline_mode<synchronous>, transform_indices = @transform_1, window_bounds = array<i64: 1, 8>}, {pipeline_mode = #tpu.pipeline_mode<synchronous>, transform_indices = @transform_2, window_bounds = array<i64: 1, 8>}, {pipeline_mode = #tpu.pipeline_mode<synchronous>, transform_indices = @transform_3, window_bounds = array<i64: 72, 8>}, {transform_indices = @transform_4, window_bounds = array<i64: 1, 256, 8>}, {transform_indices = @transform_5, window_bounds = array<i64: 1, 1, 2, 8>}]} {
    %c16_i32 = arith.constant 16 : i32
    %0 = arith.muli %arg1, %c16_i32 : i32
    %1 = tpu.assume_multiple %0, 16 : i32
    %c0 = arith.constant 0 : index
    %2 = arith.index_cast %1 : i32 to index
    %c0_0 = arith.constant 0 : index
    %c0_1 = arith.constant 0 : index
    %3 = vector.load %arg2[%c0, %2, %c0_0, %c0_1] : memref<1x18x18x8xbf16, #tpu.memory_space<vmem>>, vector<1x18x18x8xbf16>
    %4 = vector.shape_cast %3 : vector<1x18x18x8xbf16> to vector<18x18x8xbf16>
    %5 = arith.extf %4 : vector<18x18x8xbf16> to vector<18x18x8xf32>
    %c0_2 = arith.constant 0 : index
    %c0_3 = arith.constant 0 : index
    %6 = vector.load %arg3[%c0_2, %c0_3] : memref<1x8xf32, #tpu.memory_space<vmem>>, vector<1x8xf32>
    %7 = vector.shape_cast %6 : vector<1x8xf32> to vector<8xf32>
    %8 = vector.shape_cast %7 : vector<8xf32> to vector<1x1x8xf32>
    %9 = vector.broadcast %8 : vector<1x1x8xf32> to vector<18x18x8xf32>
    %10 = arith.mulf %5, %9 : vector<18x18x8xf32>
    %c0_4 = arith.constant 0 : index
    %c0_5 = arith.constant 0 : index
    %11 = vector.load %arg4[%c0_4, %c0_5] : memref<1x8xf32, #tpu.memory_space<vmem>>, vector<1x8xf32>
    %12 = vector.shape_cast %11 : vector<1x8xf32> to vector<8xf32>
    %13 = vector.shape_cast %12 : vector<8xf32> to vector<1x1x8xf32>
    %14 = vector.broadcast %13 : vector<1x1x8xf32> to vector<18x18x8xf32>
    %15 = arith.addf %10, %14 : vector<18x18x8xf32>
    %cst = arith.constant 0.000000e+00 : f32
    %16 = vector.broadcast %cst : f32 to vector<18x18x8xf32>
    %17 = arith.maximumf %15, %16 : vector<18x18x8xf32>
    %18 = tpu.iota {dimensions = array<i32: 0>} : vector<18x18x1xi32>
    %19 = vector.broadcast %1 : i32 to vector<18x18x1xi32>
    %20 = arith.addi %19, %18 : vector<18x18x1xi32>
    %21 = tpu.iota {dimensions = array<i32: 1>} : vector<18x18x1xi32>
    %c1_i32 = arith.constant 1 : i32
    %22 = vector.broadcast %c1_i32 : i32 to vector<18x18x1xi32>
    %23 = arith.cmpi sge, %20, %22 : vector<18x18x1xi32>
    %c17_i32 = arith.constant 17 : i32
    %24 = vector.broadcast %c17_i32 : i32 to vector<18x18x1xi32>
    %25 = arith.cmpi slt, %20, %24 : vector<18x18x1xi32>
    %26 = arith.andi %23, %25 : vector<18x18x1xi1>
    %c1_i32_6 = arith.constant 1 : i32
    %27 = vector.broadcast %c1_i32_6 : i32 to vector<18x18x1xi32>
    %28 = arith.cmpi sge, %21, %27 : vector<18x18x1xi32>
    %29 = arith.andi %26, %28 : vector<18x18x1xi1>
    %c17_i32_7 = arith.constant 17 : i32
    %30 = vector.broadcast %c17_i32_7 : i32 to vector<18x18x1xi32>
    %31 = arith.cmpi slt, %21, %30 : vector<18x18x1xi32>
    %32 = arith.andi %29, %31 : vector<18x18x1xi1>
    %cst_8 = arith.constant 0.000000e+00 : f32
    %33 = vector.shape_cast %32 : vector<18x18x1xi1> to vector<18x18x1xi1>
    %34 = vector.broadcast %33 : vector<18x18x1xi1> to vector<18x18x8xi1>
    %35 = vector.broadcast %cst_8 : f32 to vector<18x18x8xf32>
    %36 = arith.select %34, %17, %35 : vector<18x18x8xi1>, vector<18x18x8xf32>
    %37 = arith.truncf %36 : vector<18x18x8xf32> to vector<18x18x8xbf16>
    %38 = vector.extract_strided_slice %37 {offsets = [0, 0, 0], sizes = [16, 16, 8], strides = [1, 1, 1]} : vector<18x18x8xbf16> to vector<16x16x8xbf16>
    %39 = vector.shape_cast %38 : vector<16x16x8xbf16> to vector<256x8xbf16>
    %40 = vector.extract_strided_slice %37 {offsets = [0, 1, 0], sizes = [16, 16, 8], strides = [1, 1, 1]} : vector<18x18x8xbf16> to vector<16x16x8xbf16>
    %41 = vector.shape_cast %40 : vector<16x16x8xbf16> to vector<256x8xbf16>
    %42 = vector.extract_strided_slice %37 {offsets = [0, 2, 0], sizes = [16, 16, 8], strides = [1, 1, 1]} : vector<18x18x8xbf16> to vector<16x16x8xbf16>
    %43 = vector.shape_cast %42 : vector<16x16x8xbf16> to vector<256x8xbf16>
    %44 = vector.extract_strided_slice %37 {offsets = [1, 0, 0], sizes = [16, 16, 8], strides = [1, 1, 1]} : vector<18x18x8xbf16> to vector<16x16x8xbf16>
    %45 = vector.shape_cast %44 : vector<16x16x8xbf16> to vector<256x8xbf16>
    %46 = vector.extract_strided_slice %37 {offsets = [1, 1, 0], sizes = [16, 16, 8], strides = [1, 1, 1]} : vector<18x18x8xbf16> to vector<16x16x8xbf16>
    %47 = vector.shape_cast %46 : vector<16x16x8xbf16> to vector<256x8xbf16>
    %48 = vector.extract_strided_slice %37 {offsets = [1, 2, 0], sizes = [16, 16, 8], strides = [1, 1, 1]} : vector<18x18x8xbf16> to vector<16x16x8xbf16>
    %49 = vector.shape_cast %48 : vector<16x16x8xbf16> to vector<256x8xbf16>
    %50 = vector.extract_strided_slice %37 {offsets = [2, 0, 0], sizes = [16, 16, 8], strides = [1, 1, 1]} : vector<18x18x8xbf16> to vector<16x16x8xbf16>
    %51 = vector.shape_cast %50 : vector<16x16x8xbf16> to vector<256x8xbf16>
    %52 = vector.extract_strided_slice %37 {offsets = [2, 1, 0], sizes = [16, 16, 8], strides = [1, 1, 1]} : vector<18x18x8xbf16> to vector<16x16x8xbf16>
    %53 = vector.shape_cast %52 : vector<16x16x8xbf16> to vector<256x8xbf16>
    %54 = vector.extract_strided_slice %37 {offsets = [2, 2, 0], sizes = [16, 16, 8], strides = [1, 1, 1]} : vector<18x18x8xbf16> to vector<16x16x8xbf16>
    %55 = vector.shape_cast %54 : vector<16x16x8xbf16> to vector<256x8xbf16>
    %56 = tpu.concatenate %39, %41, %43, %45, %47, %49, %51, %53, %55 in 1 : vector<256x8xbf16>, vector<256x8xbf16>, vector<256x8xbf16>, vector<256x8xbf16>, vector<256x8xbf16>, vector<256x8xbf16>, vector<256x8xbf16>, vector<256x8xbf16>, vector<256x8xbf16> -> vector<256x72xbf16>
    %c0_9 = arith.constant 0 : index
    %c0_10 = arith.constant 0 : index
    %57 = vector.load %arg5[%c0_9, %c0_10] : memref<72x8xbf16, #tpu.memory_space<vmem>>, vector<72x8xbf16>
    %cst_11 = arith.constant dense<0.000000e+00> : vector<256x8xf32>
    %58 = tpu.matmul %56, %57, %cst_11 {dimension_numbers = #tpu.dot_dimension_numbers<[1], [0], [0], [1], [0, 0, 1, 1], [], []>} : vector<256x72xbf16>, vector<72x8xbf16>, vector<256x8xf32> -> vector<256x8xf32>
    %59 = arith.truncf %58 : vector<256x8xf32> to vector<256x8xbf16>
    %c0_12 = arith.constant 0 : index
    %c0_13 = arith.constant 0 : index
    %c0_14 = arith.constant 0 : index
    %60 = vector.load %arg6[%c0_12, %c0_13, %c0_14] : memref<1x256x8xbf16, #tpu.memory_space<vmem>>, vector<1x256x8xbf16>
    %61 = vector.shape_cast %60 : vector<1x256x8xbf16> to vector<256x8xbf16>
    %62 = vector.shape_cast %59 : vector<256x8xbf16> to vector<1x256x8xbf16>
    tpu.vector_store %arg6[%c0_12, %c0_13, %c0_14], %62 {strides = array<i32>} : memref<1x256x8xbf16, #tpu.memory_space<vmem>>, vector<1x256x8xbf16>,
    %cst_15 = arith.constant dense<0.000000e+00> : vector<8xf32>
    %63 = vector.multi_reduction <add>, %58, %cst_15 [0] : vector<256x8xf32> to vector<8xf32>
    %64 = vector.shape_cast %63 : vector<8xf32> to vector<1x8xf32>
    %65 = arith.mulf %58, %58 : vector<256x8xf32>
    %cst_16 = arith.constant dense<0.000000e+00> : vector<8xf32>
    %66 = vector.multi_reduction <add>, %65, %cst_16 [0] : vector<256x8xf32> to vector<8xf32>
    %67 = vector.shape_cast %66 : vector<8xf32> to vector<1x8xf32>
    %68 = tpu.concatenate %64, %67 in 0 : vector<1x8xf32>, vector<1x8xf32> -> vector<2x8xf32>
    %c0_17 = arith.constant 0 : index
    %c0_18 = arith.constant 0 : index
    %c0_19 = arith.constant 0 : index
    %c0_20 = arith.constant 0 : index
    %69 = vector.load %arg7[%c0_17, %c0_18, %c0_19, %c0_20] : memref<1x1x2x8xf32, #tpu.memory_space<vmem>>, vector<1x1x2x8xf32>
    %70 = vector.shape_cast %69 : vector<1x1x2x8xf32> to vector<2x8xf32>
    %71 = vector.shape_cast %68 : vector<2x8xf32> to vector<1x1x2x8xf32>
    tpu.vector_store %arg7[%c0_17, %c0_18, %c0_19, %c0_20], %71 {strides = array<i32>} : memref<1x1x2x8xf32, #tpu.memory_space<vmem>>, vector<1x1x2x8xf32>,
    return
  }
  func.func @transform_0(%arg0: i32, %arg1: i32) -> (i32, i32, i32, i32) {
    %c0_i32 = arith.constant 0 : i32
    %c0_i32_0 = arith.constant 0 : i32
    %c0_i32_1 = arith.constant 0 : i32
    %c0_i32_2 = arith.constant 0 : i32
    return %arg0, %c0_i32, %c0_i32_0, %c0_i32_1 : i32, i32, i32, i32
  }
  func.func @transform_1(%arg0: i32, %arg1: i32) -> (i32, i32) {
    %c0_i32 = arith.constant 0 : i32
    %c0_i32_0 = arith.constant 0 : i32
    %c0_i32_1 = arith.constant 0 : i32
    return %c0_i32, %c0_i32_0 : i32, i32
  }
  func.func @transform_2(%arg0: i32, %arg1: i32) -> (i32, i32) {
    %c0_i32 = arith.constant 0 : i32
    %c0_i32_0 = arith.constant 0 : i32
    %c0_i32_1 = arith.constant 0 : i32
    return %c0_i32, %c0_i32_0 : i32, i32
  }
  func.func @transform_3(%arg0: i32, %arg1: i32) -> (i32, i32) {
    %c0_i32 = arith.constant 0 : i32
    %c0_i32_0 = arith.constant 0 : i32
    %c0_i32_1 = arith.constant 0 : i32
    return %c0_i32, %c0_i32_0 : i32, i32
  }
  func.func @transform_4(%arg0: i32, %arg1: i32) -> (i32, i32, i32) {
    %c0_i32 = arith.constant 0 : i32
    %c0_i32_0 = arith.constant 0 : i32
    return %arg0, %arg1, %c0_i32 : i32, i32, i32
  }
  func.func @transform_5(%arg0: i32, %arg1: i32) -> (i32, i32, i32, i32) {
    %c0_i32 = arith.constant 0 : i32
    %c0_i32_0 = arith.constant 0 : i32
    %c0_i32_1 = arith.constant 0 : i32
    return %arg0, %arg1, %c0_i32, %c0_i32_0 : i32, i32, i32, i32
  }
}

module attributes {stable_mosaic.version = 11 : i64} {
  func.func @_conv_bn_stats_kernel(%arg0: i32, %arg1: i32, %arg2: memref<1x18x18x8xbf16, #tpu.memory_space<vmem>>, %arg3: memref<1x8xf32, #tpu.memory_space<vmem>>, %arg4: memref<1x8xf32, #tpu.memory_space<vmem>>, %arg5: memref<72x8xbf16, #tpu.memory_space<vmem>>, %arg6: memref<1x256x8xbf16, #tpu.memory_space<vmem>>, %arg7: memref<1x1x2x8xf32, #tpu.memory_space<vmem>>) attributes {dimension_semantics = [#tpu.dimension_semantics<parallel>, #tpu.dimension_semantics<parallel>], iteration_bounds = array<i64: 2, 1>, scalar_prefetch = 0 : i64, scratch_operands = 0 : i64, tpu.core_type = #tpu.core_type<tc>, window_params = [{transform_indices = @transform_0, window_bounds = array<i64: 1, 18, 18, 8>}, {pipeline_mode = #tpu.pipeline_mode<synchronous>, transform_indices = @transform_1, window_bounds = array<i64: 1, 8>}, {pipeline_mode = #tpu.pipeline_mode<synchronous>, transform_indices = @transform_2, window_bounds = array<i64: 1, 8>}, {pipeline_mode = #tpu.pipeline_mode<synchronous>, transform_indices = @transform_3, window_bounds = array<i64: 72, 8>}, {transform_indices = @transform_4, window_bounds = array<i64: 1, 256, 8>}, {transform_indices = @transform_5, window_bounds = array<i64: 1, 1, 2, 8>}]} {
    %c16_i32 = arith.constant 16 : i32
    %0 = arith.muli %arg1, %c16_i32 : i32
    %1 = tpu.assume_multiple %0, 16 : i32
    %c0 = arith.constant 0 : index
    %2 = arith.index_cast %1 : i32 to index
    %c0_0 = arith.constant 0 : index
    %c0_1 = arith.constant 0 : index
    %3 = vector.load %arg2[%c0, %2, %c0_0, %c0_1] : memref<1x18x18x8xbf16, #tpu.memory_space<vmem>>, vector<1x18x18x8xbf16>
    %4 = vector.shape_cast %3 : vector<1x18x18x8xbf16> to vector<18x18x8xbf16>
    %5 = vector.extract_strided_slice %4 {offsets = [0, 0, 0], sizes = [16, 16, 8], strides = [1, 1, 1]} : vector<18x18x8xbf16> to vector<16x16x8xbf16>
    %6 = vector.shape_cast %5 : vector<16x16x8xbf16> to vector<256x8xbf16>
    %7 = vector.extract_strided_slice %4 {offsets = [0, 1, 0], sizes = [16, 16, 8], strides = [1, 1, 1]} : vector<18x18x8xbf16> to vector<16x16x8xbf16>
    %8 = vector.shape_cast %7 : vector<16x16x8xbf16> to vector<256x8xbf16>
    %9 = vector.extract_strided_slice %4 {offsets = [0, 2, 0], sizes = [16, 16, 8], strides = [1, 1, 1]} : vector<18x18x8xbf16> to vector<16x16x8xbf16>
    %10 = vector.shape_cast %9 : vector<16x16x8xbf16> to vector<256x8xbf16>
    %11 = vector.extract_strided_slice %4 {offsets = [1, 0, 0], sizes = [16, 16, 8], strides = [1, 1, 1]} : vector<18x18x8xbf16> to vector<16x16x8xbf16>
    %12 = vector.shape_cast %11 : vector<16x16x8xbf16> to vector<256x8xbf16>
    %13 = vector.extract_strided_slice %4 {offsets = [1, 1, 0], sizes = [16, 16, 8], strides = [1, 1, 1]} : vector<18x18x8xbf16> to vector<16x16x8xbf16>
    %14 = vector.shape_cast %13 : vector<16x16x8xbf16> to vector<256x8xbf16>
    %15 = vector.extract_strided_slice %4 {offsets = [1, 2, 0], sizes = [16, 16, 8], strides = [1, 1, 1]} : vector<18x18x8xbf16> to vector<16x16x8xbf16>
    %16 = vector.shape_cast %15 : vector<16x16x8xbf16> to vector<256x8xbf16>
    %17 = vector.extract_strided_slice %4 {offsets = [2, 0, 0], sizes = [16, 16, 8], strides = [1, 1, 1]} : vector<18x18x8xbf16> to vector<16x16x8xbf16>
    %18 = vector.shape_cast %17 : vector<16x16x8xbf16> to vector<256x8xbf16>
    %19 = vector.extract_strided_slice %4 {offsets = [2, 1, 0], sizes = [16, 16, 8], strides = [1, 1, 1]} : vector<18x18x8xbf16> to vector<16x16x8xbf16>
    %20 = vector.shape_cast %19 : vector<16x16x8xbf16> to vector<256x8xbf16>
    %21 = vector.extract_strided_slice %4 {offsets = [2, 2, 0], sizes = [16, 16, 8], strides = [1, 1, 1]} : vector<18x18x8xbf16> to vector<16x16x8xbf16>
    %22 = vector.shape_cast %21 : vector<16x16x8xbf16> to vector<256x8xbf16>
    %23 = tpu.concatenate %6, %8, %10, %12, %14, %16, %18, %20, %22 in 1 : vector<256x8xbf16>, vector<256x8xbf16>, vector<256x8xbf16>, vector<256x8xbf16>, vector<256x8xbf16>, vector<256x8xbf16>, vector<256x8xbf16>, vector<256x8xbf16>, vector<256x8xbf16> -> vector<256x72xbf16>
    %c0_2 = arith.constant 0 : index
    %c0_3 = arith.constant 0 : index
    %24 = vector.load %arg5[%c0_2, %c0_3] : memref<72x8xbf16, #tpu.memory_space<vmem>>, vector<72x8xbf16>
    %cst = arith.constant dense<0.000000e+00> : vector<256x8xf32>
    %25 = tpu.matmul %23, %24, %cst {dimension_numbers = #tpu.dot_dimension_numbers<[1], [0], [0], [1], [0, 0, 1, 1], [], []>} : vector<256x72xbf16>, vector<72x8xbf16>, vector<256x8xf32> -> vector<256x8xf32>
    %26 = arith.truncf %25 : vector<256x8xf32> to vector<256x8xbf16>
    %c0_4 = arith.constant 0 : index
    %c0_5 = arith.constant 0 : index
    %c0_6 = arith.constant 0 : index
    %27 = vector.load %arg6[%c0_4, %c0_5, %c0_6] : memref<1x256x8xbf16, #tpu.memory_space<vmem>>, vector<1x256x8xbf16>
    %28 = vector.shape_cast %27 : vector<1x256x8xbf16> to vector<256x8xbf16>
    %29 = vector.shape_cast %26 : vector<256x8xbf16> to vector<1x256x8xbf16>
    tpu.vector_store %arg6[%c0_4, %c0_5, %c0_6], %29 {strides = array<i32>} : memref<1x256x8xbf16, #tpu.memory_space<vmem>>, vector<1x256x8xbf16>,
    %cst_7 = arith.constant dense<0.000000e+00> : vector<8xf32>
    %30 = vector.multi_reduction <add>, %25, %cst_7 [0] : vector<256x8xf32> to vector<8xf32>
    %31 = vector.shape_cast %30 : vector<8xf32> to vector<1x8xf32>
    %32 = arith.mulf %25, %25 : vector<256x8xf32>
    %cst_8 = arith.constant dense<0.000000e+00> : vector<8xf32>
    %33 = vector.multi_reduction <add>, %32, %cst_8 [0] : vector<256x8xf32> to vector<8xf32>
    %34 = vector.shape_cast %33 : vector<8xf32> to vector<1x8xf32>
    %35 = tpu.concatenate %31, %34 in 0 : vector<1x8xf32>, vector<1x8xf32> -> vector<2x8xf32>
    %c0_9 = arith.constant 0 : index
    %c0_10 = arith.constant 0 : index
    %c0_11 = arith.constant 0 : index
    %c0_12 = arith.constant 0 : index
    %36 = vector.load %arg7[%c0_9, %c0_10, %c0_11, %c0_12] : memref<1x1x2x8xf32, #tpu.memory_space<vmem>>, vector<1x1x2x8xf32>
    %37 = vector.shape_cast %36 : vector<1x1x2x8xf32> to vector<2x8xf32>
    %38 = vector.shape_cast %35 : vector<2x8xf32> to vector<1x1x2x8xf32>
    tpu.vector_store %arg7[%c0_9, %c0_10, %c0_11, %c0_12], %38 {strides = array<i32>} : memref<1x1x2x8xf32, #tpu.memory_space<vmem>>, vector<1x1x2x8xf32>,
    return
  }
  func.func @transform_0(%arg0: i32, %arg1: i32) -> (i32, i32, i32, i32) {
    %c0_i32 = arith.constant 0 : i32
    %c0_i32_0 = arith.constant 0 : i32
    %c0_i32_1 = arith.constant 0 : i32
    %c0_i32_2 = arith.constant 0 : i32
    return %arg0, %c0_i32, %c0_i32_0, %c0_i32_1 : i32, i32, i32, i32
  }
  func.func @transform_1(%arg0: i32, %arg1: i32) -> (i32, i32) {
    %c0_i32 = arith.constant 0 : i32
    %c0_i32_0 = arith.constant 0 : i32
    %c0_i32_1 = arith.constant 0 : i32
    return %c0_i32, %c0_i32_0 : i32, i32
  }
  func.func @transform_2(%arg0: i32, %arg1: i32) -> (i32, i32) {
    %c0_i32 = arith.constant 0 : i32
    %c0_i32_0 = arith.constant 0 : i32
    %c0_i32_1 = arith.constant 0 : i32
    return %c0_i32, %c0_i32_0 : i32, i32
  }
  func.func @transform_3(%arg0: i32, %arg1: i32) -> (i32, i32) {
    %c0_i32 = arith.constant 0 : i32
    %c0_i32_0 = arith.constant 0 : i32
    %c0_i32_1 = arith.constant 0 : i32
    return %c0_i32, %c0_i32_0 : i32, i32
  }
  func.func @transform_4(%arg0: i32, %arg1: i32) -> (i32, i32, i32) {
    %c0_i32 = arith.constant 0 : i32
    %c0_i32_0 = arith.constant 0 : i32
    return %arg0, %arg1, %c0_i32 : i32, i32, i32
  }
  func.func @transform_5(%arg0: i32, %arg1: i32) -> (i32, i32, i32, i32) {
    %c0_i32 = arith.constant 0 : i32
    %c0_i32_0 = arith.constant 0 : i32
    %c0_i32_1 = arith.constant 0 : i32
    return %arg0, %arg1, %c0_i32, %c0_i32_0 : i32, i32, i32, i32
  }
}

module attributes {stable_mosaic.version = 11 : i64} {
  func.func @_bn_add_relu_kernel(%arg0: i32, %arg1: memref<32x128xbf16, #tpu.memory_space<vmem>>, %arg2: memref<32x128xf32, #tpu.memory_space<vmem>>, %arg3: memref<1x128xf32, #tpu.memory_space<vmem>>, %arg4: memref<1x128xf32, #tpu.memory_space<vmem>>, %arg5: memref<32x128xf32, #tpu.memory_space<vmem>>) attributes {dimension_semantics = [#tpu.dimension_semantics<parallel>], iteration_bounds = array<i64: 1>, scalar_prefetch = 0 : i64, scratch_operands = 0 : i64, tpu.core_type = #tpu.core_type<tc>, window_params = [{transform_indices = @transform_0, window_bounds = array<i64: 32, 128>}, {transform_indices = @transform_1, window_bounds = array<i64: 32, 128>}, {pipeline_mode = #tpu.pipeline_mode<synchronous>, transform_indices = @transform_2, window_bounds = array<i64: 1, 128>}, {pipeline_mode = #tpu.pipeline_mode<synchronous>, transform_indices = @transform_3, window_bounds = array<i64: 1, 128>}, {transform_indices = @transform_4, window_bounds = array<i64: 32, 128>}]} {
    %c0 = arith.constant 0 : index
    %c0_0 = arith.constant 0 : index
    %0 = vector.load %arg1[%c0, %c0_0] : memref<32x128xbf16, #tpu.memory_space<vmem>>, vector<32x128xbf16>
    %1 = arith.extf %0 : vector<32x128xbf16> to vector<32x128xf32>
    %c0_1 = arith.constant 0 : index
    %c0_2 = arith.constant 0 : index
    %2 = vector.load %arg3[%c0_1, %c0_2] : memref<1x128xf32, #tpu.memory_space<vmem>>, vector<1x128xf32>
    %3 = vector.broadcast %2 : vector<1x128xf32> to vector<32x128xf32>
    %4 = arith.mulf %1, %3 : vector<32x128xf32>
    %c0_3 = arith.constant 0 : index
    %c0_4 = arith.constant 0 : index
    %5 = vector.load %arg4[%c0_3, %c0_4] : memref<1x128xf32, #tpu.memory_space<vmem>>, vector<1x128xf32>
    %6 = vector.broadcast %5 : vector<1x128xf32> to vector<32x128xf32>
    %7 = arith.addf %4, %6 : vector<32x128xf32>
    %c0_5 = arith.constant 0 : index
    %c0_6 = arith.constant 0 : index
    %8 = vector.load %arg2[%c0_5, %c0_6] : memref<32x128xf32, #tpu.memory_space<vmem>>, vector<32x128xf32>
    %9 = arith.addf %7, %8 : vector<32x128xf32>
    %cst = arith.constant 0.000000e+00 : f32
    %10 = vector.broadcast %cst : f32 to vector<32x128xf32>
    %11 = arith.maximumf %9, %10 : vector<32x128xf32>
    %c0_7 = arith.constant 0 : index
    %c0_8 = arith.constant 0 : index
    %12 = vector.load %arg5[%c0_7, %c0_8] : memref<32x128xf32, #tpu.memory_space<vmem>>, vector<32x128xf32>
    tpu.vector_store %arg5[%c0_7, %c0_8], %11 {strides = array<i32>} : memref<32x128xf32, #tpu.memory_space<vmem>>, vector<32x128xf32>,
    return
  }
  func.func @transform_0(%arg0: i32) -> (i32, i32) {
    %c0_i32 = arith.constant 0 : i32
    %c0_i32_0 = arith.constant 0 : i32
    return %arg0, %c0_i32 : i32, i32
  }
  func.func @transform_1(%arg0: i32) -> (i32, i32) {
    %c0_i32 = arith.constant 0 : i32
    %c0_i32_0 = arith.constant 0 : i32
    return %arg0, %c0_i32 : i32, i32
  }
  func.func @transform_2(%arg0: i32) -> (i32, i32) {
    %c0_i32 = arith.constant 0 : i32
    %c0_i32_0 = arith.constant 0 : i32
    %c0_i32_1 = arith.constant 0 : i32
    return %c0_i32, %c0_i32_0 : i32, i32
  }
  func.func @transform_3(%arg0: i32) -> (i32, i32) {
    %c0_i32 = arith.constant 0 : i32
    %c0_i32_0 = arith.constant 0 : i32
    %c0_i32_1 = arith.constant 0 : i32
    return %c0_i32, %c0_i32_0 : i32, i32
  }
  func.func @transform_4(%arg0: i32) -> (i32, i32) {
    %c0_i32 = arith.constant 0 : i32
    %c0_i32_0 = arith.constant 0 : i32
    return %arg0, %c0_i32 : i32, i32
  }
}

</mosaic_0001>

<llo_original>
// kernel: resblock_forward.5
$region0: #{resblock_forward.5}
  #allocation0 [shape = 'u32[]', space=smem, size = 0x4, offset = 0x4, fixed_abs, tag = 'smem constant byte address 0x4 - core index']
  #allocation1 [shape = 'u32[144,128]{1,0:T(1,128)}', space=vmem, size = 0x12000, scoped, tag = 'internal scratch']
  %s0 = inlined_call_operand.vmem [shape: bf16[32,128], index: 0, kind: input, shape index: {}]
  %s1 = inlined_call_operand.vmem [shape: f32[32,128], index: 1, kind: input, shape index: {}]
  %s2 = inlined_call_operand.vmem [shape: f32[1,128], index: 2, kind: input, shape index: {}]
  %s3 = inlined_call_operand.vmem [shape: f32[1,128], index: 3, kind: input, shape index: {}]
  %s4 = inlined_call_operand.vmem [shape: f32[32,128], index: 4, kind: output, shape index: {}]
  %s5 = sld [smem:[#allocation0]]
  $region26: #{resblock_forward.5} parent=0
    _
  %s7 = ssub.s32 1, %s5
  %s8 = scalar_select 0, %s7, %s5
  // Predicated region
  $region2: #{resblock_forward.5} parent=0 // pred_check
    _
  $region3: #{resblock_forward.5} parent=0 // pred_check_branch
    %10 = sbr.rel (0) target = $region5
  $region4: #{resblock_forward.5} parent=0 // pred_region
    _
  $region5: #{resblock_forward.5} parent=0 // pred_fallthru
    _
  // Predicated region
  $region6: #{resblock_forward.5} parent=0 // pred_check
    _
  $region7: #{resblock_forward.5} parent=0 // pred_check_branch
    %12 = sbr.rel (0) target = $region9
  $region8: #{resblock_forward.5} parent=0 // pred_region
    _
  $region9: #{resblock_forward.5} parent=0 // pred_fallthru
    _
  // Predicated region
  $region10: #{resblock_forward.5} parent=0 // pred_check
    _
  $region11: #{resblock_forward.5} parent=0 // pred_check_branch
    %14 = sbr.rel (0) target = $region13
  $region12: #{resblock_forward.5} parent=0 // pred_region
    _
  $region13: #{resblock_forward.5} parent=0 // pred_fallthru
    _
  // Predicated region
  $region14: #{resblock_forward.5} parent=0 // pred_check
    _
  $region15: #{resblock_forward.5} parent=0 // pred_check_branch
    %16 = sbr.rel (0) target = $region17
  $region16: #{resblock_forward.5} parent=0 // pred_region
    _
  $region17: #{resblock_forward.5} parent=0 // pred_fallthru
    _
  %v17 = vld [vmem:[%s0] sm:$0xf]
  %v18 = vld [vmem:[%s0 + $0x4] sm:$0xf]
  %v19 = vld [vmem:[%s0 + $0x8] sm:$0xf]
  %v20 = vld [vmem:[%s0 + $0xc] sm:$0xf]
  %v21 = vunpack.c.l.bf16 %v17
  %v22 = vunpack.c.l.bf16 %v18
  %v23 = vunpack.c.l.bf16 %v19
  %v24 = vunpack.c.l.bf16 %v20
  %v25 = vld [vmem:[%s2] sm:$0x1]
  %v27 = vlaneseq
  %v28 = vshrl.u32 %v27, 7
  %v29 = vsub.s32 0, %v28
  %v30 = vrot.slane %v25, %v29
  %v32 = vmul.f32 %v21, %v30
  %v33 = vmul.f32 %v22, %v30
  %v34 = vmul.f32 %v23, %v30
  %v35 = vmul.f32 %v24, %v30
  %v36 = vld [vmem:[%s3] sm:$0x1]
  %v38 = vlaneseq
  %v39 = vshrl.u32 %v38, 7
  %v40 = vsub.s32 0, %v39
  %v41 = vrot.slane %v36, %v40
  %v43 = vadd.f32 %v32, %v41
  %v44 = vadd.f32 %v33, %v41
  %v45 = vadd.f32 %v34, %v41
  %v46 = vadd.f32 %v35, %v41
  %v47 = vld [vmem:[%s1] sm:$0xff]
  %v48 = vld [vmem:[%s1 + $0x8] sm:$0xff]
  %v49 = vld [vmem:[%s1 + $0x10] sm:$0xff]
  %v50 = vld [vmem:[%s1 + $0x18] sm:$0xff]
  %v51 = vadd.f32 %v43, %v47
  %v52 = vadd.f32 %v44, %v48
  %v53 = vadd.f32 %v45, %v49
  %v54 = vadd.f32 %v46, %v50
  %v55 = vmax.f32 %v51, 0.0
  %v56 = vmax.f32 %v52, 0.0
  %v57 = vmax.f32 %v53, 0.0
  %v58 = vmax.f32 %v54, 0.0
  %59 = vst [vmem:[%s4] sm:$0xff] %v55
  %60 = vst [vmem:[%s4 + $0x8] sm:$0xff] %v56
  %61 = vst [vmem:[%s4 + $0x10] sm:$0xff] %v57
  %62 = vst [vmem:[%s4 + $0x18] sm:$0xff] %v58
  // Predicated region
  $region18: #{resblock_forward.5} parent=0 // pred_check
    _
  $region19: #{resblock_forward.5} parent=0 // pred_check_branch
    %64 = sbr.rel (0) target = $region21
  $region20: #{resblock_forward.5} parent=0 // pred_region
    _
  $region21: #{resblock_forward.5} parent=0 // pred_fallthru
    _
  // Predicated region
  $region22: #{resblock_forward.5} parent=0 // pred_check
    _
  $region23: #{resblock_forward.5} parent=0 // pred_check_branch
    %66 = sbr.rel (0) target = $region25
  $region24: #{resblock_forward.5} parent=0 // pred_region
    _
  $region25: #{resblock_forward.5} parent=0 // pred_fallthru
    _

// kernel: resblock_forward.4
$region0: #{resblock_forward.4}
  #allocation0 [shape = 'u32[]', space=smem, size = 0x4, offset = 0x4, fixed_abs, tag = 'smem constant byte address 0x4 - core index']
  #allocation1 [shape = 'u32[144,128]{1,0:T(1,128)}', space=vmem, size = 0x12000, scoped, tag = 'internal scratch']
  %s0 = inlined_call_operand.vmem [shape: bf16[2,18,18,8], index: 0, kind: input, shape index: {}]
  %s1 = inlined_call_operand.vmem [shape: f32[1,8], index: 1, kind: input, shape index: {}]
  %s2 = inlined_call_operand.vmem [shape: f32[1,8], index: 2, kind: input, shape index: {}]
  %s3 = inlined_call_operand.vmem [shape: bf16[72,8], index: 3, kind: input, shape index: {}]
  %s4 = inlined_call_operand.vmem [shape: bf16[2,256,8], index: 4, kind: output, shape index: {0}]
  %s5 = inlined_call_operand.vmem [shape: f32[2,1,2,8], index: 5, kind: output, shape index: {1}]
  %6 = xla_tuple %s4, %s5
  %s7 = sld [smem:[#allocation0]]
  $region57: #{resblock_forward.4} parent=0
    _
  %s9 = ssub.s32 1, %s7
  %s10 = scalar_select 0, %s9, %s7
  loop: start=0, step=1, limit=4
  $region2: #{resblock_forward.4} parent=0 // loop_pre_header
    _
  $region3: #{resblock_forward.4} parent=0 // loop_header
    %s12 = sphi 0, %s16
    %p13 = scmp.ge.s32.totalorder %s12, 4
    %s19 = sphi 0, %s31
    %s20 = sphi 0, %s27
    %s21 = sphi 0, %s19
    %s22 = sphi 0, %s20
    %s23 = sphi 0, %s21
    %s24 = sphi 0, %s22
    %s34 = sphi 0, %s36
    %s37 = sphi 0, %s34
    %s38 = sphi 0, %s37
    %s54 = sphi 0, %s38
    %s58 = sphi 0, %s58
    %s60 = sphi 0, %s58
    %s61 = sphi 0, %s60
    %s75 = sphi 0, %s61
    %s79 = sphi 0, %s79
    %s81 = sphi 0, %s79
    %s82 = sphi 0, %s81
    %s96 = sphi 0, %s82
    %s100 = sphi 0, %s100
    %s102 = sphi 0, %s100
    %s103 = sphi 0, %s102
    %s117 = sphi 0, %s103
    %s125 = sphi 0, %s127
    %s128 = sphi 0, %s125
    %s129 = sphi 0, %s128
    %s145 = sphi 0, %s129
    %s153 = sphi 0, %s155
    %s156 = sphi 0, %s153
    %s157 = sphi 0, %s156
    %s173 = sphi 0, %s157
  $region4: #{resblock_forward.4} parent=0 // loop_header_branch
    %15 = sbr.rel (%p13) target = $region8
  $region5: #{resblock_forward.4} parent=0 // loop_body
    %s17 = ssub.s32 %s12, 1
    %s18 = ssub.s32 %s12, 2
    %s25 = sadd.s32 1, %s20
    %p26 = scmp.ge.s32.totalorder %s25, 1
    %s27 = scalar_select %p26, 0, %s25
    %s28 = sadd.s32 1, %s19
    %s29 = scalar_select %p26, %s28, %s19
    %p30 = scmp.ge.s32.totalorder %s29, 2
    %s31 = scalar_select %p30, 0, %s29
    %s32 = ssub.s32 %s19, %s31
    %p33 = scmp.eq.s32.totalorder %s32, 0
    %s35 = sadd.s32 %s34, 1
    %s36 = scalar_select %p33, %s34, %s35
    %p39 = pneg %p33
    %p40 = scmp.eq.s32.totalorder %s12, 1
    %p41 = por %p39, %p40
    %p42 = scmp.ne.s32.totalorder %s34, %s37
    %p43 = scmp.eq.s32.totalorder %s12, 0
    %p44 = por %p42, %p43
    %p45 = scmp.ne.s32.totalorder %s34, %s37
    %p46 = scmp.eq.s32.totalorder %s17, 1
    %p47 = por %p45, %p46
    %p48 = scmp.ne.s32.totalorder %s37, %s38
    %p49 = scmp.eq.s32.totalorder %s17, 0
    %p50 = por %p48, %p49
    %p51 = scmp.ne.s32.totalorder %s37, %s38
    %p52 = scmp.eq.s32.totalorder %s18, 1
    %p53 = por %p51, %p52
    %p55 = scmp.ne.s32.totalorder %s38, %s54
    %p56 = scmp.eq.s32.totalorder %s18, 0
    %p57 = por %p55, %p56
    %s59 = sadd.s32 %s58, 1
    %p62 = scmp.eq.s32.totalorder %s12, 1
    %p63 = scmp.ne.s32.totalorder %s58, %s60
    %p64 = scmp.eq.s32.totalorder %s12, 0
    %p65 = por %p63, %p64
    %p66 = scmp.ne.s32.totalorder %s58, %s60
    %p67 = scmp.eq.s32.totalorder %s17, 1
    %p68 = por %p66, %p67
    %p69 = scmp.ne.s32.totalorder %s60, %s61
    %p70 = scmp.eq.s32.totalorder %s17, 0
    %p71 = por %p69, %p70
    %p72 = scmp.ne.s32.totalorder %s60, %s61
    %p73 = scmp.eq.s32.totalorder %s18, 1
    %p74 = por %p72, %p73
    %p76 = scmp.ne.s32.totalorder %s61, %s75
    %p77 = scmp.eq.s32.totalorder %s18, 0
    %p78 = por %p76, %p77
    %s80 = sadd.s32 %s79, 1
    %p83 = scmp.eq.s32.totalorder %s12, 1
    %p84 = scmp.ne.s32.totalorder %s79, %s81
    %p85 = scmp.eq.s32.totalorder %s12, 0
    %p86 = por %p84, %p85
    %p87 = scmp.ne.s32.totalorder %s79, %s81
    %p88 = scmp.eq.s32.totalorder %s17, 1
    %p89 = por %p87, %p88
    %p90 = scmp.ne.s32.totalorder %s81, %s82
    %p91 = scmp.eq.s32.totalorder %s17, 0
    %p92 = por %p90, %p91
    %p93 = scmp.ne.s32.totalorder %s81, %s82
    %p94 = scmp.eq.s32.totalorder %s18, 1
    %p95 = por %p93, %p94
    %p97 = scmp.ne.s32.totalorder %s82, %s96
    %p98 = scmp.eq.s32.totalorder %s18, 0
    %p99 = por %p97, %p98
    %s101 = sadd.s32 %s100, 1
    %p104 = scmp.eq.s32.totalorder %s12, 1
    %p105 = scmp.ne.s32.totalorder %s100, %s102
    %p106 = scmp.eq.s32.totalorder %s12, 0
    %p107 = por %p105, %p106
    %p108 = scmp.ne.s32.totalorder %s100, %s102
    %p109 = scmp.eq.s32.totalorder %s17, 1
    %p110 = por %p108, %p109
    %p111 = scmp.ne.s32.totalorder %s102, %s103
    %p112 = scmp.eq.s32.totalorder %s17, 0
    %p113 = por %p111, %p112
    %p114 = scmp.ne.s32.totalorder %s102, %s103
    %p115 = scmp.eq.s32.totalorder %s18, 1
    %p116 = por %p114, %p115
    %p118 = scmp.ne.s32.totalorder %s103, %s117
    %p119 = scmp.eq.s32.totalorder %s18, 0
    %p120 = por %p118, %p119
    %s121 = ssub.s32 %s19, %s31
    %s122 = ssub.s32 %s20, %s27
    %s123 = sor.u32 %s121, %s122
    %p124 = scmp.eq.s32.totalorder %s123, 0
    %s126 = sadd.s32 %s125, 1
    %s127 = scalar_select %p124, %s125, %s126
    %p130 = pneg %p124
    %p131 = scmp.eq.s32.totalorder %s12, 1
    %p132 = por %p130, %p131
    %p133 = scmp.ne.s32.totalorder %s125, %s128
    %p134 = scmp.eq.s32.totalorder %s12, 0
    %p135 = por %p133, %p134
    %p136 = scmp.ne.s32.totalorder %s125, %s128
    %p137 = scmp.eq.s32.totalorder %s17, 1
    %p138 = por %p136, %p137
    %p139 = scmp.ne.s32.totalorder %s128, %s129
    %p140 = scmp.eq.s32.totalorder %s17, 0
    %p141 = por %p139, %p140
    %p142 = scmp.ne.s32.totalorder %s128, %s129
    %p143 = scmp.eq.s32.totalorder %s18, 1
    %p144 = por %p142, %p143
    %p146 = scmp.ne.s32.totalorder %s129, %s145
    %p147 = scmp.eq.s32.totalorder %s18, 0
    %p148 = por %p146, %p147
    %s149 = ssub.s32 %s19, %s31
    %s150 = ssub.s32 %s20, %s27
    %s151 = sor.u32 %s149, %s150
    %p152 = scmp.eq.s32.totalorder %s151, 0
    %s154 = sadd.s32 %s153, 1
    %s155 = scalar_select %p152, %s153, %s154
    %p158 = pneg %p152
    %p159 = scmp.eq.s32.totalorder %s12, 1
    %p160 = por %p158, %p159
    %p161 = scmp.ne.s32.totalorder %s153, %s156
    %p162 = scmp.eq.s32.totalorder %s12, 0
    %p163 = por %p161, %p162
    %p164 = scmp.ne.s32.totalorder %s153, %s156
    %p165 = scmp.eq.s32.totalorder %s17, 1
    %p166 = por %p164, %p165
    %p167 = scmp.ne.s32.totalorder %s156, %s157
    %p168 = scmp.eq.s32.totalorder %s17, 0
    %p169 = por %p167, %p168
    %p170 = scmp.ne.s32.totalorder %s156, %s157
    %p171 = scmp.eq.s32.totalorder %s18, 1
    %p172 = por %p170, %p171
    %p174 = scmp.ne.s32.totalorder %s157, %s173
    %p175 = scmp.eq.s32.totalorder %s18, 0
    %p176 = por %p174, %p175
    %p177 = scmp.le.s32.totalorder 1, %s12
    %p178 = scmp.lt.s32.totalorder %s12, 3
    %p179 = pnand %p177, %p178
    %p180 = pneg %p179
    // Predicated region
    $region9: #{resblock_forward.4} parent=5 // pred_check
      _
    $region10: #{resblock_forward.4} parent=5 // pred_check_branch
      %182 = sbr.rel (%p179) target = $region12
    $region11: #{resblock_forward.4} parent=5 // pred_region
      %s183 = ssub.s32 %s12, 1
      // Predicated region
      $region13: #{resblock_forward.4} parent=11 // pred_check
        %p184 = pneg %p71
      $region14: #{resblock_forward.4} parent=11 // pred_check_branch
        %186 = sbr.rel (%p184) target = $region16
      $region15: #{resblock_forward.4} parent=11 // pred_region
        _
      $region16: #{resblock_forward.4} parent=11 // pred_fallthru
        _
      // Predicated region
      $region17: #{resblock_forward.4} parent=11 // pred_check
        %p187 = pneg %p92
      $region18: #{resblock_forward.4} parent=11 // pred_check_branch
        %189 = sbr.rel (%p187) target = $region20
      $region19: #{resblock_forward.4} parent=11 // pred_region
        _
      $region20: #{resblock_forward.4} parent=11 // pred_fallthru
        _
      // Predicated region
      $region21: #{resblock_forward.4} parent=11 // pred_check
        %p190 = pneg %p113
      $region22: #{resblock_forward.4} parent=11 // pred_check_branch
        %192 = sbr.rel (%p190) target = $region24
      $region23: #{resblock_forward.4} parent=11 // pred_region
        _
      $region24: #{resblock_forward.4} parent=11 // pred_fallthru
        _
    $region12: #{resblock_forward.4} parent=5 // pred_fallthru
      _
    %p193 = scmp.lt.s32.totalorder %s12, 2
    // Predicated region
    $region25: #{resblock_forward.4} parent=5 // pred_check
      %p194 = pneg %p193
    $region26: #{resblock_forward.4} parent=5 // pred_check_branch
      %196 = sbr.rel (%p194) target = $region28
    $region27: #{resblock_forward.4} parent=5 // pred_region
      // Predicated region
      $region29: #{resblock_forward.4} parent=27 // pred_check
        %p197 = pneg %p44
      $region30: #{resblock_forward.4} parent=27 // pred_check_branch
        %199 = sbr.rel (%p197) target = $region32
      $region31: #{resblock_forward.4} parent=27 // pred_region
        %p200 = scmp.lt.s32.totalorder %s19, 1
        %s201 = scalar_select %p200, %s19, 1
        %s202 = smul.addr %s201, 54
        %s203 = smul.addr %s202, 4
        %s204 = scalar_lea.vmem %s0, %s203
      $region32: #{resblock_forward.4} parent=27 // pred_fallthru
        _
    $region28: #{resblock_forward.4} parent=5 // pred_fallthru
      _
    %p205 = scmp.le.s32.totalorder 1, %s12
    %p206 = scmp.lt.s32.totalorder %s12, 3
    %p207 = pnand %p205, %p206
    %p208 = pneg %p207
    // Predicated region
    $region33: #{resblock_forward.4} parent=5 // pred_check
      _
    $region34: #{resblock_forward.4} parent=5 // pred_check_branch
      %210 = sbr.rel (%p207) target = $region36
    $region35: #{resblock_forward.4} parent=5 // pred_region
      %s211 = ssub.s32 %s12, 1
      %p212 = scmp.lt.s32.totalorder %s21, 1
      %s213 = scalar_select %p212, %s21, 1
      %s214 = smul.addr %s213, 54
      %s215 = smul.addr %s214, 4
      %s216 = scalar_lea.vmem %s0, %s215
      %p217 = pneg %p50
      %p218 = pneg %p47
      %p219 = pneg %p71
      %p220 = pneg %p68
      %p221 = pneg %p92
      %p222 = pneg %p89
      %p223 = pneg %p113
      %p224 = pneg %p110
      %p225 = pneg %p141
      %p226 = pneg %p138
      %s227 = smul.u32 32, %s22
      %p228 = scmp.lt.s32.totalorder %s21, 1
      %s229 = scalar_select %p228, %s21, 1
      %p230 = scmp.lt.s32.totalorder %s227, 31
      %s231 = scalar_select %p230, %s227, 31
      %s232 = smul.addr %s229, 32
      %s233 = sadd.s32 %s231, %s232
      %s234 = smul.addr %s233, 4
      %s235 = scalar_lea.vmem %s4, %s234
      %p236 = pneg %p169
      %p237 = pneg %p166
      %p238 = scmp.lt.s32.totalorder %s21, 1
      %s239 = scalar_select %p238, %s21, 1
      %p240 = scmp.lt.s32.totalorder %s22, 0
      %s241 = scalar_select %p240, %s22, 0
      %s242 = sadd.s32 %s241, %s239
      %s243 = smul.addr %s242, 2
      %s244 = scalar_lea.vmem %s5, %s243
      %p245 = scmp.lt.s32.totalorder %s21, 1
      %s246 = scalar_select %p245, %s21, 1
      %s247 = smul.addr %s246, 54
      %s248 = smul.addr %s247, 4
      %s249 = scalar_lea.vmem %s0, %s248
      %s250 = smul.u32 32, %s22
      %p251 = scmp.lt.s32.totalorder %s21, 1
      %s252 = scalar_select %p251, %s21, 1
      %p253 = scmp.lt.s32.totalorder %s250, 31
      %s254 = scalar_select %p253, %s250, 31
      %s255 = smul.addr %s252, 32
      %s256 = sadd.s32 %s254, %s255
      %s257 = smul.addr %s256, 4
      %s258 = scalar_lea.vmem %s4, %s257
      %s259 = smul.u32 32, %s22
      %p260 = scmp.lt.s32.totalorder %s21, 1
      %s261 = scalar_select %p260, %s21, 1
      %p262 = scmp.lt.s32.totalorder %s22, 0
      %s263 = scalar_select %p262, %s22, 0
      %s264 = sadd.s32 %s263, %s261
      %s265 = smul.addr %s264, 2
      %s266 = scalar_lea.vmem %s5, %s265
      %s268 = smul.u32 %s22, 16
      %s269 = smul.u32 %s268, 3
      %s270 = smul.addr %s269, 4
      %s271 = scalar_lea.vmem %s249, %s270
      %v272 = vld [vmem:[%s271] sm:$0xf]
      %v273 = vld [vmem:[%s271 + $0x4] sm:$0xf]
      %v274 = vld [vmem:[%s271 + $0x8] sm:$0x1]
      %v275 = vld [vmem:[%s271 + $0xc] sm:$0xf]
      %v276 = vld [vmem:[%s271 + $0x10] sm:$0xf]
      %v277 = vld [vmem:[%s271 + $0x14] sm:$0x1]
      %v278 = vld [vmem:[%s271 + $0x18] sm:$0xf]
      %v279 = vld [vmem:[%s271 + $0x1c] sm:$0xf]
      %v280 = vld [vmem:[%s271 + $0x20] sm:$0x1]
      %v281 = vld [vmem:[%s271 + $0x24] sm:$0xf]
      %v282 = vld [vmem:[%s271 + $0x28] sm:$0xf]
      %v283 = vld [vmem:[%s271 + $0x2c] sm:$0x1]
      %v284 = vld [vmem:[%s271 + $0x30] sm:$0xf]
      %v285 = vld [vmem:[%s271 + $0x34] sm:$0xf]
      %v286 = vld [vmem:[%s271 + $0x38] sm:$0x1]
      %v287 = vld [vmem:[%s271 + $0x3c] sm:$0xf]
      %v288 = vld [vmem:[%s271 + $0x40] sm:$0xf]
      %v289 = vld [vmem:[%s271 + $0x44] sm:$0x1]
      %v290 = vld [vmem:[%s271 + $0x48] sm:$0xf]
      %v291 = vld [vmem:[%s271 + $0x4c] sm:$0xf]
      %v292 = vld [vmem:[%s271 + $0x50] sm:$0x1]
      %v293 = vld [vmem:[%s271 + $0x54] sm:$0xf]
      %v294 = vld [vmem:[%s271 + $0x58] sm:$0xf]
      %v295 = vld [vmem:[%s271 + $0x5c] sm:$0x1]
      %v296 = vld [vmem:[%s271 + $0x60] sm:$0xf]
      %v297 = vld [vmem:[%s271 + $0x64] sm:$0xf]
      %v298 = vld [vmem:[%s271 + $0x68] sm:$0x1]
      %v299 = vld [vmem:[%s271 + $0x6c] sm:$0xf]
      %v300 = vld [vmem:[%s271 + $0x70] sm:$0xf]
      %v301 = vld [vmem:[%s271 + $0x74] sm:$0x1]
      %v302 = vld [vmem:[%s271 + $0x78] sm:$0xf]
      %v303 = vld [vmem:[%s271 + $0x7c] sm:$0xf]
      %v304 = vld [vmem:[%s271 + $0x80] sm:$0x1]
      %v305 = vld [vmem:[%s271 + $0x84] sm:$0xf]
      %v306 = vld [vmem:[%s271 + $0x88] sm:$0xf]
      %v307 = vld [vmem:[%s271 + $0x8c] sm:$0x1]
      %v308 = vld [vmem:[%s271 + $0x90] sm:$0xf]
      %v309 = vld [vmem:[%s271 + $0x94] sm:$0xf]
      %v310 = vld [vmem:[%s271 + $0x98] sm:$0x1]
      %v311 = vld [vmem:[%s271 + $0x9c] sm:$0xf]
      %v312 = vld [vmem:[%s271 + $0xa0] sm:$0xf]
      %v313 = vld [vmem:[%s271 + $0xa4] sm:$0x1]
      %v314 = vld [vmem:[%s271 + $0xa8] sm:$0xf]
      %v315 = vld [vmem:[%s271 + $0xac] sm:$0xf]
      %v316 = vld [vmem:[%s271 + $0xb0] sm:$0x1]
      %v317 = vld [vmem:[%s271 + $0xb4] sm:$0xf]
      %v318 = vld [vmem:[%s271 + $0xb8] sm:$0xf]
      %v319 = vld [vmem:[%s271 + $0xbc] sm:$0x1]
      %v320 = vld [vmem:[%s271 + $0xc0] sm:$0xf]
      %v321 = vld [vmem:[%s271 + $0xc4] sm:$0xf]
      %v322 = vld [vmem:[%s271 + $0xc8] sm:$0x1]
      %v323 = vld [vmem:[%s271 + $0xcc] sm:$0xf]
      %v324 = vld [vmem:[%s271 + $0xd0] sm:$0xf]
      %v325 = vld [vmem:[%s271 + $0xd4] sm:$0x1]
      %v326 = vunpack.c.l.bf16 %v272
      %v327 = vunpack.c.l.bf16 %v273
      %v328 = vunpack.c.l.bf16 %v274
      %v329 = vunpack.c.l.bf16 %v275
      %v330 = vunpack.c.l.bf16 %v276
      %v331 = vunpack.c.l.bf16 %v277
      %v332 = vunpack.c.l.bf16 %v278
      %v333 = vunpack.c.l.bf16 %v279
      %v334 = vunpack.c.l.bf16 %v280
      %v335 = vunpack.c.l.bf16 %v281
      %v336 = vunpack.c.l.bf16 %v282
      %v337 = vunpack.c.l.bf16 %v283
      %v338 = vunpack.c.l.bf16 %v284
      %v339 = vunpack.c.l.bf16 %v285
      %v340 = vunpack.c.l.bf16 %v286
      %v341 = vunpack.c.l.bf16 %v287
      %v342 = vunpack.c.l.bf16 %v288
      %v343 = vunpack.c.l.bf16 %v289
      %v344 = vunpack.c.l.bf16 %v290
      %v345 = vunpack.c.l.bf16 %v291
      %v346 = vunpack.c.l.bf16 %v292
      %v347 = vunpack.c.l.bf16 %v293
      %v348 = vunpack.c.l.bf16 %v294
      %v349 = vunpack.c.l.bf16 %v295
      %v350 = vunpack.c.l.bf16 %v296
      %v351 = vunpack.c.l.bf16 %v297
      %v352 = vunpack.c.l.bf16 %v298
      %v353 = vunpack.c.l.bf16 %v299
      %v354 = vunpack.c.l.bf16 %v300
      %v355 = vunpack.c.l.bf16 %v301
      %v356 = vunpack.c.l.bf16 %v302
      %v357 = vunpack.c.l.bf16 %v303
      %v358 = vunpack.c.l.bf16 %v304
      %v359 = vunpack.c.l.bf16 %v305
      %v360 = vunpack.c.l.bf16 %v306
      %v361 = vunpack.c.l.bf16 %v307
      %v362 = vunpack.c.l.bf16 %v308
      %v363 = vunpack.c.l.bf16 %v309
      %v364 = vunpack.c.l.bf16 %v310
      %v365 = vunpack.c.l.bf16 %v311
      %v366 = vunpack.c.l.bf16 %v312
      %v367 = vunpack.c.l.bf16 %v313
      %v368 = vunpack.c.l.bf16 %v314
      %v369 = vunpack.c.l.bf16 %v315
      %v370 = vunpack.c.l.bf16 %v316
      %v371 = vunpack.c.l.bf16 %v317
      %v372 = vunpack.c.l.bf16 %v318
      %v373 = vunpack.c.l.bf16 %v319
      %v374 = vunpack.c.l.bf16 %v320
      %v375 = vunpack.c.l.bf16 %v321
      %v376 = vunpack.c.l.bf16 %v322
      %v377 = vunpack.c.l.bf16 %v323
      %v378 = vunpack.c.l.bf16 %v324
      %v379 = vunpack.c.l.bf16 %v325
      %v380 = vld [vmem:[%s1] sm:$0x1]
      %v382 = vlaneseq
      %v383 = vshrl.u32 %v382, 7
      %v384 = vsub.s32 0, %v383
      %v385 = vrot.slane %v380, %v384
      %v387 = vmul.f32 %v326, %v385
      %v388 = vmul.f32 %v327, %v385
      %v389 = vmul.f32 %v328, %v385
      %v390 = vmul.f32 %v329, %v385
      %v391 = vmul.f32 %v330, %v385
      %v392 = vmul.f32 %v331, %v385
      %v393 = vmul.f32 %v332, %v385
      %v394 = vmul.f32 %v333, %v385
      %v395 = vmul.f32 %v334, %v385
      %v396 = vmul.f32 %v335, %v385
      %v397 = vmul.f32 %v336, %v385
      %v398 = vmul.f32 %v337, %v385
      %v399 = vmul.f32 %v338, %v385
      %v400 = vmul.f32 %v339, %v385
      %v401 = vmul.f32 %v340, %v385
      %v402 = vmul.f32 %v341, %v385
      %v403 = vmul.f32 %v342, %v385
      %v404 = vmul.f32 %v343, %v385
      %v405 = vmul.f32 %v344, %v385
      %v406 = vmul.f32 %v345, %v385
      %v407 = vmul.f32 %v346, %v385
      %v408 = vmul.f32 %v347, %v385
      %v409 = vmul.f32 %v348, %v385
      %v410 = vmul.f32 %v349, %v385
      %v411 = vmul.f32 %v350, %v385
      %v412 = vmul.f32 %v351, %v385
      %v413 = vmul.f32 %v352, %v385
      %v414 = vmul.f32 %v353, %v385
      %v415 = vmul.f32 %v354, %v385
      %v416 = vmul.f32 %v355, %v385
      %v417 = vmul.f32 %v356, %v385
      %v418 = vmul.f32 %v357, %v385
      %v419 = vmul.f32 %v358, %v385
      %v420 = vmul.f32 %v359, %v385
      %v421 = vmul.f32 %v360, %v385
      %v422 = vmul.f32 %v361, %v385
      %v423 = vmul.f32 %v362, %v385
      %v424 = vmul.f32 %v363, %v385
      %v425 = vmul.f32 %v364, %v385
      %v426 = vmul.f32 %v365, %v385
      %v427 = vmul.f32 %v366, %v385
      %v428 = vmul.f32 %v367, %v385
      %v429 = vmul.f32 %v368, %v385
      %v430 = vmul.f32 %v369, %v385
      %v431 = vmul.f32 %v370, %v385
      %v432 = vmul.f32 %v371, %v385
      %v433 = vmul.f32 %v372, %v385
      %v434 = vmul.f32 %v373, %v385
      %v435 = vmul.f32 %v374, %v385
      %v436 = vmul.f32 %v375, %v385
      %v437 = vmul.f32 %v376, %v385
      %v438 = vmul.f32 %v377, %v385
      %v439 = vmul.f32 %v378, %v385
      %v440 = vmul.f32 %v379, %v385
      %v441 = vld [vmem:[%s2] sm:$0x1]
      %v443 = vlaneseq
      %v444 = vshrl.u32 %v443, 7
      %v445 = vsub.s32 0, %v444
      %v446 = vrot.slane %v441, %v445
      %v448 = vadd.f32 %v387, %v446
      %v449 = vadd.f32 %v388, %v446
      %v450 = vadd.f32 %v389, %v446
      %v451 = vadd.f32 %v390, %v446
      %v452 = vadd.f32 %v391, %v446
      %v453 = vadd.f32 %v392, %v446
      %v454 = vadd.f32 %v393, %v446
      %v455 = vadd.f32 %v394, %v446
      %v456 = vadd.f32 %v395, %v446
      %v457 = vadd.f32 %v396, %v446
      %v458 = vadd.f32 %v397, %v446
      %v459 = vadd.f32 %v398, %v446
      %v460 = vadd.f32 %v399, %v446
      %v461 = vadd.f32 %v400, %v446
      %v462 = vadd.f32 %v401, %v446
      %v463 = vadd.f32 %v402, %v446
      %v464 = vadd.f32 %v403, %v446
      %v465 = vadd.f32 %v404, %v446
      %v466 = vadd.f32 %v405, %v446
      %v467 = vadd.f32 %v406, %v446
      %v468 = vadd.f32 %v407, %v446
      %v469 = vadd.f32 %v408, %v446
      %v470 = vadd.f32 %v409, %v446
      %v471 = vadd.f32 %v410, %v446
      %v472 = vadd.f32 %v411, %v446
      %v473 = vadd.f32 %v412, %v446
      %v474 = vadd.f32 %v413, %v446
      %v475 = vadd.f32 %v414, %v446
      %v476 = vadd.f32 %v415, %v446
      %v477 = vadd.f32 %v416, %v446
      %v478 = vadd.f32 %v417, %v446
      %v479 = vadd.f32 %v418, %v446
      %v480 = vadd.f32 %v419, %v446
      %v481 = vadd.f32 %v420, %v446
      %v482 = vadd.f32 %v421, %v446
      %v483 = vadd.f32 %v422, %v446
      %v484 = vadd.f32 %v423, %v446
      %v485 = vadd.f32 %v424, %v446
      %v486 = vadd.f32 %v425, %v446
      %v487 = vadd.f32 %v426, %v446
      %v488 = vadd.f32 %v427, %v446
      %v489 = vadd.f32 %v428, %v446
      %v490 = vadd.f32 %v429, %v446
      %v491 = vadd.f32 %v430, %v446
      %v492 = vadd.f32 %v431, %v446
      %v493 = vadd.f32 %v432, %v446
      %v494 = vadd.f32 %v433, %v446
      %v495 = vadd.f32 %v434, %v446
      %v496 = vadd.f32 %v435, %v446
      %v497 = vadd.f32 %v436, %v446
      %v498 = vadd.f32 %v437, %v446
      %v499 = vadd.f32 %v438, %v446
      %v500 = vadd.f32 %v439, %v446
      %v501 = vadd.f32 %v440, %v446
      %v502 = vmax.f32 %v448, 0.0
      %v503 = vmax.f32 %v449, 0.0
      %v504 = vmax.f32 %v450, 0.0
      %v505 = vmax.f32 %v451, 0.0
      %v506 = vmax.f32 %v452, 0.0
      %v507 = vmax.f32 %v453, 0.0
      %v508 = vmax.f32 %v454, 0.0
      %v509 = vmax.f32 %v455, 0.0
      %v510 = vmax.f32 %v456, 0.0
      %v511 = vmax.f32 %v457, 0.0
      %v512 = vmax.f32 %v458, 0.0
      %v513 = vmax.f32 %v459, 0.0
      %v514 = vmax.f32 %v460, 0.0
      %v515 = vmax.f32 %v461, 0.0
      %v516 = vmax.f32 %v462, 0.0
      %v517 = vmax.f32 %v463, 0.0
      %v518 = vmax.f32 %v464, 0.0
      %v519 = vmax.f32 %v465, 0.0
      %v520 = vmax.f32 %v466, 0.0
      %v521 = vmax.f32 %v467, 0.0
      %v522 = vmax.f32 %v468, 0.0
      %v523 = vmax.f32 %v469, 0.0
      %v524 = vmax.f32 %v470, 0.0
      %v525 = vmax.f32 %v471, 0.0
      %v526 = vmax.f32 %v472, 0.0
      %v527 = vmax.f32 %v473, 0.0
      %v528 = vmax.f32 %v474, 0.0
      %v529 = vmax.f32 %v475, 0.0
      %v530 = vmax.f32 %v476, 0.0
      %v531 = vmax.f32 %v477, 0.0
      %v532 = vmax.f32 %v478, 0.0
      %v533 = vmax.f32 %v479, 0.0
      %v534 = vmax.f32 %v480, 0.0
      %v535 = vmax.f32 %v481, 0.0
      %v536 = vmax.f32 %v482, 0.0
      %v537 = vmax.f32 %v483, 0.0
      %v538 = vmax.f32 %v484, 0.0
      %v539 = vmax.f32 %v485, 0.0
      %v540 = vmax.f32 %v486, 0.0
      %v541 = vmax.f32 %v487, 0.0
      %v542 = vmax.f32 %v488, 0.0
      %v543 = vmax.f32 %v489, 0.0
      %v544 = vmax.f32 %v490, 0.0
      %v545 = vmax.f32 %v491, 0.0
      %v546 = vmax.f32 %v492, 0.0
      %v547 = vmax.f32 %v493, 0.0
      %v548 = vmax.f32 %v494, 0.0
      %v549 = vmax.f32 %v495, 0.0
      %v550 = vmax.f32 %v496, 0.0
      %v551 = vmax.f32 %v497, 0.0
      %v552 = vmax.f32 %v498, 0.0
      %v553 = vmax.f32 %v499, 0.0
      %v554 = vmax.f32 %v500, 0.0
      %v555 = vmax.f32 %v501, 0.0
      %v556 = vstv %s268
      %v557 = vadd.s32 %v556, 1
      %v558 = vadd.s32 %v556, 2
      %v559 = vadd.s32 %v556, 3
      %v560 = vadd.s32 %v556, 4
      %v561 = vadd.s32 %v556, 5
      %v562 = vadd.s32 %v556, 6
      %v563 = vadd.s32 %v556, 7
      %v564 = vadd.s32 %v556, 8
      %v565 = vadd.s32 %v556, 9
      %v566 = vadd.s32 %v556, 10
      %v567 = vadd.s32 %v556, 11
      %v568 = vadd.s32 %v556, 12
      %v569 = vadd.s32 %v556, 13
      %v570 = vadd.s32 %v556, 14
      %v571 = vadd.s32 %v556, 15
      %v572 = vadd.s32 %v556, 16
      %v573 = vadd.s32 %v556, 17
      %v574 = vlaneseq
      %v575 = vshrl.u32 %v574, 7
      %v576 = vadd.s32 %v575, 8
      %v577 = vadd.s32 %v575, 16
      %vm578 = vcmp.ge.s32.totalorder %v556, 1
      %vm579 = vcmp.ge.s32.totalorder %v557, 1
      %vm580 = vcmp.ge.s32.totalorder %v558, 1
      %vm581 = vcmp.ge.s32.totalorder %v559, 1
      %vm582 = vcmp.ge.s32.totalorder %v560, 1
      %vm583 = vcmp.ge.s32.totalorder %v561, 1
      %vm584 = vcmp.ge.s32.totalorder %v562, 1
      %vm585 = vcmp.ge.s32.totalorder %v563, 1
      %vm586 = vcmp.ge.s32.totalorder %v564, 1
      %vm587 = vcmp.ge.s32.totalorder %v565, 1
      %vm588 = vcmp.ge.s32.totalorder %v566, 1
      %vm589 = vcmp.ge.s32.totalorder %v567, 1
      %vm590 = vcmp.ge.s32.totalorder %v568, 1
      %vm591 = vcmp.ge.s32.totalorder %v569, 1
      %vm592 = vcmp.ge.s32.totalorder %v570, 1
      %vm593 = vcmp.ge.s32.totalorder %v571, 1
      %vm594 = vcmp.ge.s32.totalorder %v572, 1
      %vm595 = vcmp.ge.s32.totalorder %v573, 1
      %vm596 = vcmp.lt.s32.totalorder %v556, 17
      %vm597 = vcmp.lt.s32.totalorder %v557, 17
      %vm598 = vcmp.lt.s32.totalorder %v558, 17
      %vm599 = vcmp.lt.s32.totalorder %v559, 17
      %vm600 = vcmp.lt.s32.totalorder %v560, 17
      %vm601 = vcmp.lt.s32.totalorder %v561, 17
      %vm602 = vcmp.lt.s32.totalorder %v562, 17
      %vm603 = vcmp.lt.s32.totalorder %v563, 17
      %vm604 = vcmp.lt.s32.totalorder %v564, 17
      %vm605 = vcmp.lt.s32.totalorder %v565, 17
      %vm606 = vcmp.lt.s32.totalorder %v566, 17
      %vm607 = vcmp.lt.s32.totalorder %v567, 17
      %vm608 = vcmp.lt.s32.totalorder %v568, 17
      %vm609 = vcmp.lt.s32.totalorder %v569, 17
      %vm610 = vcmp.lt.s32.totalorder %v570, 17
      %vm611 = vcmp.lt.s32.totalorder %v571, 17
      %vm612 = vcmp.lt.s32.totalorder %v572, 17
      %vm613 = vcmp.lt.s32.totalorder %v573, 17
      %vm614 = vmand %vm578, %vm596
      %vm615 = vmand %vm579, %vm597
      %vm616 = vmand %vm580, %vm598
      %vm617 = vmand %vm581, %vm599
      %vm618 = vmand %vm582, %vm600
      %vm619 = vmand %vm583, %vm601
      %vm620 = vmand %vm584, %vm602
      %vm621 = vmand %vm585, %vm603
      %vm622 = vmand %vm586, %vm604
      %vm623 = vmand %vm587, %vm605
      %vm624 = vmand %vm588, %vm606
      %vm625 = vmand %vm589, %vm607
      %vm626 = vmand %vm590, %vm608
      %vm627 = vmand %vm591, %vm609
      %vm628 = vmand %vm592, %vm610
      %vm629 = vmand %vm593, %vm611
      %vm630 = vmand %vm594, %vm612
      %vm631 = vmand %vm595, %vm613
      %vm632 = vcmp.ge.s32.totalorder %v575, 1
      %vm633 = vcmp.ge.s32.totalorder %v576, 1
      %vm634 = vcmp.ge.s32.totalorder %v577, 1
      %vm635 = vmand %vm614, %vm632
      %vm636 = vmand %vm614, %vm633
      %vm637 = vmand %vm614, %vm634
      %vm638 = vmand %vm615, %vm632
      %vm639 = vmand %vm615, %vm633
      %vm640 = vmand %vm615, %vm634
      %vm641 = vmand %vm616, %vm632
      %vm642 = vmand %vm616, %vm633
      %vm643 = vmand %vm616, %vm634
      %vm644 = vmand %vm617, %vm632
      %vm645 = vmand %vm617, %vm633
      %vm646 = vmand %vm617, %vm634
      %vm647 = vmand %vm618, %vm632
      %vm648 = vmand %vm618, %vm633
      %vm649 = vmand %vm618, %vm634
      %vm650 = vmand %vm619, %vm632
      %vm651 = vmand %vm619, %vm633
      %vm652 = vmand %vm619, %vm634
      %vm653 = vmand %vm620, %vm632
      %vm654 = vmand %vm620, %vm633
      %vm655 = vmand %vm620, %vm634
      %vm656 = vmand %vm621, %vm632
      %vm657 = vmand %vm621, %vm633
      %vm658 = vmand %vm621, %vm634
      %vm659 = vmand %vm622, %vm632
      %vm660 = vmand %vm622, %vm633
      %vm661 = vmand %vm622, %vm634
      %vm662 = vmand %vm623, %vm632
      %vm663 = vmand %vm623, %vm633
      %vm664 = vmand %vm623, %vm634
      %vm665 = vmand %vm624, %vm632
      %vm666 = vmand %vm624, %vm633
      %vm667 = vmand %vm624, %vm634
      %vm668 = vmand %vm625, %vm632
      %vm669 = vmand %vm625, %vm633
      %vm670 = vmand %vm625, %vm634
      %vm671 = vmand %vm626, %vm632
      %vm672 = vmand %vm626, %vm633
      %vm673 = vmand %vm626, %vm634
      %vm674 = vmand %vm627, %vm632
      %vm675 = vmand %vm627, %vm633
      %vm676 = vmand %vm627, %vm634
      %vm677 = vmand %vm628, %vm632
      %vm678 = vmand %vm628, %vm633
      %vm679 = vmand %vm628, %vm634
      %vm680 = vmand %vm629, %vm632
      %vm681 = vmand %vm629, %vm633
      %vm682 = vmand %vm629, %vm634
      %vm683 = vmand %vm630, %vm632
      %vm684 = vmand %vm630, %vm633
      %vm685 = vmand %vm630, %vm634
      %vm686 = vmand %vm631, %vm632
      %vm687 = vmand %vm631, %vm633
      %vm688 = vmand %vm631, %vm634
      %vm689 = vcmp.lt.s32.totalorder %v575, 17
      %vm690 = vcmp.lt.s32.totalorder %v576, 17
      %vm691 = vcmp.lt.s32.totalorder %v577, 17
      %vm692 = vmand %vm635, %vm689
      %vm693 = vmand %vm636, %vm690
      %vm694 = vmand %vm637, %vm691
      %vm695 = vmand %vm638, %vm689
      %vm696 = vmand %vm639, %vm690
      %vm697 = vmand %vm640, %vm691
      %vm698 = vmand %vm641, %vm689
      %vm699 = vmand %vm642, %vm690
      %vm700 = vmand %vm643, %vm691
      %vm701 = vmand %vm644, %vm689
      %vm702 = vmand %vm645, %vm690
      %vm703 = vmand %vm646, %vm691
      %vm704 = vmand %vm647, %vm689
      %vm705 = vmand %vm648, %vm690
      %vm706 = vmand %vm649, %vm691
      %vm707 = vmand %vm650, %vm689
      %vm708 = vmand %vm651, %vm690
      %vm709 = vmand %vm652, %vm691
      %vm710 = vmand %vm653, %vm689
      %vm711 = vmand %vm654, %vm690
      %vm712 = vmand %vm655, %vm691
      %vm713 = vmand %vm656, %vm689
      %vm714 = vmand %vm657, %vm690
      %vm715 = vmand %vm658, %vm691
      %vm716 = vmand %vm659, %vm689
      %vm717 = vmand %vm660, %vm690
      %vm718 = vmand %vm661, %vm691
      %vm719 = vmand %vm662, %vm689
      %vm720 = vmand %vm663, %vm690
      %vm721 = vmand %vm664, %vm691
      %vm722 = vmand %vm665, %vm689
      %vm723 = vmand %vm666, %vm690
      %vm724 = vmand %vm667, %vm691
      %vm725 = vmand %vm668, %vm689
      %vm726 = vmand %vm669, %vm690
      %vm727 = vmand %vm670, %vm691
      %vm728 = vmand %vm671, %vm689
      %vm729 = vmand %vm672, %vm690
      %vm730 = vmand %vm673, %vm691
      %vm731 = vmand %vm674, %vm689
      %vm732 = vmand %vm675, %vm690
      %vm733 = vmand %vm676, %vm691
      %vm734 = vmand %vm677, %vm689
      %vm735 = vmand %vm678, %vm690
      %vm736 = vmand %vm679, %vm691
      %vm737 = vmand %vm680, %vm689
      %vm738 = vmand %vm681, %vm690
      %vm739 = vmand %vm682, %vm691
      %vm740 = vmand %vm683, %vm689
      %vm741 = vmand %vm684, %vm690
      %vm742 = vmand %vm685, %vm691
      %vm743 = vmand %vm686, %vm689
      %vm744 = vmand %vm687, %vm690
      %vm745 = vmand %vm688, %vm691
      %v746 = vsel %vm692, 1, 0
      %v747 = vsel %vm693, 1, 0
      %v748 = vsel %vm694, 1, 0
      %v749 = vsel %vm695, 1, 0
      %v750 = vsel %vm696, 1, 0
      %v751 = vsel %vm697, 1, 0
      %v752 = vsel %vm698, 1, 0
      %v753 = vsel %vm699, 1, 0
      %v754 = vsel %vm700, 1, 0
      %v755 = vsel %vm701, 1, 0
      %v756 = vsel %vm702, 1, 0
      %v757 = vsel %vm703, 1, 0
      %v758 = vsel %vm704, 1, 0
      %v759 = vsel %vm705, 1, 0
      %v760 = vsel %vm706, 1, 0
      %v761 = vsel %vm707, 1, 0
      %v762 = vsel %vm708, 1, 0
      %v763 = vsel %vm709, 1, 0
      %v764 = vsel %vm710, 1, 0
      %v765 = vsel %vm711, 1, 0
      %v766 = vsel %vm712, 1, 0
      %v767 = vsel %vm713, 1, 0
      %v768 = vsel %vm714, 1, 0
      %v769 = vsel %vm715, 1, 0
      %v770 = vsel %vm716, 1, 0
      %v771 = vsel %vm717, 1, 0
      %v772 = vsel %vm718, 1, 0
      %v773 = vsel %vm719, 1, 0
      %v774 = vsel %vm720, 1, 0
      %v775 = vsel %vm721, 1, 0
      %v776 = vsel %vm722, 1, 0
      %v777 = vsel %vm723, 1, 0
      %v778 = vsel %vm724, 1, 0
      %v779 = vsel %vm725, 1, 0
      %v780 = vsel %vm726, 1, 0
      %v781 = vsel %vm727, 1, 0
      %v782 = vsel %vm728, 1, 0
      %v783 = vsel %vm729, 1, 0
      %v784 = vsel %vm730, 1, 0
      %v785 = vsel %vm731, 1, 0
      %v786 = vsel %vm732, 1, 0
      %v787 = vsel %vm733, 1, 0
      %v788 = vsel %vm734, 1, 0
      %v789 = vsel %vm735, 1, 0
      %v790 = vsel %vm736, 1, 0
      %v791 = vsel %vm737, 1, 0
      %v792 = vsel %vm738, 1, 0
      %v793 = vsel %vm739, 1, 0
      %v794 = vsel %vm740, 1, 0
      %v795 = vsel %vm741, 1, 0
      %v796 = vsel %vm742, 1, 0
      %v797 = vsel %vm743, 1, 0
      %v798 = vsel %vm744, 1, 0
      %v799 = vsel %vm745, 1, 0
      %vm800 = vcmp.eq.s32.totalorder %v746, 1
      %vm801 = vcmp.eq.s32.totalorder %v747, 1
      %vm802 = vcmp.eq.s32.totalorder %v748, 1
      %vm803 = vcmp.eq.s32.totalorder %v749, 1
      %vm804 = vcmp.eq.s32.totalorder %v750, 1
      %vm805 = vcmp.eq.s32.totalorder %v751, 1
      %vm806 = vcmp.eq.s32.totalorder %v752, 1
      %vm807 = vcmp.eq.s32.totalorder %v753, 1
      %vm808 = vcmp.eq.s32.totalorder %v754, 1
      %vm809 = vcmp.eq.s32.totalorder %v755, 1
      %vm810 = vcmp.eq.s32.totalorder %v756, 1
      %vm811 = vcmp.eq.s32.totalorder %v757, 1
      %vm812 = vcmp.eq.s32.totalorder %v758, 1
      %vm813 = vcmp.eq.s32.totalorder %v759, 1
      %vm814 = vcmp.eq.s32.totalorder %v760, 1
      %vm815 = vcmp.eq.s32.totalorder %v761, 1
      %vm816 = vcmp.eq.s32.totalorder %v762, 1
      %vm817 = vcmp.eq.s32.totalorder %v763, 1
      %vm818 = vcmp.eq.s32.totalorder %v764, 1
      %vm819 = vcmp.eq.s32.totalorder %v765, 1
      %vm820 = vcmp.eq.s32.totalorder %v766, 1
      %vm821 = vcmp.eq.s32.totalorder %v767, 1
      %vm822 = vcmp.eq.s32.totalorder %v768, 1
      %vm823 = vcmp.eq.s32.totalorder %v769, 1
      %vm824 = vcmp.eq.s32.totalorder %v770, 1
      %vm825 = vcmp.eq.s32.totalorder %v771, 1
      %vm826 = vcmp.eq.s32.totalorder %v772, 1
      %vm827 = vcmp.eq.s32.totalorder %v773, 1
      %vm828 = vcmp.eq.s32.totalorder %v774, 1
      %vm829 = vcmp.eq.s32.totalorder %v775, 1
      %vm830 = vcmp.eq.s32.totalorder %v776, 1
      %vm831 = vcmp.eq.s32.totalorder %v777, 1
      %vm832 = vcmp.eq.s32.totalorder %v778, 1
      %vm833 = vcmp.eq.s32.totalorder %v779, 1
      %vm834 = vcmp.eq.s32.totalorder %v780, 1
      %vm835 = vcmp.eq.s32.totalorder %v781, 1
      %vm836 = vcmp.eq.s32.totalorder %v782, 1
      %vm837 = vcmp.eq.s32.totalorder %v783, 1
      %vm838 = vcmp.eq.s32.totalorder %v784, 1
      %vm839 = vcmp.eq.s32.totalorder %v785, 1
      %vm840 = vcmp.eq.s32.totalorder %v786, 1
      %vm841 = vcmp.eq.s32.totalorder %v787, 1
      %vm842 = vcmp.eq.s32.totalorder %v788, 1
      %vm843 = vcmp.eq.s32.totalorder %v789, 1
      %vm844 = vcmp.eq.s32.totalorder %v790, 1
      %vm845 = vcmp.eq.s32.totalorder %v791, 1
      %vm846 = vcmp.eq.s32.totalorder %v792, 1
      %vm847 = vcmp.eq.s32.totalorder %v793, 1
      %vm848 = vcmp.eq.s32.totalorder %v794, 1
      %vm849 = vcmp.eq.s32.totalorder %v795, 1
      %vm850 = vcmp.eq.s32.totalorder %v796, 1
      %vm851 = vcmp.eq.s32.totalorder %v797, 1
      %vm852 = vcmp.eq.s32.totalorder %v798, 1
      %vm853 = vcmp.eq.s32.totalorder %v799, 1
      %v854 = vsel %vm800, %v502, 0.0
      %v855 = vsel %vm801, %v503, 0.0
      %v856 = vsel %vm802, %v504, 0.0
      %v857 = vsel %vm803, %v505, 0.0
      %v858 = vsel %vm804, %v506, 0.0
      %v859 = vsel %vm805, %v507, 0.0
      %v860 = vsel %vm806, %v508, 0.0
      %v861 = vsel %vm807, %v509, 0.0
      %v862 = vsel %vm808, %v510, 0.0
      %v863 = vsel %vm809, %v511, 0.0
      %v864 = vsel %vm810, %v512, 0.0
      %v865 = vsel %vm811, %v513, 0.0
      %v866 = vsel %vm812, %v514, 0.0
      %v867 = vsel %vm813, %v515, 0.0
      %v868 = vsel %vm814, %v516, 0.0
      %v869 = vsel %vm815, %v517, 0.0
      %v870 = vsel %vm816, %v518, 0.0
      %v871 = vsel %vm817, %v519, 0.0
      %v872 = vsel %vm818, %v520, 0.0
      %v873 = vsel %vm819, %v521, 0.0
      %v874 = vsel %vm820, %v522, 0.0
      %v875 = vsel %vm821, %v523, 0.0
      %v876 = vsel %vm822, %v524, 0.0
      %v877 = vsel %vm823, %v525, 0.0
      %v878 = vsel %vm824, %v526, 0.0
      %v879 = vsel %vm825, %v527, 0.0
      %v880 = vsel %vm826, %v528, 0.0
      %v881 = vsel %vm827, %v529, 0.0
      %v882 = vsel %vm828, %v530, 0.0
      %v883 = vsel %vm829, %v531, 0.0
      %v884 = vsel %vm830, %v532, 0.0
      %v885 = vsel %vm831, %v533, 0.0
      %v886 = vsel %vm832, %v534, 0.0
      %v887 = vsel %vm833, %v535, 0.0
      %v888 = vsel %vm834, %v536, 0.0
      %v889 = vsel %vm835, %v537, 0.0
      %v890 = vsel %vm836, %v538, 0.0
      %v891 = vsel %vm837, %v539, 0.0
      %v892 = vsel %vm838, %v540, 0.0
      %v893 = vsel %vm839, %v541, 0.0
      %v894 = vsel %vm840, %v542, 0.0
      %v895 = vsel %vm841, %v543, 0.0
      %v896 = vsel %vm842, %v544, 0.0
      %v897 = vsel %vm843, %v545, 0.0
      %v898 = vsel %vm844, %v546, 0.0
      %v899 = vsel %vm845, %v547, 0.0
      %v900 = vsel %vm846, %v548, 0.0
      %v901 = vsel %vm847, %v549, 0.0
      %v902 = vsel %vm848, %v550, 0.0
      %v903 = vsel %vm849, %v551, 0.0
      %v904 = vsel %vm850, %v552, 0.0
      %v905 = vsel %vm851, %v553, 0.0
      %v906 = vsel %vm852, %v554, 0.0
      %v907 = vsel %vm853, %v555, 0.0
      %v908 = vpack.c.bf16 %v855, %v854
      %v909 = vpack.c.bf16 %v856, %v856
      %v910 = vpack.c.bf16 %v858, %v857
      %v911 = vpack.c.bf16 %v859, %v859
      %v912 = vpack.c.bf16 %v861, %v860
      %v913 = vpack.c.bf16 %v862, %v862
      %v914 = vpack.c.bf16 %v864, %v863
      %v915 = vpack.c.bf16 %v865, %v865
      %v916 = vpack.c.bf16 %v867, %v866
      %v917 = vpack.c.bf16 %v868, %v868
      %v918 = vpack.c.bf16 %v870, %v869
      %v919 = vpack.c.bf16 %v871, %v871
      %v920 = vpack.c.bf16 %v873, %v872
      %v921 = vpack.c.bf16 %v874, %v874
      %v922 = vpack.c.bf16 %v876, %v875
      %v923 = vpack.c.bf16 %v877, %v877
      %v924 = vpack.c.bf16 %v879, %v878
      %v925 = vpack.c.bf16 %v880, %v880
      %v926 = vpack.c.bf16 %v882, %v881
      %v927 = vpack.c.bf16 %v883, %v883
      %v928 = vpack.c.bf16 %v885, %v884
      %v929 = vpack.c.bf16 %v886, %v886
      %v930 = vpack.c.bf16 %v888, %v887
      %v931 = vpack.c.bf16 %v889, %v889
      %v932 = vpack.c.bf16 %v891, %v890
      %v933 = vpack.c.bf16 %v892, %v892
      %v934 = vpack.c.bf16 %v894, %v893
      %v935 = vpack.c.bf16 %v895, %v895
      %v936 = vpack.c.bf16 %v897, %v896
      %v937 = vpack.c.bf16 %v898, %v898
      %v938 = vpack.c.bf16 %v900, %v899
      %v939 = vpack.c.bf16 %v901, %v901
      %v940 = vpack.c.bf16 %v903, %v902
      %v941 = vpack.c.bf16 %v904, %v904
      %v942 = vpack.c.bf16 %v906, %v905
      %v943 = vpack.c.bf16 %v907, %v907
      %vm944 = vsmask.f32 7424
      %v946 = vshrl.u32 %v908, 16
      %v948 = vshll.u32 %v908, 16
      %v950 = vrot.slane %v948, 1
      %v951 = vor.u32 %v946, %v950
      %v953 = vshll.u32 %v909, 16
      %v955 = vrot.slane %v953, 1
      %v956 = vsel %vm944, %v951, %v955
      %v958 = vshrl.u32 %v910, 16
      %v960 = vshll.u32 %v910, 16
      %v962 = vrot.slane %v960, 1
      %v963 = vor.u32 %v958, %v962
      %v965 = vshll.u32 %v911, 16
      %v967 = vrot.slane %v965, 1
      %v968 = vsel %vm944, %v963, %v967
      %v970 = vshrl.u32 %v912, 16
      %v972 = vshll.u32 %v912, 16
      %v974 = vrot.slane %v972, 1
      %v975 = vor.u32 %v970, %v974
      %v977 = vshll.u32 %v913, 16
      %v979 = vrot.slane %v977, 1
      %v980 = vsel %vm944, %v975, %v979
      %v982 = vshrl.u32 %v914, 16
      %v984 = vshll.u32 %v914, 16
      %v986 = vrot.slane %v984, 1
      %v987 = vor.u32 %v982, %v986
      %v989 = vshll.u32 %v915, 16
      %v991 = vrot.slane %v989, 1
      %v992 = vsel %vm944, %v987, %v991
      %v994 = vshrl.u32 %v916, 16
      %v996 = vshll.u32 %v916, 16
      %v998 = vrot.slane %v996, 1
      %v999 = vor.u32 %v994, %v998
      %v1001 = vshll.u32 %v917, 16
      %v1003 = vrot.slane %v1001, 1
      %v1004 = vsel %vm944, %v999, %v1003
      %v1006 = vshrl.u32 %v918, 16
      %v1008 = vshll.u32 %v918, 16
      %v1010 = vrot.slane %v1008, 1
      %v1011 = vor.u32 %v1006, %v1010
      %v1013 = vshll.u32 %v919, 16
      %v1015 = vrot.slane %v1013, 1
      %v1016 = vsel %vm944, %v1011, %v1015
      %v1018 = vshrl.u32 %v920, 16
      %v1020 = vshll.u32 %v920, 16
      %v1022 = vrot.slane %v1020, 1
      %v1023 = vor.u32 %v1018, %v1022
      %v1025 = vshll.u32 %v921, 16
      %v1027 = vrot.slane %v1025, 1
      %v1028 = vsel %vm944, %v1023, %v1027
      %v1030 = vshrl.u32 %v922, 16
      %v1032 = vshll.u32 %v922, 16
      %v1034 = vrot.slane %v1032, 1
      %v1035 = vor.u32 %v1030, %v1034
      %v1037 = vshll.u32 %v923, 16
      %v1039 = vrot.slane %v1037, 1
      %v1040 = vsel %vm944, %v1035, %v1039
      %v1042 = vshrl.u32 %v924, 16
      %v1044 = vshll.u32 %v924, 16
      %v1046 = vrot.slane %v1044, 1
      %v1047 = vor.u32 %v1042, %v1046
      %v1049 = vshll.u32 %v925, 16
      %v1051 = vrot.slane %v1049, 1
      %v1052 = vsel %vm944, %v1047, %v1051
      %v1054 = vshrl.u32 %v926, 16
      %v1056 = vshll.u32 %v926, 16
      %v1058 = vrot.slane %v1056, 1
      %v1059 = vor.u32 %v1054, %v1058
      %v1061 = vshll.u32 %v927, 16
      %v1063 = vrot.slane %v1061, 1
      %v1064 = vsel %vm944, %v1059, %v1063
      %v1066 = vshrl.u32 %v928, 16
      %v1068 = vshll.u32 %v928, 16
      %v1070 = vrot.slane %v1068, 1
      %v1071 = vor.u32 %v1066, %v1070
      %v1073 = vshll.u32 %v929, 16
      %v1075 = vrot.slane %v1073, 1
      %v1076 = vsel %vm944, %v1071, %v1075
      %v1078 = vshrl.u32 %v930, 16
      %v1080 = vshll.u32 %v930, 16
      %v1082 = vrot.slane %v1080, 1
      %v1083 = vor.u32 %v1078, %v1082
      %v1085 = vshll.u32 %v931, 16
      %v1087 = vrot.slane %v1085, 1
      %v1088 = vsel %vm944, %v1083, %v1087
      %v1090 = vshrl.u32 %v932, 16
      %v1092 = vshll.u32 %v932, 16
      %v1094 = vrot.slane %v1092, 1
      %v1095 = vor.u32 %v1090, %v1094
      %v1097 = vshll.u32 %v933, 16
      %v1099 = vrot.slane %v1097, 1
      %v1100 = vsel %vm944, %v1095, %v1099
      %v1102 = vshrl.u32 %v934, 16
      %v1104 = vshll.u32 %v934, 16
      %v1106 = vrot.slane %v1104, 1
      %v1107 = vor.u32 %v1102, %v1106
      %v1109 = vshll.u32 %v935, 16
      %v1111 = vrot.slane %v1109, 1
      %v1112 = vsel %vm944, %v1107, %v1111
      %v1114 = vshrl.u32 %v936, 16
      %v1116 = vshll.u32 %v936, 16
      %v1118 = vrot.slane %v1116, 1
      %v1119 = vor.u32 %v1114, %v1118
      %v1121 = vshll.u32 %v937, 16
      %v1123 = vrot.slane %v1121, 1
      %v1124 = vsel %vm944, %v1119, %v1123
      %v1126 = vshrl.u32 %v938, 16
      %v1128 = vshll.u32 %v938, 16
      %v1130 = vrot.slane %v1128, 1
      %v1131 = vor.u32 %v1126, %v1130
      %v1133 = vshll.u32 %v939, 16
      %v1135 = vrot.slane %v1133, 1
      %v1136 = vsel %vm944, %v1131, %v1135
      %vm1169 = vcmask 1046528
      %v1170 = vrot.slane %v908, 1
      %v1171 = vrot.slane %v909, 1
      %v1172 = vsel %vm1169, %v1170, %v1171
      %v1173 = vrot.slane %v910, 1
      %v1174 = vrot.slane %v911, 1
      %v1175 = vsel %vm1169, %v1173, %v1174
      %v1176 = vrot.slane %v912, 1
      %v1177 = vrot.slane %v913, 1
      %v1178 = vsel %vm1169, %v1176, %v1177
      %v1179 = vrot.slane %v914, 1
      %v1180 = vrot.slane %v915, 1
      %v1181 = vsel %vm1169, %v1179, %v1180
      %v1182 = vrot.slane %v916, 1
      %v1183 = vrot.slane %v917, 1
      %v1184 = vsel %vm1169, %v1182, %v1183
      %v1185 = vrot.slane %v918, 1
      %v1186 = vrot.slane %v919, 1
      %v1187 = vsel %vm1169, %v1185, %v1186
      %v1188 = vrot.slane %v920, 1
      %v1189 = vrot.slane %v921, 1
      %v1190 = vsel %vm1169, %v1188, %v1189
      %v1191 = vrot.slane %v922, 1
      %v1192 = vrot.slane %v923, 1
      %v1193 = vsel %vm1169, %v1191, %v1192
      %v1194 = vrot.slane %v924, 1
      %v1195 = vrot.slane %v925, 1
      %v1196 = vsel %vm1169, %v1194, %v1195
      %v1197 = vrot.slane %v926, 1
      %v1198 = vrot.slane %v927, 1
      %v1199 = vsel %vm1169, %v1197, %v1198
      %v1200 = vrot.slane %v928, 1
      %v1201 = vrot.slane %v929, 1
      %v1202 = vsel %vm1169, %v1200, %v1201
      %v1203 = vrot.slane %v930, 1
      %v1204 = vrot.slane %v931, 1
      %v1205 = vsel %vm1169, %v1203, %v1204
      %v1206 = vrot.slane %v932, 1
      %v1207 = vrot.slane %v933, 1
      %v1208 = vsel %vm1169, %v1206, %v1207
      %v1209 = vrot.slane %v934, 1
      %v1210 = vrot.slane %v935, 1
      %v1211 = vsel %vm1169, %v1209, %v1210
      %v1212 = vrot.slane %v936, 1
      %v1213 = vrot.slane %v937, 1
      %v1214 = vsel %vm1169, %v1212, %v1213
      %v1215 = vrot.slane %v938, 1
      %v1216 = vrot.slane %v939, 1
      %v1217 = vsel %vm1169, %v1215, %v1216
      %v1219 = vshrl.u32 %v940, 16
      %v1221 = vshll.u32 %v940, 16
      %v1223 = vrot.slane %v1221, 1
      %v1224 = vor.u32 %v1219, %v1223
      %v1226 = vshll.u32 %v941, 16
      %v1228 = vrot.slane %v1226, 1
      %v1229 = vsel %vm944, %v1224, %v1228
      %v1232 = vrot.slane %v940, 1
      %v1233 = vrot.slane %v941, 1
      %v1234 = vsel %vm1169, %v1232, %v1233
      %v1236 = vshrl.u32 %v942, 16
      %v1238 = vshll.u32 %v942, 16
      %v1240 = vrot.slane %v1238, 1
      %v1241 = vor.u32 %v1236, %v1240
      %v1243 = vshll.u32 %v943, 16
      %v1245 = vrot.slane %v1243, 1
      %v1246 = vsel %vm944, %v1241, %v1245
      %v1249 = vrot.slane %v942, 1
      %v1250 = vrot.slane %v943, 1
      %v1251 = vsel %vm1169, %v1249, %v1250
      %1252 = vrot.lane.b32.xlu0 %v956, 8
      %v1253 = vpop.permute.xlu0 %1252
      %1254 = vrot.lane.b32.xlu0 %v968, 8
      %v1255 = vpop.permute.xlu0 %1254
      %1256 = vrot.lane.b32.xlu0 %v980, 8
      %v1257 = vpop.permute.xlu0 %1256
      %1258 = vrot.lane.b32.xlu0 %v992, 8
      %v1259 = vpop.permute.xlu0 %1258
      %1260 = vrot.lane.b32.xlu0 %v1004, 8
      %v1261 = vpop.permute.xlu0 %1260
      %1262 = vrot.lane.b32.xlu0 %v1016, 8
      %v1263 = vpop.permute.xlu0 %1262
      %1264 = vrot.lane.b32.xlu0 %v1028, 8
      %v1265 = vpop.permute.xlu0 %1264
      %1266 = vrot.lane.b32.xlu0 %v1040, 8
      %v1267 = vpop.permute.xlu0 %1266
      %1268 = vrot.lane.b32.xlu0 %v1052, 8
      %v1269 = vpop.permute.xlu0 %1268
      %1270 = vrot.lane.b32.xlu0 %v1064, 8
      %v1271 = vpop.permute.xlu0 %1270
      %1272 = vrot.lane.b32.xlu0 %v1076, 8
      %v1273 = vpop.permute.xlu0 %1272
      %1274 = vrot.lane.b32.xlu0 %v1088, 8
      %v1275 = vpop.permute.xlu0 %1274
      %1276 = vrot.lane.b32.xlu0 %v1100, 8
      %v1277 = vpop.permute.xlu0 %1276
      %1278 = vrot.lane.b32.xlu0 %v1112, 8
      %v1279 = vpop.permute.xlu0 %1278
      %1280 = vrot.lane.b32.xlu0 %v1124, 8
      %v1281 = vpop.permute.xlu0 %1280
      %1282 = vrot.lane.b32.xlu0 %v1136, 8
      %v1283 = vpop.permute.xlu0 %1282
      %1284 = vrot.lane.b32.xlu0 %v1172, 16
      %v1285 = vpop.permute.xlu0 %1284
      %1286 = vrot.lane.b32.xlu0 %v1175, 16
      %v1287 = vpop.permute.xlu0 %1286
      %1288 = vrot.lane.b32.xlu0 %v1178, 16
      %v1289 = vpop.permute.xlu0 %1288
      %1290 = vrot.lane.b32.xlu0 %v1181, 16
      %v1291 = vpop.permute.xlu0 %1290
      %1292 = vrot.lane.b32.xlu0 %v1184, 16
      %v1293 = vpop.permute.xlu0 %1292
      %1294 = vrot.lane.b32.xlu0 %v1187, 16
      %v1295 = vpop.permute.xlu0 %1294
      %1296 = vrot.lane.b32.xlu0 %v1190, 16
      %v1297 = vpop.permute.xlu0 %1296
      %1298 = vrot.lane.b32.xlu0 %v1193, 16
      %v1299 = vpop.permute.xlu0 %1298
      %1300 = vrot.lane.b32.xlu0 %v1196, 16
      %v1301 = vpop.permute.xlu0 %1300
      %1302 = vrot.lane.b32.xlu0 %v1199, 16
      %v1303 = vpop.permute.xlu0 %1302
      %1304 = vrot.lane.b32.xlu0 %v1202, 16
      %v1305 = vpop.permute.xlu0 %1304
      %1306 = vrot.lane.b32.xlu0 %v1205, 16
      %v1307 = vpop.permute.xlu0 %1306
      %1308 = vrot.lane.b32.xlu0 %v1208, 16
      %v1309 = vpop.permute.xlu0 %1308
      %1310 = vrot.lane.b32.xlu0 %v1211, 16
      %v1311 = vpop.permute.xlu0 %1310
      %1312 = vrot.lane.b32.xlu0 %v1214, 16
      %v1313 = vpop.permute.xlu0 %1312
      %1314 = vrot.lane.b32.xlu0 %v1217, 16
      %v1315 = vpop.permute.xlu0 %1314
      %1316 = vrot.lane.b32.xlu0 %v910, 24
      %v1317 = vpop.permute.xlu0 %1316
      %1318 = vrot.lane.b32.xlu0 %v912, 24
      %v1319 = vpop.permute.xlu0 %1318
      %1320 = vrot.lane.b32.xlu0 %v914, 24
      %v1321 = vpop.permute.xlu0 %1320
      %1322 = vrot.lane.b32.xlu0 %v916, 24
      %v1323 = vpop.permute.xlu0 %1322
      %1324 = vrot.lane.b32.xlu0 %v918, 24
      %v1325 = vpop.permute.xlu0 %1324
      %1326 = vrot.lane.b32.xlu0 %v920, 24
      %v1327 = vpop.permute.xlu0 %1326
      %1328 = vrot.lane.b32.xlu0 %v922, 24
      %v1329 = vpop.permute.xlu0 %1328
      %1330 = vrot.lane.b32.xlu0 %v924, 24
      %v1331 = vpop.permute.xlu0 %1330
      %1332 = vrot.lane.b32.xlu0 %v926, 24
      %v1333 = vpop.permute.xlu0 %1332
      %1334 = vrot.lane.b32.xlu0 %v928, 24
      %v1335 = vpop.permute.xlu0 %1334
      %1336 = vrot.lane.b32.xlu0 %v930, 24
      %v1337 = vpop.permute.xlu0 %1336
      %1338 = vrot.lane.b32.xlu0 %v932, 24
      %v1339 = vpop.permute.xlu0 %1338
      %1340 = vrot.lane.b32.xlu0 %v934, 24
      %v1341 = vpop.permute.xlu0 %1340
      %1342 = vrot.lane.b32.xlu0 %v936, 24
      %v1343 = vpop.permute.xlu0 %1342
      %1344 = vrot.lane.b32.xlu0 %v938, 24
      %v1345 = vpop.permute.xlu0 %1344
      %1346 = vrot.lane.b32.xlu0 %v940, 24
      %v1347 = vpop.permute.xlu0 %1346
      %1348 = vrot.lane.b32.xlu0 %v968, 32
      %v1349 = vpop.permute.xlu0 %1348
      %1350 = vrot.lane.b32.xlu0 %v980, 32
      %v1351 = vpop.permute.xlu0 %1350
      %1352 = vrot.lane.b32.xlu0 %v992, 32
      %v1353 = vpop.permute.xlu0 %1352
      %1354 = vrot.lane.b32.xlu0 %v1004, 32
      %v1355 = vpop.permute.xlu0 %1354
      %1356 = vrot.lane.b32.xlu0 %v1016, 32
      %v1357 = vpop.permute.xlu0 %1356
      %1358 = vrot.lane.b32.xlu0 %v1028, 32
      %v1359 = vpop.permute.xlu0 %1358
      %1360 = vrot.lane.b32.xlu0 %v1040, 32
      %v1361 = vpop.permute.xlu0 %1360
      %1362 = vrot.lane.b32.xlu0 %v1052, 32
      %v1363 = vpop.permute.xlu0 %1362
      %1364 = vrot.lane.b32.xlu0 %v1064, 32
      %v1365 = vpop.permute.xlu0 %1364
      %1366 = vrot.lane.b32.xlu0 %v1076, 32
      %v1367 = vpop.permute.xlu0 %1366
      %1368 = vrot.lane.b32.xlu0 %v1088, 32
      %v1369 = vpop.permute.xlu0 %1368
      %1370 = vrot.lane.b32.xlu0 %v1100, 32
      %v1371 = vpop.permute.xlu0 %1370
      %1372 = vrot.lane.b32.xlu0 %v1112, 32
      %v1373 = vpop.permute.xlu0 %1372
      %1374 = vrot.lane.b32.xlu0 %v1124, 32
      %v1375 = vpop.permute.xlu0 %1374
      %1376 = vrot.lane.b32.xlu0 %v1136, 32
      %v1377 = vpop.permute.xlu0 %1376
      %1378 = vrot.lane.b32.xlu0 %v1229, 32
      %v1379 = vpop.permute.xlu0 %1378
      %1380 = vrot.lane.b32.xlu0 %v1175, 40
      %v1381 = vpop.permute.xlu0 %1380
      %1382 = vrot.lane.b32.xlu0 %v1178, 40
      %v1383 = vpop.permute.xlu0 %1382
      %1384 = vrot.lane.b32.xlu0 %v1181, 40
      %v1385 = vpop.permute.xlu0 %1384
      %1386 = vrot.lane.b32.xlu0 %v1184, 40
      %v1387 = vpop.permute.xlu0 %1386
      %1388 = vrot.lane.b32.xlu0 %v1187, 40
      %v1389 = vpop.permute.xlu0 %1388
      %1390 = vrot.lane.b32.xlu0 %v1190, 40
      %v1391 = vpop.permute.xlu0 %1390
      %1392 = vrot.lane.b32.xlu0 %v1193, 40
      %v1393 = vpop.permute.xlu0 %1392
      %1394 = vrot.lane.b32.xlu0 %v1196, 40
      %v1395 = vpop.permute.xlu0 %1394
      %1396 = vrot.lane.b32.xlu0 %v1199, 40
      %v1397 = vpop.permute.xlu0 %1396
      %1398 = vrot.lane.b32.xlu0 %v1202, 40
      %v1399 = vpop.permute.xlu0 %1398
      %1400 = vrot.lane.b32.xlu0 %v1205, 40
      %v1401 = vpop.permute.xlu0 %1400
      %1402 = vrot.lane.b32.xlu0 %v1208, 40
      %v1403 = vpop.permute.xlu0 %1402
      %1404 = vrot.lane.b32.xlu0 %v1211, 40
      %v1405 = vpop.permute.xlu0 %1404
      %1406 = vrot.lane.b32.xlu0 %v1214, 40
      %v1407 = vpop.permute.xlu0 %1406
      %1408 = vrot.lane.b32.xlu0 %v1217, 40
      %v1409 = vpop.permute.xlu0 %1408
      %1410 = vrot.lane.b32.xlu0 %v1234, 40
      %v1411 = vpop.permute.xlu0 %1410
      %1412 = vrot.lane.b32.xlu0 %v912, 48
      %v1413 = vpop.permute.xlu0 %1412
      %1414 = vrot.lane.b32.xlu0 %v914, 48
      %v1415 = vpop.permute.xlu0 %1414
      %1416 = vrot.lane.b32.xlu0 %v916, 48
      %v1417 = vpop.permute.xlu0 %1416
      %1418 = vrot.lane.b32.xlu0 %v918, 48
      %v1419 = vpop.permute.xlu0 %1418
      %1420 = vrot.lane.b32.xlu0 %v920, 48
      %v1421 = vpop.permute.xlu0 %1420
      %1422 = vrot.lane.b32.xlu0 %v922, 48
      %v1423 = vpop.permute.xlu0 %1422
      %1424 = vrot.lane.b32.xlu0 %v924, 48
      %v1425 = vpop.permute.xlu0 %1424
      %1426 = vrot.lane.b32.xlu0 %v926, 48
      %v1427 = vpop.permute.xlu0 %1426
      %1428 = vrot.lane.b32.xlu0 %v928, 48
      %v1429 = vpop.permute.xlu0 %1428
      %1430 = vrot.lane.b32.xlu0 %v930, 48
      %v1431 = vpop.permute.xlu0 %1430
      %1432 = vrot.lane.b32.xlu0 %v932, 48
      %v1433 = vpop.permute.xlu0 %1432
      %1434 = vrot.lane.b32.xlu0 %v934, 48
      %v1435 = vpop.permute.xlu0 %1434
      %1436 = vrot.lane.b32.xlu0 %v936, 48
      %v1437 = vpop.permute.xlu0 %1436
      %1438 = vrot.lane.b32.xlu0 %v938, 48
      %v1439 = vpop.permute.xlu0 %1438
      %1440 = vrot.lane.b32.xlu0 %v940, 48
      %v1441 = vpop.permute.xlu0 %1440
      %1442 = vrot.lane.b32.xlu0 %v942, 48
      %v1443 = vpop.permute.xlu0 %1442
      %1444 = vrot.lane.b32.xlu0 %v980, 56
      %v1445 = vpop.permute.xlu0 %1444
      %1446 = vrot.lane.b32.xlu0 %v992, 56
      %v1447 = vpop.permute.xlu0 %1446
      %1448 = vrot.lane.b32.xlu0 %v1004, 56
      %v1449 = vpop.permute.xlu0 %1448
      %1450 = vrot.lane.b32.xlu0 %v1016, 56
      %v1451 = vpop.permute.xlu0 %1450
      %1452 = vrot.lane.b32.xlu0 %v1028, 56
      %v1453 = vpop.permute.xlu0 %1452
      %1454 = vrot.lane.b32.xlu0 %v1040, 56
      %v1455 = vpop.permute.xlu0 %1454
      %1456 = vrot.lane.b32.xlu0 %v1052, 56
      %v1457 = vpop.permute.xlu0 %1456
      %1458 = vrot.lane.b32.xlu0 %v1064, 56
      %v1459 = vpop.permute.xlu0 %1458
      %1460 = vrot.lane.b32.xlu0 %v1076, 56
      %v1461 = vpop.permute.xlu0 %1460
      %1462 = vrot.lane.b32.xlu0 %v1088, 56
      %v1463 = vpop.permute.xlu0 %1462
      %1464 = vrot.lane.b32.xlu0 %v1100, 56
      %v1465 = vpop.permute.xlu0 %1464
      %1466 = vrot.lane.b32.xlu0 %v1112, 56
      %v1467 = vpop.permute.xlu0 %1466
      %1468 = vrot.lane.b32.xlu0 %v1124, 56
      %v1469 = vpop.permute.xlu0 %1468
      %1470 = vrot.lane.b32.xlu0 %v1136, 56
      %v1471 = vpop.permute.xlu0 %1470
      %1472 = vrot.lane.b32.xlu0 %v1229, 56
      %v1473 = vpop.permute.xlu0 %1472
      %1474 = vrot.lane.b32.xlu0 %v1246, 56
      %v1475 = vpop.permute.xlu0 %1474
      %1476 = vrot.lane.b32.xlu0 %v1178, 64
      %v1477 = vpop.permute.xlu0 %1476
      %1478 = vrot.lane.b32.xlu0 %v1181, 64
      %v1479 = vpop.permute.xlu0 %1478
      %1480 = vrot.lane.b32.xlu0 %v1184, 64
      %v1481 = vpop.permute.xlu0 %1480
      %1482 = vrot.lane.b32.xlu0 %v1187, 64
      %v1483 = vpop.permute.xlu0 %1482
      %1484 = vrot.lane.b32.xlu0 %v1190, 64
      %v1485 = vpop.permute.xlu0 %1484
      %1486 = vrot.lane.b32.xlu0 %v1193, 64
      %v1487 = vpop.permute.xlu0 %1486
      %1488 = vrot.lane.b32.xlu0 %v1196, 64
      %v1489 = vpop.permute.xlu0 %1488
      %1490 = vrot.lane.b32.xlu0 %v1199, 64
      %v1491 = vpop.permute.xlu0 %1490
      %1492 = vrot.lane.b32.xlu0 %v1202, 64
      %v1493 = vpop.permute.xlu0 %1492
      %1494 = vrot.lane.b32.xlu0 %v1205, 64
      %v1495 = vpop.permute.xlu0 %1494
      %1496 = vrot.lane.b32.xlu0 %v1208, 64
      %v1497 = vpop.permute.xlu0 %1496
      %1498 = vrot.lane.b32.xlu0 %v1211, 64
      %v1499 = vpop.permute.xlu0 %1498
      %1500 = vrot.lane.b32.xlu0 %v1214, 64
      %v1501 = vpop.permute.xlu0 %1500
      %1502 = vrot.lane.b32.xlu0 %v1217, 64
      %v1503 = vpop.permute.xlu0 %1502
      %1504 = vrot.lane.b32.xlu0 %v1234, 64
      %v1505 = vpop.permute.xlu0 %1504
      %1506 = vrot.lane.b32.xlu0 %v1251, 64
      %v1507 = vpop.permute.xlu0 %1506
      %vm1508 = vcmask 64512
      %v1510 = vsel %vm1508, %v908, %v1253
      %v1512 = vsel %vm1508, %v910, %v1255
      %v1514 = vsel %vm1508, %v912, %v1257
      %v1516 = vsel %vm1508, %v914, %v1259
      %v1518 = vsel %vm1508, %v916, %v1261
      %v1520 = vsel %vm1508, %v918, %v1263
      %v1522 = vsel %vm1508, %v920, %v1265
      %v1524 = vsel %vm1508, %v922, %v1267
      %v1526 = vsel %vm1508, %v924, %v1269
      %v1528 = vsel %vm1508, %v926, %v1271
      %v1530 = vsel %vm1508, %v928, %v1273
      %v1532 = vsel %vm1508, %v930, %v1275
      %v1534 = vsel %vm1508, %v932, %v1277
      %v1536 = vsel %vm1508, %v934, %v1279
      %v1538 = vsel %vm1508, %v936, %v1281
      %v1540 = vsel %vm1508, %v938, %v1283
      %vm1541 = vcmask 130048
      %v1543 = vsel %vm1541, %v1510, %v1285
      %v1545 = vsel %vm1541, %v1512, %v1287
      %v1547 = vsel %vm1541, %v1514, %v1289
      %v1549 = vsel %vm1541, %v1516, %v1291
      %v1551 = vsel %vm1541, %v1518, %v1293
      %v1553 = vsel %vm1541, %v1520, %v1295
      %v1555 = vsel %vm1541, %v1522, %v1297
      %v1557 = vsel %vm1541, %v1524, %v1299
      %v1559 = vsel %vm1541, %v1526, %v1301
      %v1561 = vsel %vm1541, %v1528, %v1303
      %v1563 = vsel %vm1541, %v1530, %v1305
      %v1565 = vsel %vm1541, %v1532, %v1307
      %v1567 = vsel %vm1541, %v1534, %v1309
      %v1569 = vsel %vm1541, %v1536, %v1311
      %v1571 = vsel %vm1541, %v1538, %v1313
      %v1573 = vsel %vm1541, %v1540, %v1315
      %vm1574 = vcmask 195584
      %v1576 = vsel %vm1574, %v1543, %v1317
      %v1578 = vsel %vm1574, %v1545, %v1319
      %v1580 = vsel %vm1574, %v1547, %v1321
      %v1582 = vsel %vm1574, %v1549, %v1323
      %v1584 = vsel %vm1574, %v1551, %v1325
      %v1586 = vsel %vm1574, %v1553, %v1327
      %v1588 = vsel %vm1574, %v1555, %v1329
      %v1590 = vsel %vm1574, %v1557, %v1331
      %v1592 = vsel %vm1574, %v1559, %v1333
      %v1594 = vsel %vm1574, %v1561, %v1335
      %v1596 = vsel %vm1574, %v1563, %v1337
      %v1598 = vsel %vm1574, %v1565, %v1339
      %v1600 = vsel %vm1574, %v1567, %v1341
      %v1602 = vsel %vm1574, %v1569, %v1343
      %v1604 = vsel %vm1574, %v1571, %v1345
      %v1606 = vsel %vm1574, %v1573, %v1347
      %vm1607 = vcmask 261120
      %v1609 = vsel %vm1607, %v1576, %v1349
      %v1611 = vsel %vm1607, %v1578, %v1351
      %v1613 = vsel %vm1607, %v1580, %v1353
      %v1615 = vsel %vm1607, %v1582, %v1355
      %v1617 = vsel %vm1607, %v1584, %v1357
      %v1619 = vsel %vm1607, %v1586, %v1359
      %v1621 = vsel %vm1607, %v1588, %v1361
      %v1623 = vsel %vm1607, %v1590, %v1363
      %v1625 = vsel %vm1607, %v1592, %v1365
      %v1627 = vsel %vm1607, %v1594, %v1367
      %v1629 = vsel %vm1607, %v1596, %v1369
      %v1631 = vsel %vm1607, %v1598, %v1371
      %v1633 = vsel %vm1607, %v1600, %v1373
      %v1635 = vsel %vm1607, %v1602, %v1375
      %v1637 = vsel %vm1607, %v1604, %v1377
      %v1639 = vsel %vm1607, %v1606, %v1379
      %vm1640 = vcmask 326656
      %v1642 = vsel %vm1640, %v1609, %v1381
      %v1644 = vsel %vm1640, %v1611, %v1383
      %v1646 = vsel %vm1640, %v1613, %v1385
      %v1648 = vsel %vm1640, %v1615, %v1387
      %v1650 = vsel %vm1640, %v1617, %v1389
      %v1652 = vsel %vm1640, %v1619, %v1391
      %v1654 = vsel %vm1640, %v1621, %v1393
      %v1656 = vsel %vm1640, %v1623, %v1395
      %v1658 = vsel %vm1640, %v1625, %v1397
      %v1660 = vsel %vm1640, %v1627, %v1399
      %v1662 = vsel %vm1640, %v1629, %v1401
      %v1664 = vsel %vm1640, %v1631, %v1403
      %v1666 = vsel %vm1640, %v1633, %v1405
      %v1668 = vsel %vm1640, %v1635, %v1407
      %v1670 = vsel %vm1640, %v1637, %v1409
      %v1672 = vsel %vm1640, %v1639, %v1411
      %vm1673 = vcmask 392192
      %v1675 = vsel %vm1673, %v1642, %v1413
      %v1677 = vsel %vm1673, %v1644, %v1415
      %v1679 = vsel %vm1673, %v1646, %v1417
      %v1681 = vsel %vm1673, %v1648, %v1419
      %v1683 = vsel %vm1673, %v1650, %v1421
      %v1685 = vsel %vm1673, %v1652, %v1423
      %v1687 = vsel %vm1673, %v1654, %v1425
      %v1689 = vsel %vm1673, %v1656, %v1427
      %v1691 = vsel %vm1673, %v1658, %v1429
      %v1693 = vsel %vm1673, %v1660, %v1431
      %v1695 = vsel %vm1673, %v1662, %v1433
      %v1697 = vsel %vm1673, %v1664, %v1435
      %v1699 = vsel %vm1673, %v1666, %v1437
      %v1701 = vsel %vm1673, %v1668, %v1439
      %v1703 = vsel %vm1673, %v1670, %v1441
      %v1705 = vsel %vm1673, %v1672, %v1443
      %vm1706 = vcmask 457728
      %v1708 = vsel %vm1706, %v1675, %v1445
      %v1710 = vsel %vm1706, %v1677, %v1447
      %v1712 = vsel %vm1706, %v1679, %v1449
      %v1714 = vsel %vm1706, %v1681, %v1451
      %v1716 = vsel %vm1706, %v1683, %v1453
      %v1718 = vsel %vm1706, %v1685, %v1455
      %v1720 = vsel %vm1706, %v1687, %v1457
      %v1722 = vsel %vm1706, %v1689, %v1459
      %v1724 = vsel %vm1706, %v1691, %v1461
      %v1726 = vsel %vm1706, %v1693, %v1463
      %v1728 = vsel %vm1706, %v1695, %v1465
      %v1730 = vsel %vm1706, %v1697, %v1467
      %v1732 = vsel %vm1706, %v1699, %v1469
      %v1734 = vsel %vm1706, %v1701, %v1471
      %v1736 = vsel %vm1706, %v1703, %v1473
      %v1738 = vsel %vm1706, %v1705, %v1475
      %vm1739 = vcmask 523264
      %v1741 = vsel %vm1739, %v1708, %v1477
      %v1743 = vsel %vm1739, %v1710, %v1479
      %v1745 = vsel %vm1739, %v1712, %v1481
      %v1747 = vsel %vm1739, %v1714, %v1483
      %v1749 = vsel %vm1739, %v1716, %v1485
      %v1751 = vsel %vm1739, %v1718, %v1487
      %v1753 = vsel %vm1739, %v1720, %v1489
      %v1755 = vsel %vm1739, %v1722, %v1491
      %v1757 = vsel %vm1739, %v1724, %v1493
      %v1759 = vsel %vm1739, %v1726, %v1495
      %v1761 = vsel %vm1739, %v1728, %v1497
      %v1763 = vsel %vm1739, %v1730, %v1499
      %v1765 = vsel %vm1739, %v1732, %v1501
      %v1767 = vsel %vm1739, %v1734, %v1503
      %v1769 = vsel %vm1739, %v1736, %v1505
      %v1771 = vsel %vm1739, %v1738, %v1507
      %v1772 = vld [vmem:[%s3] sm:$0xf]
      %v1773 = vld [vmem:[%s3 + $0x4] sm:$0xf]
      %v1774 = vld [vmem:[%s3 + $0x8] sm:$0xf]
      %v1775 = vld [vmem:[%s3 + $0xc] sm:$0xf]
      %v1776 = vld [vmem:[%s3 + $0x10] sm:$0xf]
      %v1777 = vld [vmem:[%s3 + $0x14] sm:$0xf]
      %v1778 = vld [vmem:[%s3 + $0x18] sm:$0xf]
      %v1779 = vld [vmem:[%s3 + $0x1c] sm:$0xf]
      %v1780 = vld [vmem:[%s3 + $0x20] sm:$0xf]
      %v1790 = vunpack.c.l.b16 %v1772
      %v1791 = vunpack.c.l.b16 %v1773
      %v1792 = vunpack.c.l.b16 %v1774
      %v1793 = vunpack.c.l.b16 %v1775
      %v1794 = vunpack.c.l.b16 %v1776
      %v1795 = vunpack.c.l.b16 %v1777
      %v1796 = vunpack.c.l.b16 %v1778
      %v1797 = vunpack.c.l.b16 %v1779
      %v1798 = vunpack.c.l.b16 %v1780
      %v1799 = vpack.c.b16 %v1791, %v1790
      %v1800 = vpack.c.b16 %v1793, %v1792
      %v1801 = vpack.c.b16 %v1795, %v1794
      %v1802 = vpack.c.b16 %v1797, %v1796
      %v1803 = vpack.c.b16 %v1798, %v1798
      %vm1808 = vcmask 588800
      %v1809 = vsel %vm1808, %v1741, 0
      %v1811 = vsel %vm1808, %v1743, 0
      %v1813 = vsel %vm1808, %v1745, 0
      %v1815 = vsel %vm1808, %v1747, 0
      %v1817 = vsel %vm1808, %v1749, 0
      %v1819 = vsel %vm1808, %v1751, 0
      %v1821 = vsel %vm1808, %v1753, 0
      %v1823 = vsel %vm1808, %v1755, 0
      %v1825 = vsel %vm1808, %v1757, 0
      %v1827 = vsel %vm1808, %v1759, 0
      %v1829 = vsel %vm1808, %v1761, 0
      %v1831 = vsel %vm1808, %v1763, 0
      %v1833 = vsel %vm1808, %v1765, 0
      %v1835 = vsel %vm1808, %v1767, 0
      %v1837 = vsel %vm1808, %v1769, 0
      %v1839 = vsel %vm1808, %v1771, 0
      %vm1841 = vcmask 1043456
      %v1843 = vsel %vm1841, %v1803, 0
      %1845 = vmatprep.subr.bf16.mxu0 0
      %1846 = vmatpush1.bf16.msra.mxu0 %v1799
      %1847 = vmatprep.subr.bf16.mxu0 0
      %1848 = vmatpush1.bf16.msra.mxu0 %v1800
      %1849 = vmatprep.subr.bf16.mxu0 0
      %1850 = vmatpush1.bf16.msra.mxu0 %v1801
      %1851 = vmatprep.subr.bf16.mxu0 0
      %1852 = vmatpush1.bf16.msra.mxu0 %v1802
      %1853 = vmatprep.subr.bf16.mxu0 0
      %1854 = vmatpush1.bf16.msra.mxu0 %v1843
      %1855 = vmatprep.subr.bf16.mxu0 0
      %1856 = vmatpush1.bf16.msra.mxu0 0
      %1857 = vmatprep.subr.bf16.mxu0 0
      %1858 = vmatpush1.bf16.msra.mxu0 0
      %1859 = vmatprep.subr.bf16.mxu0 0
      %1860 = vmatpush1.bf16.msra.mxu0 0
      %1861 = vmatprep.subr.bf16.mxu0 0
      %1862 = vmatpush1.bf16.msra.mxu0 0
      %1863 = vmatprep.subr.bf16.mxu0 0
      %1864 = vmatpush1.bf16.msra.mxu0 0
      %1865 = vmatprep.subr.bf16.mxu0 0
      %1866 = vmatpush1.bf16.msra.mxu0 0
      %1867 = vmatprep.subr.bf16.mxu0 0
      %1868 = vmatpush1.bf16.msra.mxu0 0
      %1869 = vmatprep.subr.bf16.mxu0 0
      %1870 = vmatpush1.bf16.msra.mxu0 0
      %1871 = vmatprep.subr.bf16.mxu0 0
      %1872 = vmatpush1.bf16.msra.mxu0 0
      %1873 = vmatprep.subr.bf16.mxu0 0
      %1874 = vmatpush1.bf16.msra.mxu0 0
      %1875 = vmatprep.subr.bf16.mxu0 0
      %1876 = vmatpush1.bf16.msra.mxu0 0
      %1877 = vmatprep.mubr.bf16.mxu0 0
      %1878 = vmatmul.mubr.bf16.gmra.mrb[0].mxu0 %v1809
      %v1879 = vpop.f32.mrb[0].mxu0
      %v1880 = vadd.f32 0.0, %v1879
      %v1881 = vpop.f32.mrb[0].mxu0
      %v1882 = vpop.f32.mrb[0].mxu0
      %v1883 = vadd.f32 0.0, %v1882
      %v1884 = vpop.f32.mrb[0].mxu0
      %1885 = vmatprep.mubr.bf16.mxu0 0
      %1886 = vmatmul.mubr.bf16.gmra.mrb[0].mxu0 %v1811
      %v1887 = vpop.f32.mrb[0].mxu0
      %v1888 = vadd.f32 0.0, %v1887
      %v1889 = vpop.f32.mrb[0].mxu0
      %v1890 = vpop.f32.mrb[0].mxu0
      %v1891 = vadd.f32 0.0, %v1890
      %v1892 = vpop.f32.mrb[0].mxu0
      %1893 = vmatprep.mubr.bf16.mxu0 0
      %1894 = vmatmul.mubr.bf16.gmra.mrb[0].mxu0 %v1813
      %v1895 = vpop.f32.mrb[0].mxu0
      %v1896 = vadd.f32 0.0, %v1895
      %v1897 = vpop.f32.mrb[0].mxu0
      %v1898 = vpop.f32.mrb[0].mxu0
      %v1899 = vadd.f32 0.0, %v1898
      %v1900 = vpop.f32.mrb[0].mxu0
      %1901 = vmatprep.mubr.bf16.mxu0 0
      %1902 = vmatmul.mubr.bf16.gmra.mrb[0].mxu0 %v1815
      %v1903 = vpop.f32.mrb[0].mxu0
      %v1904 = vadd.f32 0.0, %v1903
      %v1905 = vpop.f32.mrb[0].mxu0
      %v1906 = vpop.f32.mrb[0].mxu0
      %v1907 = vadd.f32 0.0, %v1906
      %v1908 = vpop.f32.mrb[0].mxu0
      %1909 = vmatprep.mubr.bf16.mxu0 0
      %1910 = vmatmul.mubr.bf16.gmra.mrb[0].mxu0 %v1817
      %v1911 = vpop.f32.mrb[0].mxu0
      %v1912 = vadd.f32 0.0, %v1911
      %v1913 = vpop.f32.mrb[0].mxu0
      %v1914 = vpop.f32.mrb[0].mxu0
      %v1915 = vadd.f32 0.0, %v1914
      %v1916 = vpop.f32.mrb[0].mxu0
      %1917 = vmatprep.mubr.bf16.mxu0 0
      %1918 = vmatmul.mubr.bf16.gmra.mrb[0].mxu0 %v1819
      %v1919 = vpop.f32.mrb[0].mxu0
      %v1920 = vadd.f32 0.0, %v1919
      %v1921 = vpop.f32.mrb[0].mxu0
      %v1922 = vpop.f32.mrb[0].mxu0
      %v1923 = vadd.f32 0.0, %v1922
      %v1924 = vpop.f32.mrb[0].mxu0
      %1925 = vmatprep.mubr.bf16.mxu0 0
      %1926 = vmatmul.mubr.bf16.gmra.mrb[0].mxu0 %v1821
      %v1927 = vpop.f32.mrb[0].mxu0
      %v1928 = vadd.f32 0.0, %v1927
      %v1929 = vpop.f32.mrb[0].mxu0
      %v1930 = vpop.f32.mrb[0].mxu0
      %v1931 = vadd.f32 0.0, %v1930
      %v1932 = vpop.f32.mrb[0].mxu0
      %1933 = vmatprep.mubr.bf16.mxu0 0
      %1934 = vmatmul.mubr.bf16.gmra.mrb[0].mxu0 %v1823
      %v1935 = vpop.f32.mrb[0].mxu0
      %v1936 = vadd.f32 0.0, %v1935
      %v1937 = vpop.f32.mrb[0].mxu0
      %v1938 = vpop.f32.mrb[0].mxu0
      %v1939 = vadd.f32 0.0, %v1938
      %v1940 = vpop.f32.mrb[0].mxu0
      %1941 = vmatprep.mubr.bf16.mxu0 0
      %1942 = vmatmul.mubr.bf16.gmra.mrb[0].mxu0 %v1825
      %v1943 = vpop.f32.mrb[0].mxu0
      %v1944 = vadd.f32 0.0, %v1943
      %v1945 = vpop.f32.mrb[0].mxu0
      %v1946 = vpop.f32.mrb[0].mxu0
      %v1947 = vadd.f32 0.0, %v1946
      %v1948 = vpop.f32.mrb[0].mxu0
      %1949 = vmatprep.mubr.bf16.mxu0 0
      %1950 = vmatmul.mubr.bf16.gmra.mrb[0].mxu0 %v1827
      %v1951 = vpop.f32.mrb[0].mxu0
      %v1952 = vadd.f32 0.0, %v1951
      %v1953 = vpop.f32.mrb[0].mxu0
      %v1954 = vpop.f32.mrb[0].mxu0
      %v1955 = vadd.f32 0.0, %v1954
      %v1956 = vpop.f32.mrb[0].mxu0
      %1957 = vmatprep.mubr.bf16.mxu0 0
      %1958 = vmatmul.mubr.bf16.gmra.mrb[0].mxu0 %v1829
      %v1959 = vpop.f32.mrb[0].mxu0
      %v1960 = vadd.f32 0.0, %v1959
      %v1961 = vpop.f32.mrb[0].mxu0
      %v1962 = vpop.f32.mrb[0].mxu0
      %v1963 = vadd.f32 0.0, %v1962
      %v1964 = vpop.f32.mrb[0].mxu0
      %1965 = vmatprep.mubr.bf16.mxu0 0
      %1966 = vmatmul.mubr.bf16.gmra.mrb[0].mxu0 %v1831
      %v1967 = vpop.f32.mrb[0].mxu0
      %v1968 = vadd.f32 0.0, %v1967
      %v1969 = vpop.f32.mrb[0].mxu0
      %v1970 = vpop.f32.mrb[0].mxu0
      %v1971 = vadd.f32 0.0, %v1970
      %v1972 = vpop.f32.mrb[0].mxu0
      %1973 = vmatprep.mubr.bf16.mxu0 0
      %1974 = vmatmul.mubr.bf16.gmra.mrb[0].mxu0 %v1833
      %v1975 = vpop.f32.mrb[0].mxu0
      %v1976 = vadd.f32 0.0, %v1975
      %v1977 = vpop.f32.mrb[0].mxu0
      %v1978 = vpop.f32.mrb[0].mxu0
      %v1979 = vadd.f32 0.0, %v1978
      %v1980 = vpop.f32.mrb[0].mxu0
      %1981 = vmatprep.mubr.bf16.mxu0 0
      %1982 = vmatmul.mubr.bf16.gmra.mrb[0].mxu0 %v1835
      %v1983 = vpop.f32.mrb[0].mxu0
      %v1984 = vadd.f32 0.0, %v1983
      %v1985 = vpop.f32.mrb[0].mxu0
      %v1986 = vpop.f32.mrb[0].mxu0
      %v1987 = vadd.f32 0.0, %v1986
      %v1988 = vpop.f32.mrb[0].mxu0
      %1989 = vmatprep.mubr.bf16.mxu0 0
      %1990 = vmatmul.mubr.bf16.gmra.mrb[0].mxu0 %v1837
      %v1991 = vpop.f32.mrb[0].mxu0
      %v1992 = vadd.f32 0.0, %v1991
      %v1993 = vpop.f32.mrb[0].mxu0
      %v1994 = vpop.f32.mrb[0].mxu0
      %v1995 = vadd.f32 0.0, %v1994
      %v1996 = vpop.f32.mrb[0].mxu0
      %1997 = vmatprep.mubr.bf16.mxu0 0
      %1998 = vmatmul.mubr.bf16.gmra.mrb[0].mxu0 %v1839
      %v1999 = vpop.f32.mrb[0].mxu0
      %v2000 = vadd.f32 0.0, %v1999
      %v2001 = vpop.f32.mrb[0].mxu0
      %v2002 = vpop.f32.mrb[0].mxu0
      %v2003 = vadd.f32 0.0, %v2002
      %v2004 = vpop.f32.mrb[0].mxu0
      %2005 = vdwg.mxu0
      %v2006 = vpack.c.bf16 %v1883, %v1880
      %v2007 = vpack.c.bf16 %v1891, %v1888
      %v2008 = vpack.c.bf16 %v1899, %v1896
      %v2009 = vpack.c.bf16 %v1907, %v1904
      %v2010 = vpack.c.bf16 %v1915, %v1912
      %v2011 = vpack.c.bf16 %v1923, %v1920
      %v2012 = vpack.c.bf16 %v1931, %v1928
      %v2013 = vpack.c.bf16 %v1939, %v1936
      %v2014 = vpack.c.bf16 %v1947, %v1944
      %v2015 = vpack.c.bf16 %v1955, %v1952
      %v2016 = vpack.c.bf16 %v1963, %v1960
      %v2017 = vpack.c.bf16 %v1971, %v1968
      %v2018 = vpack.c.bf16 %v1979, %v1976
      %v2019 = vpack.c.bf16 %v1987, %v1984
      %v2020 = vpack.c.bf16 %v1995, %v1992
      %v2021 = vpack.c.bf16 %v2003, %v2000
      %v2038 = vunpack.c.l.b16 %v2006
      %v2039 = vunpack.c.h.b16 %v2006
      %v2040 = vunpack.c.l.b16 %v2007
      %v2041 = vunpack.c.h.b16 %v2007
      %v2042 = vunpack.c.l.b16 %v2008
      %v2043 = vunpack.c.h.b16 %v2008
      %v2044 = vunpack.c.l.b16 %v2009
      %v2045 = vunpack.c.h.b16 %v2009
      %v2046 = vunpack.c.l.b16 %v2010
      %v2047 = vunpack.c.h.b16 %v2010
      %v2048 = vunpack.c.l.b16 %v2011
      %v2049 = vunpack.c.h.b16 %v2011
      %v2050 = vunpack.c.l.b16 %v2012
      %v2051 = vunpack.c.h.b16 %v2012
      %v2052 = vunpack.c.l.b16 %v2013
      %v2053 = vunpack.c.h.b16 %v2013
      %v2054 = vunpack.c.l.b16 %v2014
      %v2055 = vunpack.c.h.b16 %v2014
      %v2056 = vunpack.c.l.b16 %v2015
      %v2057 = vunpack.c.h.b16 %v2015
      %v2058 = vunpack.c.l.b16 %v2016
      %v2059 = vunpack.c.h.b16 %v2016
      %v2060 = vunpack.c.l.b16 %v2017
      %v2061 = vunpack.c.h.b16 %v2017
      %v2062 = vunpack.c.l.b16 %v2018
      %v2063 = vunpack.c.h.b16 %v2018
      %v2064 = vunpack.c.l.b16 %v2019
      %v2065 = vunpack.c.h.b16 %v2019
      %v2066 = vunpack.c.l.b16 %v2020
      %v2067 = vunpack.c.h.b16 %v2020
      %v2068 = vunpack.c.l.b16 %v2021
      %v2069 = vunpack.c.h.b16 %v2021
      %v2070 = vpack.c.b16 %v2038, %v2038
      %v2071 = vpack.c.b16 %v2039, %v2039
      %v2072 = vpack.c.b16 %v2040, %v2040
      %v2073 = vpack.c.b16 %v2041, %v2041
      %v2074 = vpack.c.b16 %v2042, %v2042
      %v2075 = vpack.c.b16 %v2043, %v2043
      %v2076 = vpack.c.b16 %v2044, %v2044
      %v2077 = vpack.c.b16 %v2045, %v2045
      %v2078 = vpack.c.b16 %v2046, %v2046
      %v2079 = vpack.c.b16 %v2047, %v2047
      %v2080 = vpack.c.b16 %v2048, %v2048
      %v2081 = vpack.c.b16 %v2049, %v2049
      %v2082 = vpack.c.b16 %v2050, %v2050
      %v2083 = vpack.c.b16 %v2051, %v2051
      %v2084 = vpack.c.b16 %v2052, %v2052
      %v2085 = vpack.c.b16 %v2053, %v2053
      %v2086 = vpack.c.b16 %v2054, %v2054
      %v2087 = vpack.c.b16 %v2055, %v2055
      %v2088 = vpack.c.b16 %v2056, %v2056
      %v2089 = vpack.c.b16 %v2057, %v2057
      %v2090 = vpack.c.b16 %v2058, %v2058
      %v2091 = vpack.c.b16 %v2059, %v2059
      %v2092 = vpack.c.b16 %v2060, %v2060
      %v2093 = vpack.c.b16 %v2061, %v2061
      %v2094 = vpack.c.b16 %v2062, %v2062
      %v2095 = vpack.c.b16 %v2063, %v2063
      %v2096 = vpack.c.b16 %v2064, %v2064
      %v2097 = vpack.c.b16 %v2065, %v2065
      %v2098 = vpack.c.b16 %v2066, %v2066
      %v2099 = vpack.c.b16 %v2067, %v2067
      %v2100 = vpack.c.b16 %v2068, %v2068
      %v2101 = vpack.c.b16 %v2069, %v2069
      %vm2134 = vcmask 60416
      %2135 = vst.msk [vmem:[%s258] sm:$0xf] %vm2134, %v2070
      %2136 = vst.msk [vmem:[%s258 + $0x4] sm:$0xf] %vm2134, %v2071
      %2137 = vst.msk [vmem:[%s258 + $0x8] sm:$0xf] %vm2134, %v2072
      %2138 = vst.msk [vmem:[%s258 + $0xc] sm:$0xf] %vm2134, %v2073
      %2139 = vst.msk [vmem:[%s258 + $0x10] sm:$0xf] %vm2134, %v2074
      %2140 = vst.msk [vmem:[%s258 + $0x14] sm:$0xf] %vm2134, %v2075
      %2141 = vst.msk [vmem:[%s258 + $0x18] sm:$0xf] %vm2134, %v2076
      %2142 = vst.msk [vmem:[%s258 + $0x1c] sm:$0xf] %vm2134, %v2077
      %2143 = vst.msk [vmem:[%s258 + $0x20] sm:$0xf] %vm2134, %v2078
      %2144 = vst.msk [vmem:[%s258 + $0x24] sm:$0xf] %vm2134, %v2079
      %2145 = vst.msk [vmem:[%s258 + $0x28] sm:$0xf] %vm2134, %v2080
      %2146 = vst.msk [vmem:[%s258 + $0x2c] sm:$0xf] %vm2134, %v2081
      %2147 = vst.msk [vmem:[%s258 + $0x30] sm:$0xf] %vm2134, %v2082
      %2148 = vst.msk [vmem:[%s258 + $0x34] sm:$0xf] %vm2134, %v2083
      %2149 = vst.msk [vmem:[%s258 + $0x38] sm:$0xf] %vm2134, %v2084
      %2150 = vst.msk [vmem:[%s258 + $0x3c] sm:$0xf] %vm2134, %v2085
      %2151 = vst.msk [vmem:[%s258 + $0x40] sm:$0xf] %vm2134, %v2086
      %2152 = vst.msk [vmem:[%s258 + $0x44] sm:$0xf] %vm2134, %v2087
      %2153 = vst.msk [vmem:[%s258 + $0x48] sm:$0xf] %vm2134, %v2088
      %2154 = vst.msk [vmem:[%s258 + $0x4c] sm:$0xf] %vm2134, %v2089
      %2155 = vst.msk [vmem:[%s258 + $0x50] sm:$0xf] %vm2134, %v2090
      %2156 = vst.msk [vmem:[%s258 + $0x54] sm:$0xf] %vm2134, %v2091
      %2157 = vst.msk [vmem:[%s258 + $0x58] sm:$0xf] %vm2134, %v2092
      %2158 = vst.msk [vmem:[%s258 + $0x5c] sm:$0xf] %vm2134, %v2093
      %2159 = vst.msk [vmem:[%s258 + $0x60] sm:$0xf] %vm2134, %v2094
      %2160 = vst.msk [vmem:[%s258 + $0x64] sm:$0xf] %vm2134, %v2095
      %2161 = vst.msk [vmem:[%s258 + $0x68] sm:$0xf] %vm2134, %v2096
      %2162 = vst.msk [vmem:[%s258 + $0x6c] sm:$0xf] %vm2134, %v2097
      %2163 = vst.msk [vmem:[%s258 + $0x70] sm:$0xf] %vm2134, %v2098
      %2164 = vst.msk [vmem:[%s258 + $0x74] sm:$0xf] %vm2134, %v2099
      %2165 = vst.msk [vmem:[%s258 + $0x78] sm:$0xf] %vm2134, %v2100
      %2166 = vst.msk [vmem:[%s258 + $0x7c] sm:$0xf] %vm2134, %v2101
      %v2167 = vsel %vm1508, %v1880, 0.0
      %v2168 = vsel %vm1508, %v1883, 0.0
      %v2169 = vadd.f32 %v2167, %v2168
      %v2170 = vsel %vm1508, %v1888, 0.0
      %v2171 = vadd.f32 %v2169, %v2170
      %v2172 = vsel %vm1508, %v1891, 0.0
      %v2173 = vadd.f32 %v2171, %v2172
      %v2174 = vsel %vm1508, %v1896, 0.0
      %v2175 = vadd.f32 %v2173, %v2174
      %v2176 = vsel %vm1508, %v1899, 0.0
      %v2177 = vadd.f32 %v2175, %v2176
      %v2178 = vsel %vm1508, %v1904, 0.0
      %v2179 = vadd.f32 %v2177, %v2178
      %v2180 = vsel %vm1508, %v1907, 0.0
      %v2181 = vadd.f32 %v2179, %v2180
      %v2182 = vsel %vm1508, %v1912, 0.0
      %v2183 = vadd.f32 %v2181, %v2182
      %v2184 = vsel %vm1508, %v1915, 0.0
      %v2185 = vadd.f32 %v2183, %v2184
      %v2186 = vsel %vm1508, %v1920, 0.0
      %v2187 = vadd.f32 %v2185, %v2186
      %v2188 = vsel %vm1508, %v1923, 0.0
      %v2189 = vadd.f32 %v2187, %v2188
      %v2190 = vsel %vm1508, %v1928, 0.0
      %v2191 = vadd.f32 %v2189, %v2190
      %v2192 = vsel %vm1508, %v1931, 0.0
      %v2193 = vadd.f32 %v2191, %v2192
      %v2194 = vsel %vm1508, %v1936, 0.0
      %v2195 = vadd.f32 %v2193, %v2194
      %v2196 = vsel %vm1508, %v1939, 0.0
      %v2197 = vadd.f32 %v2195, %v2196
      %v2198 = vsel %vm1508, %v1944, 0.0
      %v2199 = vadd.f32 %v2197, %v2198
      %v2200 = vsel %vm1508, %v1947, 0.0
      %v2201 = vadd.f32 %v2199, %v2200
      %v2202 = vsel %vm1508, %v1952, 0.0
      %v2203 = vadd.f32 %v2201, %v2202
      %v2204 = vsel %vm1508, %v1955, 0.0
      %v2205 = vadd.f32 %v2203, %v2204
      %v2206 = vsel %vm1508, %v1960, 0.0
      %v2207 = vadd.f32 %v2205, %v2206
      %v2208 = vsel %vm1508, %v1963, 0.0
      %v2209 = vadd.f32 %v2207, %v2208
      %v2210 = vsel %vm1508, %v1968, 0.0
      %v2211 = vadd.f32 %v2209, %v2210
      %v2212 = vsel %vm1508, %v1971, 0.0
      %v2213 = vadd.f32 %v2211, %v2212
      %v2214 = vsel %vm1508, %v1976, 0.0
      %v2215 = vadd.f32 %v2213, %v2214
      %v2216 = vsel %vm1508, %v1979, 0.0
      %v2217 = vadd.f32 %v2215, %v2216
      %v2218 = vsel %vm1508, %v1984, 0.0
      %v2219 = vadd.f32 %v2217, %v2218
      %v2220 = vsel %vm1508, %v1987, 0.0
      %v2221 = vadd.f32 %v2219, %v2220
      %v2222 = vsel %vm1508, %v1992, 0.0
      %v2223 = vadd.f32 %v2221, %v2222
      %v2224 = vsel %vm1508, %v1995, 0.0
      %v2225 = vadd.f32 %v2223, %v2224
      %v2226 = vsel %vm1508, %v2000, 0.0
      %v2227 = vadd.f32 %v2225, %v2226
      %v2228 = vsel %vm1508, %v2003, 0.0
      %v2229 = vadd.f32 %v2227, %v2228
      %v2230 = vrot.slane %v2229, 4
      %v2231 = vadd.f32 %v2229, %v2230
      %v2232 = vrot.slane %v2231, 2
      %v2233 = vadd.f32 %v2231, %v2232
      %v2234 = vrot.slane %v2233, 1
      %v2235 = vadd.f32 %v2233, %v2234
      %v2236 = vmul.f32 %v1880, %v1880
      %v2237 = vmul.f32 %v1883, %v1883
      %v2238 = vmul.f32 %v1888, %v1888
      %v2239 = vmul.f32 %v1891, %v1891
      %v2240 = vmul.f32 %v1896, %v1896
      %v2241 = vmul.f32 %v1899, %v1899
      %v2242 = vmul.f32 %v1904, %v1904
      %v2243 = vmul.f32 %v1907, %v1907
      %v2244 = vmul.f32 %v1912, %v1912
      %v2245 = vmul.f32 %v1915, %v1915
      %v2246 = vmul.f32 %v1920, %v1920
      %v2247 = vmul.f32 %v1923, %v1923
      %v2248 = vmul.f32 %v1928, %v1928
      %v2249 = vmul.f32 %v1931, %v1931
      %v2250 = vmul.f32 %v1936, %v1936
      %v2251 = vmul.f32 %v1939, %v1939
      %v2252 = vmul.f32 %v1944, %v1944
      %v2253 = vmul.f32 %v1947, %v1947
      %v2254 = vmul.f32 %v1952, %v1952
      %v2255 = vmul.f32 %v1955, %v1955
      %v2256 = vmul.f32 %v1960, %v1960
      %v2257 = vmul.f32 %v1963, %v1963
      %v2258 = vmul.f32 %v1968, %v1968
      %v2259 = vmul.f32 %v1971, %v1971
      %v2260 = vmul.f32 %v1976, %v1976
      %v2261 = vmul.f32 %v1979, %v1979
      %v2262 = vmul.f32 %v1984, %v1984
      %v2263 = vmul.f32 %v1987, %v1987
      %v2264 = vmul.f32 %v1992, %v1992
      %v2265 = vmul.f32 %v1995, %v1995
      %v2266 = vmul.f32 %v2000, %v2000
      %v2267 = vmul.f32 %v2003, %v2003
      %v2268 = vsel %vm1508, %v2236, 0.0
      %v2269 = vsel %vm1508, %v2237, 0.0
      %v2270 = vadd.f32 %v2268, %v2269
      %v2271 = vsel %vm1508, %v2238, 0.0
      %v2272 = vadd.f32 %v2270, %v2271
      %v2273 = vsel %vm1508, %v2239, 0.0
      %v2274 = vadd.f32 %v2272, %v2273
      %v2275 = vsel %vm1508, %v2240, 0.0
      %v2276 = vadd.f32 %v2274, %v2275
      %v2277 = vsel %vm1508, %v2241, 0.0
      %v2278 = vadd.f32 %v2276, %v2277
      %v2279 = vsel %vm1508, %v2242, 0.0
      %v2280 = vadd.f32 %v2278, %v2279
      %v2281 = vsel %vm1508, %v2243, 0.0
      %v2282 = vadd.f32 %v2280, %v2281
      %v2283 = vsel %vm1508, %v2244, 0.0
      %v2284 = vadd.f32 %v2282, %v2283
      %v2285 = vsel %vm1508, %v2245, 0.0
      %v2286 = vadd.f32 %v2284, %v2285
      %v2287 = vsel %vm1508, %v2246, 0.0
      %v2288 = vadd.f32 %v2286, %v2287
      %v2289 = vsel %vm1508, %v2247, 0.0
      %v2290 = vadd.f32 %v2288, %v2289
      %v2291 = vsel %vm1508, %v2248, 0.0
      %v2292 = vadd.f32 %v2290, %v2291
      %v2293 = vsel %vm1508, %v2249, 0.0
      %v2294 = vadd.f32 %v2292, %v2293
      %v2295 = vsel %vm1508, %v2250, 0.0
      %v2296 = vadd.f32 %v2294, %v2295
      %v2297 = vsel %vm1508, %v2251, 0.0
      %v2298 = vadd.f32 %v2296, %v2297
      %v2299 = vsel %vm1508, %v2252, 0.0
      %v2300 = vadd.f32 %v2298, %v2299
      %v2301 = vsel %vm1508, %v2253, 0.0
      %v2302 = vadd.f32 %v2300, %v2301
      %v2303 = vsel %vm1508, %v2254, 0.0
      %v2304 = vadd.f32 %v2302, %v2303
      %v2305 = vsel %vm1508, %v2255, 0.0
      %v2306 = vadd.f32 %v2304, %v2305
      %v2307 = vsel %vm1508, %v2256, 0.0
      %v2308 = vadd.f32 %v2306, %v2307
      %v2309 = vsel %vm1508, %v2257, 0.0
      %v2310 = vadd.f32 %v2308, %v2309
      %v2311 = vsel %vm1508, %v2258, 0.0
      %v2312 = vadd.f32 %v2310, %v2311
      %v2313 = vsel %vm1508, %v2259, 0.0
      %v2314 = vadd.f32 %v2312, %v2313
      %v2315 = vsel %vm1508, %v2260, 0.0
      %v2316 = vadd.f32 %v2314, %v2315
      %v2317 = vsel %vm1508, %v2261, 0.0
      %v2318 = vadd.f32 %v2316, %v2317
      %v2319 = vsel %vm1508, %v2262, 0.0
      %v2320 = vadd.f32 %v2318, %v2319
      %v2321 = vsel %vm1508, %v2263, 0.0
      %v2322 = vadd.f32 %v2320, %v2321
      %v2323 = vsel %vm1508, %v2264, 0.0
      %v2324 = vadd.f32 %v2322, %v2323
      %v2325 = vsel %vm1508, %v2265, 0.0
      %v2326 = vadd.f32 %v2324, %v2325
      %v2327 = vsel %vm1508, %v2266, 0.0
      %v2328 = vadd.f32 %v2326, %v2327
      %v2329 = vsel %vm1508, %v2267, 0.0
      %v2330 = vadd.f32 %v2328, %v2329
      %v2331 = vrot.slane %v2330, 4
      %v2332 = vadd.f32 %v2330, %v2331
      %v2333 = vrot.slane %v2332, 2
      %v2334 = vadd.f32 %v2332, %v2333
      %v2335 = vrot.slane %v2334, 1
      %v2336 = vadd.f32 %v2334, %v2335
      %vm2337 = vcmask 1040384
      %v2338 = vsel %vm2337, %v2235, %v2336
      %vm2339 = vcmask 58368
      %2340 = vst.msk [vmem:[%s266] sm:$0x3] %vm2339, %v2338
      %s2341 = smul.u32 32, %s22
      %p2342 = scmp.lt.s32.totalorder %s21, 1
      %s2343 = scalar_select %p2342, %s21, 1
      %p2344 = scmp.lt.s32.totalorder %s2341, 31
      %s2345 = scalar_select %p2344, %s2341, 31
      %s2346 = smul.addr %s2343, 32
      %s2347 = sadd.s32 %s2345, %s2346
      %s2348 = smul.addr %s2347, 4
      %s2349 = scalar_lea.vmem %s4, %s2348
      %p2350 = scmp.lt.s32.totalorder %s21, 1
      %s2351 = scalar_select %p2350, %s21, 1
      %p2352 = scmp.lt.s32.totalorder %s22, 0
      %s2353 = scalar_select %p2352, %s22, 0
      %s2354 = sadd.s32 %s2353, %s2351
      %s2355 = smul.addr %s2354, 2
      %s2356 = scalar_lea.vmem %s5, %s2355
      // Predicated region
      $region37: #{resblock_forward.4} parent=35 // pred_check
        %p2357 = pneg %p138
      $region38: #{resblock_forward.4} parent=35 // pred_check_branch
        %2359 = sbr.rel (%p2357) target = $region40
      $region39: #{resblock_forward.4} parent=35 // pred_region
        %s2360 = smul.u32 32, %s22
      $region40: #{resblock_forward.4} parent=35 // pred_fallthru
        _
      // Predicated region
      $region41: #{resblock_forward.4} parent=35 // pred_check
        %p2361 = pneg %p166
      $region42: #{resblock_forward.4} parent=35 // pred_check_branch
        %2363 = sbr.rel (%p2361) target = $region44
      $region43: #{resblock_forward.4} parent=35 // pred_region
        _
      $region44: #{resblock_forward.4} parent=35 // pred_fallthru
        _
    $region36: #{resblock_forward.4} parent=5 // pred_fallthru
      _
    %p2364 = scmp.le.s32.totalorder 2, %s12
    // Predicated region
    $region45: #{resblock_forward.4} parent=5 // pred_check
      %p2365 = pneg %p2364
    $region46: #{resblock_forward.4} parent=5 // pred_check_branch
      %2367 = sbr.rel (%p2365) target = $region48
    $region47: #{resblock_forward.4} parent=5 // pred_region
      %s2368 = ssub.s32 %s12, 2
      // Predicated region
      $region49: #{resblock_forward.4} parent=47 // pred_check
        %p2369 = pneg %p144
      $region50: #{resblock_forward.4} parent=47 // pred_check_branch
        %2371 = sbr.rel (%p2369) target = $region52
      $region51: #{resblock_forward.4} parent=47 // pred_region
        %s2372 = smul.u32 32, %s24
        %p2373 = scmp.lt.s32.totalorder %s23, 1
        %s2374 = scalar_select %p2373, %s23, 1
        %p2375 = scmp.lt.s32.totalorder %s2372, 31
        %s2376 = scalar_select %p2375, %s2372, 31
        %s2377 = smul.addr %s2374, 32
        %s2378 = sadd.s32 %s2376, %s2377
        %s2379 = smul.addr %s2378, 4
        %s2380 = scalar_lea.vmem %s4, %s2379
      $region52: #{resblock_forward.4} parent=47 // pred_fallthru
        _
      // Predicated region
      $region53: #{resblock_forward.4} parent=47 // pred_check
        %p2381 = pneg %p172
      $region54: #{resblock_forward.4} parent=47 // pred_check_branch
        %2383 = sbr.rel (%p2381) target = $region56
      $region55: #{resblock_forward.4} parent=47 // pred_region
        %p2384 = scmp.lt.s32.totalorder %s23, 1
        %s2385 = scalar_select %p2384, %s23, 1
        %p2386 = scmp.lt.s32.totalorder %s24, 0
        %s2387 = scalar_select %p2386, %s24, 0
        %s2388 = sadd.s32 %s2387, %s2385
        %s2389 = smul.addr %s2388, 2
        %s2390 = scalar_lea.vmem %s5, %s2389
      $region56: #{resblock_forward.4} parent=47 // pred_fallthru
        _
    $region48: #{resblock_forward.4} parent=5 // pred_fallthru
      _
  $region6: #{resblock_forward.4} parent=0 // loop_footer
    %s16 = sadd.s32 1, %s12
  $region7: #{resblock_forward.4} parent=0 // loop_footer_branch
    %11 = sbr.rel target = $region3
  $region8: #{resblock_forward.4} parent=0 // loop_exit
    _

// kernel: resblock_forward.3
$region0: #{resblock_forward.3}
  #allocation0 [shape = 'u32[]', space=smem, size = 0x4, offset = 0x4, fixed_abs, tag = 'smem constant byte address 0x4 - core index']
  #allocation1 [shape = 'u32[144,128]{1,0:T(1,128)}', space=vmem, size = 0x12000, scoped, tag = 'internal scratch']
  %s0 = inlined_call_operand.vmem [shape: bf16[2,18,18,8], index: 0, kind: input, shape index: {}]
  %s1 = inlined_call_operand.vmem [shape: f32[1,8], index: 1, kind: input, shape index: {}]
  %s2 = inlined_call_operand.vmem [shape: f32[1,8], index: 2, kind: input, shape index: {}]
  %s3 = inlined_call_operand.vmem [shape: bf16[72,8], index: 3, kind: input, shape index: {}]
  %s4 = inlined_call_operand.vmem [shape: bf16[2,256,8], index: 4, kind: output, shape index: {0}]
  %s5 = inlined_call_operand.vmem [shape: f32[2,1,2,8], index: 5, kind: output, shape index: {1}]
  %6 = xla_tuple %s4, %s5
  %s7 = sld [smem:[#allocation0]]
  $region57: #{resblock_forward.3} parent=0
    _
  %s9 = ssub.s32 1, %s7
  %s10 = scalar_select 0, %s9, %s7
  loop: start=0, step=1, limit=4
  $region2: #{resblock_forward.3} parent=0 // loop_pre_header
    _
  $region3: #{resblock_forward.3} parent=0 // loop_header
    %s12 = sphi 0, %s16
    %p13 = scmp.ge.s32.totalorder %s12, 4
    %s19 = sphi 0, %s31
    %s20 = sphi 0, %s27
    %s21 = sphi 0, %s19
    %s22 = sphi 0, %s20
    %s23 = sphi 0, %s21
    %s24 = sphi 0, %s22
    %s34 = sphi 0, %s36
    %s37 = sphi 0, %s34
    %s38 = sphi 0, %s37
    %s54 = sphi 0, %s38
    %s58 = sphi 0, %s58
    %s60 = sphi 0, %s58
    %s61 = sphi 0, %s60
    %s75 = sphi 0, %s61
    %s79 = sphi 0, %s79
    %s81 = sphi 0, %s79
    %s82 = sphi 0, %s81
    %s96 = sphi 0, %s82
    %s100 = sphi 0, %s100
    %s102 = sphi 0, %s100
    %s103 = sphi 0, %s102
    %s117 = sphi 0, %s103
    %s125 = sphi 0, %s127
    %s128 = sphi 0, %s125
    %s129 = sphi 0, %s128
    %s145 = sphi 0, %s129
    %s153 = sphi 0, %s155
    %s156 = sphi 0, %s153
    %s157 = sphi 0, %s156
    %s173 = sphi 0, %s157
  $region4: #{resblock_forward.3} parent=0 // loop_header_branch
    %15 = sbr.rel (%p13) target = $region8
  $region5: #{resblock_forward.3} parent=0 // loop_body
    %s17 = ssub.s32 %s12, 1
    %s18 = ssub.s32 %s12, 2
    %s25 = sadd.s32 1, %s20
    %p26 = scmp.ge.s32.totalorder %s25, 1
    %s27 = scalar_select %p26, 0, %s25
    %s28 = sadd.s32 1, %s19
    %s29 = scalar_select %p26, %s28, %s19
    %p30 = scmp.ge.s32.totalorder %s29, 2
    %s31 = scalar_select %p30, 0, %s29
    %s32 = ssub.s32 %s19, %s31
    %p33 = scmp.eq.s32.totalorder %s32, 0
    %s35 = sadd.s32 %s34, 1
    %s36 = scalar_select %p33, %s34, %s35
    %p39 = pneg %p33
    %p40 = scmp.eq.s32.totalorder %s12, 1
    %p41 = por %p39, %p40
    %p42 = scmp.ne.s32.totalorder %s34, %s37
    %p43 = scmp.eq.s32.totalorder %s12, 0
    %p44 = por %p42, %p43
    %p45 = scmp.ne.s32.totalorder %s34, %s37
    %p46 = scmp.eq.s32.totalorder %s17, 1
    %p47 = por %p45, %p46
    %p48 = scmp.ne.s32.totalorder %s37, %s38
    %p49 = scmp.eq.s32.totalorder %s17, 0
    %p50 = por %p48, %p49
    %p51 = scmp.ne.s32.totalorder %s37, %s38
    %p52 = scmp.eq.s32.totalorder %s18, 1
    %p53 = por %p51, %p52
    %p55 = scmp.ne.s32.totalorder %s38, %s54
    %p56 = scmp.eq.s32.totalorder %s18, 0
    %p57 = por %p55, %p56
    %s59 = sadd.s32 %s58, 1
    %p62 = scmp.eq.s32.totalorder %s12, 1
    %p63 = scmp.ne.s32.totalorder %s58, %s60
    %p64 = scmp.eq.s32.totalorder %s12, 0
    %p65 = por %p63, %p64
    %p66 = scmp.ne.s32.totalorder %s58, %s60
    %p67 = scmp.eq.s32.totalorder %s17, 1
    %p68 = por %p66, %p67
    %p69 = scmp.ne.s32.totalorder %s60, %s61
    %p70 = scmp.eq.s32.totalorder %s17, 0
    %p71 = por %p69, %p70
    %p72 = scmp.ne.s32.totalorder %s60, %s61
    %p73 = scmp.eq.s32.totalorder %s18, 1
    %p74 = por %p72, %p73
    %p76 = scmp.ne.s32.totalorder %s61, %s75
    %p77 = scmp.eq.s32.totalorder %s18, 0
    %p78 = por %p76, %p77
    %s80 = sadd.s32 %s79, 1
    %p83 = scmp.eq.s32.totalorder %s12, 1
    %p84 = scmp.ne.s32.totalorder %s79, %s81
    %p85 = scmp.eq.s32.totalorder %s12, 0
    %p86 = por %p84, %p85
    %p87 = scmp.ne.s32.totalorder %s79, %s81
    %p88 = scmp.eq.s32.totalorder %s17, 1
    %p89 = por %p87, %p88
    %p90 = scmp.ne.s32.totalorder %s81, %s82
    %p91 = scmp.eq.s32.totalorder %s17, 0
    %p92 = por %p90, %p91
    %p93 = scmp.ne.s32.totalorder %s81, %s82
    %p94 = scmp.eq.s32.totalorder %s18, 1
    %p95 = por %p93, %p94
    %p97 = scmp.ne.s32.totalorder %s82, %s96
    %p98 = scmp.eq.s32.totalorder %s18, 0
    %p99 = por %p97, %p98
    %s101 = sadd.s32 %s100, 1
    %p104 = scmp.eq.s32.totalorder %s12, 1
    %p105 = scmp.ne.s32.totalorder %s100, %s102
    %p106 = scmp.eq.s32.totalorder %s12, 0
    %p107 = por %p105, %p106
    %p108 = scmp.ne.s32.totalorder %s100, %s102
    %p109 = scmp.eq.s32.totalorder %s17, 1
    %p110 = por %p108, %p109
    %p111 = scmp.ne.s32.totalorder %s102, %s103
    %p112 = scmp.eq.s32.totalorder %s17, 0
    %p113 = por %p111, %p112
    %p114 = scmp.ne.s32.totalorder %s102, %s103
    %p115 = scmp.eq.s32.totalorder %s18, 1
    %p116 = por %p114, %p115
    %p118 = scmp.ne.s32.totalorder %s103, %s117
    %p119 = scmp.eq.s32.totalorder %s18, 0
    %p120 = por %p118, %p119
    %s121 = ssub.s32 %s19, %s31
    %s122 = ssub.s32 %s20, %s27
    %s123 = sor.u32 %s121, %s122
    %p124 = scmp.eq.s32.totalorder %s123, 0
    %s126 = sadd.s32 %s125, 1
    %s127 = scalar_select %p124, %s125, %s126
    %p130 = pneg %p124
    %p131 = scmp.eq.s32.totalorder %s12, 1
    %p132 = por %p130, %p131
    %p133 = scmp.ne.s32.totalorder %s125, %s128
    %p134 = scmp.eq.s32.totalorder %s12, 0
    %p135 = por %p133, %p134
    %p136 = scmp.ne.s32.totalorder %s125, %s128
    %p137 = scmp.eq.s32.totalorder %s17, 1
    %p138 = por %p136, %p137
    %p139 = scmp.ne.s32.totalorder %s128, %s129
    %p140 = scmp.eq.s32.totalorder %s17, 0
    %p141 = por %p139, %p140
    %p142 = scmp.ne.s32.totalorder %s128, %s129
    %p143 = scmp.eq.s32.totalorder %s18, 1
    %p144 = por %p142, %p143
    %p146 = scmp.ne.s32.totalorder %s129, %s145
    %p147 = scmp.eq.s32.totalorder %s18, 0
    %p148 = por %p146, %p147
    %s149 = ssub.s32 %s19, %s31
    %s150 = ssub.s32 %s20, %s27
    %s151 = sor.u32 %s149, %s150
    %p152 = scmp.eq.s32.totalorder %s151, 0
    %s154 = sadd.s32 %s153, 1
    %s155 = scalar_select %p152, %s153, %s154
    %p158 = pneg %p152
    %p159 = scmp.eq.s32.totalorder %s12, 1
    %p160 = por %p158, %p159
    %p161 = scmp.ne.s32.totalorder %s153, %s156
    %p162 = scmp.eq.s32.totalorder %s12, 0
    %p163 = por %p161, %p162
    %p164 = scmp.ne.s32.totalorder %s153, %s156
    %p165 = scmp.eq.s32.totalorder %s17, 1
    %p166 = por %p164, %p165
    %p167 = scmp.ne.s32.totalorder %s156, %s157
    %p168 = scmp.eq.s32.totalorder %s17, 0
    %p169 = por %p167, %p168
    %p170 = scmp.ne.s32.totalorder %s156, %s157
    %p171 = scmp.eq.s32.totalorder %s18, 1
    %p172 = por %p170, %p171
    %p174 = scmp.ne.s32.totalorder %s157, %s173
    %p175 = scmp.eq.s32.totalorder %s18, 0
    %p176 = por %p174, %p175
    %p177 = scmp.le.s32.totalorder 1, %s12
    %p178 = scmp.lt.s32.totalorder %s12, 3
    %p179 = pnand %p177, %p178
    %p180 = pneg %p179
    // Predicated region
    $region9: #{resblock_forward.3} parent=5 // pred_check
      _
    $region10: #{resblock_forward.3} parent=5 // pred_check_branch
      %182 = sbr.rel (%p179) target = $region12
    $region11: #{resblock_forward.3} parent=5 // pred_region
      %s183 = ssub.s32 %s12, 1
      // Predicated region
      $region13: #{resblock_forward.3} parent=11 // pred_check
        %p184 = pneg %p71
      $region14: #{resblock_forward.3} parent=11 // pred_check_branch
        %186 = sbr.rel (%p184) target = $region16
      $region15: #{resblock_forward.3} parent=11 // pred_region
        _
      $region16: #{resblock_forward.3} parent=11 // pred_fallthru
        _
      // Predicated region
      $region17: #{resblock_forward.3} parent=11 // pred_check
        %p187 = pneg %p92
      $region18: #{resblock_forward.3} parent=11 // pred_check_branch
        %189 = sbr.rel (%p187) target = $region20
      $region19: #{resblock_forward.3} parent=11 // pred_region
        _
      $region20: #{resblock_forward.3} parent=11 // pred_fallthru
        _
      // Predicated region
      $region21: #{resblock_forward.3} parent=11 // pred_check
        %p190 = pneg %p113
      $region22: #{resblock_forward.3} parent=11 // pred_check_branch
        %192 = sbr.rel (%p190) target = $region24
      $region23: #{resblock_forward.3} parent=11 // pred_region
        _
      $region24: #{resblock_forward.3} parent=11 // pred_fallthru
        _
    $region12: #{resblock_forward.3} parent=5 // pred_fallthru
      _
    %p193 = scmp.lt.s32.totalorder %s12, 2
    // Predicated region
    $region25: #{resblock_forward.3} parent=5 // pred_check
      %p194 = pneg %p193
    $region26: #{resblock_forward.3} parent=5 // pred_check_branch
      %196 = sbr.rel (%p194) target = $region28
    $region27: #{resblock_forward.3} parent=5 // pred_region
      // Predicated region
      $region29: #{resblock_forward.3} parent=27 // pred_check
        %p197 = pneg %p44
      $region30: #{resblock_forward.3} parent=27 // pred_check_branch
        %199 = sbr.rel (%p197) target = $region32
      $region31: #{resblock_forward.3} parent=27 // pred_region
        %p200 = scmp.lt.s32.totalorder %s19, 1
        %s201 = scalar_select %p200, %s19, 1
        %s202 = smul.addr %s201, 54
        %s203 = smul.addr %s202, 4
        %s204 = scalar_lea.vmem %s0, %s203
      $region32: #{resblock_forward.3} parent=27 // pred_fallthru
        _
    $region28: #{resblock_forward.3} parent=5 // pred_fallthru
      _
    %p205 = scmp.le.s32.totalorder 1, %s12
    %p206 = scmp.lt.s32.totalorder %s12, 3
    %p207 = pnand %p205, %p206
    %p208 = pneg %p207
    // Predicated region
    $region33: #{resblock_forward.3} parent=5 // pred_check
      _
    $region34: #{resblock_forward.3} parent=5 // pred_check_branch
      %210 = sbr.rel (%p207) target = $region36
    $region35: #{resblock_forward.3} parent=5 // pred_region
      %s211 = ssub.s32 %s12, 1
      %p212 = scmp.lt.s32.totalorder %s21, 1
      %s213 = scalar_select %p212, %s21, 1
      %s214 = smul.addr %s213, 54
      %s215 = smul.addr %s214, 4
      %s216 = scalar_lea.vmem %s0, %s215
      %p217 = pneg %p50
      %p218 = pneg %p47
      %p219 = pneg %p71
      %p220 = pneg %p68
      %p221 = pneg %p92
      %p222 = pneg %p89
      %p223 = pneg %p113
      %p224 = pneg %p110
      %p225 = pneg %p141
      %p226 = pneg %p138
      %s227 = smul.u32 32, %s22
      %p228 = scmp.lt.s32.totalorder %s21, 1
      %s229 = scalar_select %p228, %s21, 1
      %p230 = scmp.lt.s32.totalorder %s227, 31
      %s231 = scalar_select %p230, %s227, 31
      %s232 = smul.addr %s229, 32
      %s233 = sadd.s32 %s231, %s232
      %s234 = smul.addr %s233, 4
      %s235 = scalar_lea.vmem %s4, %s234
      %p236 = pneg %p169
      %p237 = pneg %p166
      %p238 = scmp.lt.s32.totalorder %s21, 1
      %s239 = scalar_select %p238, %s21, 1
      %p240 = scmp.lt.s32.totalorder %s22, 0
      %s241 = scalar_select %p240, %s22, 0
      %s242 = sadd.s32 %s241, %s239
      %s243 = smul.addr %s242, 2
      %s244 = scalar_lea.vmem %s5, %s243
      %p245 = scmp.lt.s32.totalorder %s21, 1
      %s246 = scalar_select %p245, %s21, 1
      %s247 = smul.addr %s246, 54
      %s248 = smul.addr %s247, 4
      %s249 = scalar_lea.vmem %s0, %s248
      %s250 = smul.u32 32, %s22
      %p251 = scmp.lt.s32.totalorder %s21, 1
      %s252 = scalar_select %p251, %s21, 1
      %p253 = scmp.lt.s32.totalorder %s250, 31
      %s254 = scalar_select %p253, %s250, 31
      %s255 = smul.addr %s252, 32
      %s256 = sadd.s32 %s254, %s255
      %s257 = smul.addr %s256, 4
      %s258 = scalar_lea.vmem %s4, %s257
      %s259 = smul.u32 32, %s22
      %p260 = scmp.lt.s32.totalorder %s21, 1
      %s261 = scalar_select %p260, %s21, 1
      %p262 = scmp.lt.s32.totalorder %s22, 0
      %s263 = scalar_select %p262, %s22, 0
      %s264 = sadd.s32 %s263, %s261
      %s265 = smul.addr %s264, 2
      %s266 = scalar_lea.vmem %s5, %s265
      %s268 = smul.u32 %s22, 16
      %s269 = smul.u32 %s268, 3
      %s270 = smul.addr %s269, 4
      %s271 = scalar_lea.vmem %s249, %s270
      %v272 = vld [vmem:[%s271] sm:$0xf]
      %v273 = vld [vmem:[%s271 + $0x4] sm:$0xf]
      %v274 = vld [vmem:[%s271 + $0x8] sm:$0x1]
      %v275 = vld [vmem:[%s271 + $0xc] sm:$0xf]
      %v276 = vld [vmem:[%s271 + $0x10] sm:$0xf]
      %v277 = vld [vmem:[%s271 + $0x14] sm:$0x1]
      %v278 = vld [vmem:[%s271 + $0x18] sm:$0xf]
      %v279 = vld [vmem:[%s271 + $0x1c] sm:$0xf]
      %v280 = vld [vmem:[%s271 + $0x20] sm:$0x1]
      %v281 = vld [vmem:[%s271 + $0x24] sm:$0xf]
      %v282 = vld [vmem:[%s271 + $0x28] sm:$0xf]
      %v283 = vld [vmem:[%s271 + $0x2c] sm:$0x1]
      %v284 = vld [vmem:[%s271 + $0x30] sm:$0xf]
      %v285 = vld [vmem:[%s271 + $0x34] sm:$0xf]
      %v286 = vld [vmem:[%s271 + $0x38] sm:$0x1]
      %v287 = vld [vmem:[%s271 + $0x3c] sm:$0xf]
      %v288 = vld [vmem:[%s271 + $0x40] sm:$0xf]
      %v289 = vld [vmem:[%s271 + $0x44] sm:$0x1]
      %v290 = vld [vmem:[%s271 + $0x48] sm:$0xf]
      %v291 = vld [vmem:[%s271 + $0x4c] sm:$0xf]
      %v292 = vld [vmem:[%s271 + $0x50] sm:$0x1]
      %v293 = vld [vmem:[%s271 + $0x54] sm:$0xf]
      %v294 = vld [vmem:[%s271 + $0x58] sm:$0xf]
      %v295 = vld [vmem:[%s271 + $0x5c] sm:$0x1]
      %v296 = vld [vmem:[%s271 + $0x60] sm:$0xf]
      %v297 = vld [vmem:[%s271 + $0x64] sm:$0xf]
      %v298 = vld [vmem:[%s271 + $0x68] sm:$0x1]
      %v299 = vld [vmem:[%s271 + $0x6c] sm:$0xf]
      %v300 = vld [vmem:[%s271 + $0x70] sm:$0xf]
      %v301 = vld [vmem:[%s271 + $0x74] sm:$0x1]
      %v302 = vld [vmem:[%s271 + $0x78] sm:$0xf]
      %v303 = vld [vmem:[%s271 + $0x7c] sm:$0xf]
      %v304 = vld [vmem:[%s271 + $0x80] sm:$0x1]
      %v305 = vld [vmem:[%s271 + $0x84] sm:$0xf]
      %v306 = vld [vmem:[%s271 + $0x88] sm:$0xf]
      %v307 = vld [vmem:[%s271 + $0x8c] sm:$0x1]
      %v308 = vld [vmem:[%s271 + $0x90] sm:$0xf]
      %v309 = vld [vmem:[%s271 + $0x94] sm:$0xf]
      %v310 = vld [vmem:[%s271 + $0x98] sm:$0x1]
      %v311 = vld [vmem:[%s271 + $0x9c] sm:$0xf]
      %v312 = vld [vmem:[%s271 + $0xa0] sm:$0xf]
      %v313 = vld [vmem:[%s271 + $0xa4] sm:$0x1]
      %v314 = vld [vmem:[%s271 + $0xa8] sm:$0xf]
      %v315 = vld [vmem:[%s271 + $0xac] sm:$0xf]
      %v316 = vld [vmem:[%s271 + $0xb0] sm:$0x1]
      %v317 = vld [vmem:[%s271 + $0xb4] sm:$0xf]
      %v318 = vld [vmem:[%s271 + $0xb8] sm:$0xf]
      %v319 = vld [vmem:[%s271 + $0xbc] sm:$0x1]
      %v320 = vld [vmem:[%s271 + $0xc0] sm:$0xf]
      %v321 = vld [vmem:[%s271 + $0xc4] sm:$0xf]
      %v322 = vld [vmem:[%s271 + $0xc8] sm:$0x1]
      %v323 = vld [vmem:[%s271 + $0xcc] sm:$0xf]
      %v324 = vld [vmem:[%s271 + $0xd0] sm:$0xf]
      %v325 = vld [vmem:[%s271 + $0xd4] sm:$0x1]
      %vm326 = vsmask.f32 3328
      %vm327 = vsmask.f32 7440
      %vm328 = vmor %vm326, %vm327
      %v330 = vshrl.u32 %v272, 16
      %v332 = vrot.slane %v330, 4
      %v333 = vshll.u32 %v272, 16
      %v335 = vrot.slane %v333, 5
      %v336 = vor.u32 %v332, %v335
      %v337 = vrot.slane %v336, 4
      %v339 = vshll.u32 %v273, 16
      %v341 = vrot.slane %v339, 5
      %v342 = vsel %vm328, %v337, %v341
      %v343 = vshrl.u32 %v273, 16
      %v345 = vrot.slane %v343, 4
      %v346 = vor.u32 %v345, %v341
      %v347 = vrot.slane %v346, 4
      %v349 = vshll.u32 %v274, 16
      %v351 = vrot.slane %v349, 5
      %v352 = vsel %vm328, %v347, %v351
      %v354 = vshrl.u32 %v275, 16
      %v356 = vrot.slane %v354, 4
      %v357 = vshll.u32 %v275, 16
      %v359 = vrot.slane %v357, 5
      %v360 = vor.u32 %v356, %v359
      %v361 = vrot.slane %v360, 4
      %v363 = vshll.u32 %v276, 16
      %v365 = vrot.slane %v363, 5
      %v366 = vsel %vm328, %v361, %v365
      %v367 = vshrl.u32 %v276, 16
      %v369 = vrot.slane %v367, 4
      %v370 = vor.u32 %v369, %v365
      %v371 = vrot.slane %v370, 4
      %v373 = vshll.u32 %v277, 16
      %v375 = vrot.slane %v373, 5
      %v376 = vsel %vm328, %v371, %v375
      %v378 = vshrl.u32 %v278, 16
      %v380 = vrot.slane %v378, 4
      %v381 = vshll.u32 %v278, 16
      %v383 = vrot.slane %v381, 5
      %v384 = vor.u32 %v380, %v383
      %v385 = vrot.slane %v384, 4
      %v387 = vshll.u32 %v279, 16
      %v389 = vrot.slane %v387, 5
      %v390 = vsel %vm328, %v385, %v389
      %v391 = vshrl.u32 %v279, 16
      %v393 = vrot.slane %v391, 4
      %v394 = vor.u32 %v393, %v389
      %v395 = vrot.slane %v394, 4
      %v397 = vshll.u32 %v280, 16
      %v399 = vrot.slane %v397, 5
      %v400 = vsel %vm328, %v395, %v399
      %v402 = vshrl.u32 %v281, 16
      %v404 = vrot.slane %v402, 4
      %v405 = vshll.u32 %v281, 16
      %v407 = vrot.slane %v405, 5
      %v408 = vor.u32 %v404, %v407
      %v409 = vrot.slane %v408, 4
      %v411 = vshll.u32 %v282, 16
      %v413 = vrot.slane %v411, 5
      %v414 = vsel %vm328, %v409, %v413
      %v415 = vshrl.u32 %v282, 16
      %v417 = vrot.slane %v415, 4
      %v418 = vor.u32 %v417, %v413
      %v419 = vrot.slane %v418, 4
      %v421 = vshll.u32 %v283, 16
      %v423 = vrot.slane %v421, 5
      %v424 = vsel %vm328, %v419, %v423
      %v426 = vshrl.u32 %v284, 16
      %v428 = vrot.slane %v426, 4
      %v429 = vshll.u32 %v284, 16
      %v431 = vrot.slane %v429, 5
      %v432 = vor.u32 %v428, %v431
      %v433 = vrot.slane %v432, 4
      %v435 = vshll.u32 %v285, 16
      %v437 = vrot.slane %v435, 5
      %v438 = vsel %vm328, %v433, %v437
      %v439 = vshrl.u32 %v285, 16
      %v441 = vrot.slane %v439, 4
      %v442 = vor.u32 %v441, %v437
      %v443 = vrot.slane %v442, 4
      %v445 = vshll.u32 %v286, 16
      %v447 = vrot.slane %v445, 5
      %v448 = vsel %vm328, %v443, %v447
      %v450 = vshrl.u32 %v287, 16
      %v452 = vrot.slane %v450, 4
      %v453 = vshll.u32 %v287, 16
      %v455 = vrot.slane %v453, 5
      %v456 = vor.u32 %v452, %v455
      %v457 = vrot.slane %v456, 4
      %v459 = vshll.u32 %v288, 16
      %v461 = vrot.slane %v459, 5
      %v462 = vsel %vm328, %v457, %v461
      %v463 = vshrl.u32 %v288, 16
      %v465 = vrot.slane %v463, 4
      %v466 = vor.u32 %v465, %v461
      %v467 = vrot.slane %v466, 4
      %v469 = vshll.u32 %v289, 16
      %v471 = vrot.slane %v469, 5
      %v472 = vsel %vm328, %v467, %v471
      %v474 = vshrl.u32 %v290, 16
      %v476 = vrot.slane %v474, 4
      %v477 = vshll.u32 %v290, 16
      %v479 = vrot.slane %v477, 5
      %v480 = vor.u32 %v476, %v479
      %v481 = vrot.slane %v480, 4
      %v483 = vshll.u32 %v291, 16
      %v485 = vrot.slane %v483, 5
      %v486 = vsel %vm328, %v481, %v485
      %v487 = vshrl.u32 %v291, 16
      %v489 = vrot.slane %v487, 4
      %v490 = vor.u32 %v489, %v485
      %v491 = vrot.slane %v490, 4
      %v493 = vshll.u32 %v292, 16
      %v495 = vrot.slane %v493, 5
      %v496 = vsel %vm328, %v491, %v495
      %v498 = vshrl.u32 %v293, 16
      %v500 = vrot.slane %v498, 4
      %v501 = vshll.u32 %v293, 16
      %v503 = vrot.slane %v501, 5
      %v504 = vor.u32 %v500, %v503
      %v505 = vrot.slane %v504, 4
      %v507 = vshll.u32 %v294, 16
      %v509 = vrot.slane %v507, 5
      %v510 = vsel %vm328, %v505, %v509
      %v511 = vshrl.u32 %v294, 16
      %v513 = vrot.slane %v511, 4
      %v514 = vor.u32 %v513, %v509
      %v515 = vrot.slane %v514, 4
      %v517 = vshll.u32 %v295, 16
      %v519 = vrot.slane %v517, 5
      %v520 = vsel %vm328, %v515, %v519
      %v522 = vshrl.u32 %v296, 16
      %v524 = vrot.slane %v522, 4
      %v525 = vshll.u32 %v296, 16
      %v527 = vrot.slane %v525, 5
      %v528 = vor.u32 %v524, %v527
      %v529 = vrot.slane %v528, 4
      %v531 = vshll.u32 %v297, 16
      %v533 = vrot.slane %v531, 5
      %v534 = vsel %vm328, %v529, %v533
      %v535 = vshrl.u32 %v297, 16
      %v537 = vrot.slane %v535, 4
      %v538 = vor.u32 %v537, %v533
      %v539 = vrot.slane %v538, 4
      %v541 = vshll.u32 %v298, 16
      %v543 = vrot.slane %v541, 5
      %v544 = vsel %vm328, %v539, %v543
      %v546 = vshrl.u32 %v299, 16
      %v548 = vrot.slane %v546, 4
      %v549 = vshll.u32 %v299, 16
      %v551 = vrot.slane %v549, 5
      %v552 = vor.u32 %v548, %v551
      %v553 = vrot.slane %v552, 4
      %v555 = vshll.u32 %v300, 16
      %v557 = vrot.slane %v555, 5
      %v558 = vsel %vm328, %v553, %v557
      %v559 = vshrl.u32 %v300, 16
      %v561 = vrot.slane %v559, 4
      %v562 = vor.u32 %v561, %v557
      %v563 = vrot.slane %v562, 4
      %v565 = vshll.u32 %v301, 16
      %v567 = vrot.slane %v565, 5
      %v568 = vsel %vm328, %v563, %v567
      %v570 = vshrl.u32 %v302, 16
      %v572 = vrot.slane %v570, 4
      %v573 = vshll.u32 %v302, 16
      %v575 = vrot.slane %v573, 5
      %v576 = vor.u32 %v572, %v575
      %v577 = vrot.slane %v576, 4
      %v579 = vshll.u32 %v303, 16
      %v581 = vrot.slane %v579, 5
      %v582 = vsel %vm328, %v577, %v581
      %v583 = vshrl.u32 %v303, 16
      %v585 = vrot.slane %v583, 4
      %v586 = vor.u32 %v585, %v581
      %v587 = vrot.slane %v586, 4
      %v589 = vshll.u32 %v304, 16
      %v591 = vrot.slane %v589, 5
      %v592 = vsel %vm328, %v587, %v591
      %v594 = vshrl.u32 %v305, 16
      %v596 = vrot.slane %v594, 4
      %v597 = vshll.u32 %v305, 16
      %v599 = vrot.slane %v597, 5
      %v600 = vor.u32 %v596, %v599
      %v601 = vrot.slane %v600, 4
      %v603 = vshll.u32 %v306, 16
      %v605 = vrot.slane %v603, 5
      %v606 = vsel %vm328, %v601, %v605
      %v607 = vshrl.u32 %v306, 16
      %v609 = vrot.slane %v607, 4
      %v610 = vor.u32 %v609, %v605
      %v611 = vrot.slane %v610, 4
      %v613 = vshll.u32 %v307, 16
      %v615 = vrot.slane %v613, 5
      %v616 = vsel %vm328, %v611, %v615
      %v618 = vshrl.u32 %v308, 16
      %v620 = vrot.slane %v618, 4
      %v621 = vshll.u32 %v308, 16
      %v623 = vrot.slane %v621, 5
      %v624 = vor.u32 %v620, %v623
      %v625 = vrot.slane %v624, 4
      %v627 = vshll.u32 %v309, 16
      %v629 = vrot.slane %v627, 5
      %v630 = vsel %vm328, %v625, %v629
      %v631 = vshrl.u32 %v309, 16
      %v633 = vrot.slane %v631, 4
      %v634 = vor.u32 %v633, %v629
      %v635 = vrot.slane %v634, 4
      %v637 = vshll.u32 %v310, 16
      %v639 = vrot.slane %v637, 5
      %v640 = vsel %vm328, %v635, %v639
      %v642 = vshrl.u32 %v311, 16
      %v644 = vrot.slane %v642, 4
      %v645 = vshll.u32 %v311, 16
      %v647 = vrot.slane %v645, 5
      %v648 = vor.u32 %v644, %v647
      %v649 = vrot.slane %v648, 4
      %v651 = vshll.u32 %v312, 16
      %v653 = vrot.slane %v651, 5
      %v654 = vsel %vm328, %v649, %v653
      %v655 = vshrl.u32 %v312, 16
      %v657 = vrot.slane %v655, 4
      %v658 = vor.u32 %v657, %v653
      %v659 = vrot.slane %v658, 4
      %v661 = vshll.u32 %v313, 16
      %v663 = vrot.slane %v661, 5
      %v664 = vsel %vm328, %v659, %v663
      %v666 = vshrl.u32 %v314, 16
      %v668 = vrot.slane %v666, 4
      %v669 = vshll.u32 %v314, 16
      %v671 = vrot.slane %v669, 5
      %v672 = vor.u32 %v668, %v671
      %v673 = vrot.slane %v672, 4
      %v675 = vshll.u32 %v315, 16
      %v677 = vrot.slane %v675, 5
      %v678 = vsel %vm328, %v673, %v677
      %v679 = vshrl.u32 %v315, 16
      %v681 = vrot.slane %v679, 4
      %v682 = vor.u32 %v681, %v677
      %v683 = vrot.slane %v682, 4
      %v685 = vshll.u32 %v316, 16
      %v687 = vrot.slane %v685, 5
      %v688 = vsel %vm328, %v683, %v687
      %v690 = vshrl.u32 %v317, 16
      %v692 = vrot.slane %v690, 4
      %v693 = vshll.u32 %v317, 16
      %v695 = vrot.slane %v693, 5
      %v696 = vor.u32 %v692, %v695
      %v697 = vrot.slane %v696, 4
      %v699 = vshll.u32 %v318, 16
      %v701 = vrot.slane %v699, 5
      %v702 = vsel %vm328, %v697, %v701
      %v703 = vshrl.u32 %v318, 16
      %v705 = vrot.slane %v703, 4
      %v706 = vor.u32 %v705, %v701
      %v707 = vrot.slane %v706, 4
      %v709 = vshll.u32 %v319, 16
      %v711 = vrot.slane %v709, 5
      %v712 = vsel %vm328, %v707, %v711
      %vm761 = vcmask 1042432
      %vm762 = vcmask 1046532
      %vm763 = vmor %vm761, %vm762
      %v764 = vrot.slane %v272, 5
      %v765 = vrot.slane %v764, 4
      %v766 = vrot.slane %v273, 5
      %v767 = vsel %vm763, %v765, %v766
      %v768 = vrot.slane %v766, 4
      %v769 = vrot.slane %v274, 5
      %v770 = vsel %vm763, %v768, %v769
      %v771 = vrot.slane %v275, 5
      %v772 = vrot.slane %v771, 4
      %v773 = vrot.slane %v276, 5
      %v774 = vsel %vm763, %v772, %v773
      %v775 = vrot.slane %v773, 4
      %v776 = vrot.slane %v277, 5
      %v777 = vsel %vm763, %v775, %v776
      %v778 = vrot.slane %v278, 5
      %v779 = vrot.slane %v778, 4
      %v780 = vrot.slane %v279, 5
      %v781 = vsel %vm763, %v779, %v780
      %v782 = vrot.slane %v780, 4
      %v783 = vrot.slane %v280, 5
      %v784 = vsel %vm763, %v782, %v783
      %v785 = vrot.slane %v281, 5
      %v786 = vrot.slane %v785, 4
      %v787 = vrot.slane %v282, 5
      %v788 = vsel %vm763, %v786, %v787
      %v789 = vrot.slane %v787, 4
      %v790 = vrot.slane %v283, 5
      %v791 = vsel %vm763, %v789, %v790
      %v792 = vrot.slane %v284, 5
      %v793 = vrot.slane %v792, 4
      %v794 = vrot.slane %v285, 5
      %v795 = vsel %vm763, %v793, %v794
      %v796 = vrot.slane %v794, 4
      %v797 = vrot.slane %v286, 5
      %v798 = vsel %vm763, %v796, %v797
      %v799 = vrot.slane %v287, 5
      %v800 = vrot.slane %v799, 4
      %v801 = vrot.slane %v288, 5
      %v802 = vsel %vm763, %v800, %v801
      %v803 = vrot.slane %v801, 4
      %v804 = vrot.slane %v289, 5
      %v805 = vsel %vm763, %v803, %v804
      %v806 = vrot.slane %v290, 5
      %v807 = vrot.slane %v806, 4
      %v808 = vrot.slane %v291, 5
      %v809 = vsel %vm763, %v807, %v808
      %v810 = vrot.slane %v808, 4
      %v811 = vrot.slane %v292, 5
      %v812 = vsel %vm763, %v810, %v811
      %v813 = vrot.slane %v293, 5
      %v814 = vrot.slane %v813, 4
      %v815 = vrot.slane %v294, 5
      %v816 = vsel %vm763, %v814, %v815
      %v817 = vrot.slane %v815, 4
      %v818 = vrot.slane %v295, 5
      %v819 = vsel %vm763, %v817, %v818
      %v820 = vrot.slane %v296, 5
      %v821 = vrot.slane %v820, 4
      %v822 = vrot.slane %v297, 5
      %v823 = vsel %vm763, %v821, %v822
      %v824 = vrot.slane %v822, 4
      %v825 = vrot.slane %v298, 5
      %v826 = vsel %vm763, %v824, %v825
      %v827 = vrot.slane %v299, 5
      %v828 = vrot.slane %v827, 4
      %v829 = vrot.slane %v300, 5
      %v830 = vsel %vm763, %v828, %v829
      %v831 = vrot.slane %v829, 4
      %v832 = vrot.slane %v301, 5
      %v833 = vsel %vm763, %v831, %v832
      %v834 = vrot.slane %v302, 5
      %v835 = vrot.slane %v834, 4
      %v836 = vrot.slane %v303, 5
      %v837 = vsel %vm763, %v835, %v836
      %v838 = vrot.slane %v836, 4
      %v839 = vrot.slane %v304, 5
      %v840 = vsel %vm763, %v838, %v839
      %v841 = vrot.slane %v305, 5
      %v842 = vrot.slane %v841, 4
      %v843 = vrot.slane %v306, 5
      %v844 = vsel %vm763, %v842, %v843
      %v845 = vrot.slane %v843, 4
      %v846 = vrot.slane %v307, 5
      %v847 = vsel %vm763, %v845, %v846
      %v848 = vrot.slane %v308, 5
      %v849 = vrot.slane %v848, 4
      %v850 = vrot.slane %v309, 5
      %v851 = vsel %vm763, %v849, %v850
      %v852 = vrot.slane %v850, 4
      %v853 = vrot.slane %v310, 5
      %v854 = vsel %vm763, %v852, %v853
      %v855 = vrot.slane %v311, 5
      %v856 = vrot.slane %v855, 4
      %v857 = vrot.slane %v312, 5
      %v858 = vsel %vm763, %v856, %v857
      %v859 = vrot.slane %v857, 4
      %v860 = vrot.slane %v313, 5
      %v861 = vsel %vm763, %v859, %v860
      %v862 = vrot.slane %v314, 5
      %v863 = vrot.slane %v862, 4
      %v864 = vrot.slane %v315, 5
      %v865 = vsel %vm763, %v863, %v864
      %v866 = vrot.slane %v864, 4
      %v867 = vrot.slane %v316, 5
      %v868 = vsel %vm763, %v866, %v867
      %v869 = vrot.slane %v317, 5
      %v870 = vrot.slane %v869, 4
      %v871 = vrot.slane %v318, 5
      %v872 = vsel %vm763, %v870, %v871
      %v873 = vrot.slane %v871, 4
      %v874 = vrot.slane %v319, 5
      %v875 = vsel %vm763, %v873, %v874
      %v877 = vshrl.u32 %v320, 16
      %v879 = vrot.slane %v877, 4
      %v880 = vshll.u32 %v320, 16
      %v882 = vrot.slane %v880, 5
      %v883 = vor.u32 %v879, %v882
      %v884 = vrot.slane %v883, 4
      %v886 = vshll.u32 %v321, 16
      %v888 = vrot.slane %v886, 5
      %v889 = vsel %vm328, %v884, %v888
      %v890 = vshrl.u32 %v321, 16
      %v892 = vrot.slane %v890, 4
      %v893 = vor.u32 %v892, %v888
      %v894 = vrot.slane %v893, 4
      %v896 = vshll.u32 %v322, 16
      %v898 = vrot.slane %v896, 5
      %v899 = vsel %vm328, %v894, %v898
      %v903 = vrot.slane %v320, 5
      %v904 = vrot.slane %v903, 4
      %v905 = vrot.slane %v321, 5
      %v906 = vsel %vm763, %v904, %v905
      %v907 = vrot.slane %v905, 4
      %v908 = vrot.slane %v322, 5
      %v909 = vsel %vm763, %v907, %v908
      %v911 = vshrl.u32 %v323, 16
      %v913 = vrot.slane %v911, 4
      %v914 = vshll.u32 %v323, 16
      %v916 = vrot.slane %v914, 5
      %v917 = vor.u32 %v913, %v916
      %v918 = vrot.slane %v917, 4
      %v920 = vshll.u32 %v324, 16
      %v922 = vrot.slane %v920, 5
      %v923 = vsel %vm328, %v918, %v922
      %v924 = vshrl.u32 %v324, 16
      %v926 = vrot.slane %v924, 4
      %v927 = vor.u32 %v926, %v922
      %v928 = vrot.slane %v927, 4
      %v930 = vshll.u32 %v325, 16
      %v932 = vrot.slane %v930, 5
      %v933 = vsel %vm328, %v928, %v932
      %v937 = vrot.slane %v323, 5
      %v938 = vrot.slane %v937, 4
      %v939 = vrot.slane %v324, 5
      %v940 = vsel %vm763, %v938, %v939
      %v941 = vrot.slane %v939, 4
      %v942 = vrot.slane %v325, 5
      %v943 = vsel %vm763, %v941, %v942
      %v944 = vunpack.c.l.b16 %v272
      %v945 = vunpack.c.l.b16 %v273
      %v946 = vunpack.c.l.b16 %v275
      %v947 = vunpack.c.l.b16 %v276
      %v948 = vunpack.c.l.b16 %v278
      %v949 = vunpack.c.l.b16 %v279
      %v950 = vunpack.c.l.b16 %v281
      %v951 = vunpack.c.l.b16 %v282
      %v952 = vunpack.c.l.b16 %v284
      %v953 = vunpack.c.l.b16 %v285
      %v954 = vunpack.c.l.b16 %v287
      %v955 = vunpack.c.l.b16 %v288
      %v956 = vunpack.c.l.b16 %v290
      %v957 = vunpack.c.l.b16 %v291
      %v958 = vunpack.c.l.b16 %v293
      %v959 = vunpack.c.l.b16 %v294
      %v960 = vunpack.c.l.b16 %v296
      %v961 = vunpack.c.l.b16 %v297
      %v962 = vunpack.c.l.b16 %v299
      %v963 = vunpack.c.l.b16 %v300
      %v964 = vunpack.c.l.b16 %v302
      %v965 = vunpack.c.l.b16 %v303
      %v966 = vunpack.c.l.b16 %v305
      %v967 = vunpack.c.l.b16 %v306
      %v968 = vunpack.c.l.b16 %v308
      %v969 = vunpack.c.l.b16 %v309
      %v970 = vunpack.c.l.b16 %v311
      %v971 = vunpack.c.l.b16 %v312
      %v972 = vunpack.c.l.b16 %v314
      %v973 = vunpack.c.l.b16 %v315
      %v974 = vunpack.c.l.b16 %v317
      %v975 = vunpack.c.l.b16 %v318
      %v976 = vpack.c.b16 %v945, %v944
      %v977 = vpack.c.b16 %v947, %v946
      %v978 = vpack.c.b16 %v949, %v948
      %v979 = vpack.c.b16 %v951, %v950
      %v980 = vpack.c.b16 %v953, %v952
      %v981 = vpack.c.b16 %v955, %v954
      %v982 = vpack.c.b16 %v957, %v956
      %v983 = vpack.c.b16 %v959, %v958
      %v984 = vpack.c.b16 %v961, %v960
      %v985 = vpack.c.b16 %v963, %v962
      %v986 = vpack.c.b16 %v965, %v964
      %v987 = vpack.c.b16 %v967, %v966
      %v988 = vpack.c.b16 %v969, %v968
      %v989 = vpack.c.b16 %v971, %v970
      %v990 = vpack.c.b16 %v973, %v972
      %v991 = vpack.c.b16 %v975, %v974
      %v992 = vunpack.c.l.b16 %v342
      %v993 = vunpack.c.l.b16 %v352
      %v994 = vunpack.c.l.b16 %v366
      %v995 = vunpack.c.l.b16 %v376
      %v996 = vunpack.c.l.b16 %v390
      %v997 = vunpack.c.l.b16 %v400
      %v998 = vunpack.c.l.b16 %v414
      %v999 = vunpack.c.l.b16 %v424
      %v1000 = vunpack.c.l.b16 %v438
      %v1001 = vunpack.c.l.b16 %v448
      %v1002 = vunpack.c.l.b16 %v462
      %v1003 = vunpack.c.l.b16 %v472
      %v1004 = vunpack.c.l.b16 %v486
      %v1005 = vunpack.c.l.b16 %v496
      %v1006 = vunpack.c.l.b16 %v510
      %v1007 = vunpack.c.l.b16 %v520
      %v1008 = vunpack.c.l.b16 %v534
      %v1009 = vunpack.c.l.b16 %v544
      %v1010 = vunpack.c.l.b16 %v558
      %v1011 = vunpack.c.l.b16 %v568
      %v1012 = vunpack.c.l.b16 %v582
      %v1013 = vunpack.c.l.b16 %v592
      %v1014 = vunpack.c.l.b16 %v606
      %v1015 = vunpack.c.l.b16 %v616
      %v1016 = vunpack.c.l.b16 %v630
      %v1017 = vunpack.c.l.b16 %v640
      %v1018 = vunpack.c.l.b16 %v654
      %v1019 = vunpack.c.l.b16 %v664
      %v1020 = vunpack.c.l.b16 %v678
      %v1021 = vunpack.c.l.b16 %v688
      %v1022 = vunpack.c.l.b16 %v702
      %v1023 = vunpack.c.l.b16 %v712
      %v1024 = vpack.c.b16 %v993, %v992
      %v1025 = vpack.c.b16 %v995, %v994
      %v1026 = vpack.c.b16 %v997, %v996
      %v1027 = vpack.c.b16 %v999, %v998
      %v1028 = vpack.c.b16 %v1001, %v1000
      %v1029 = vpack.c.b16 %v1003, %v1002
      %v1030 = vpack.c.b16 %v1005, %v1004
      %v1031 = vpack.c.b16 %v1007, %v1006
      %v1032 = vpack.c.b16 %v1009, %v1008
      %v1033 = vpack.c.b16 %v1011, %v1010
      %v1034 = vpack.c.b16 %v1013, %v1012
      %v1035 = vpack.c.b16 %v1015, %v1014
      %v1036 = vpack.c.b16 %v1017, %v1016
      %v1037 = vpack.c.b16 %v1019, %v1018
      %v1038 = vpack.c.b16 %v1021, %v1020
      %v1039 = vpack.c.b16 %v1023, %v1022
      %1040 = vrot.lane.b32.xlu0 %v1024, 8
      %v1041 = vpop.permute.xlu0 %1040
      %1042 = vrot.lane.b32.xlu0 %v1025, 8
      %v1043 = vpop.permute.xlu0 %1042
      %1044 = vrot.lane.b32.xlu0 %v1026, 8
      %v1045 = vpop.permute.xlu0 %1044
      %1046 = vrot.lane.b32.xlu0 %v1027, 8
      %v1047 = vpop.permute.xlu0 %1046
      %1048 = vrot.lane.b32.xlu0 %v1028, 8
      %v1049 = vpop.permute.xlu0 %1048
      %1050 = vrot.lane.b32.xlu0 %v1029, 8
      %v1051 = vpop.permute.xlu0 %1050
      %1052 = vrot.lane.b32.xlu0 %v1030, 8
      %v1053 = vpop.permute.xlu0 %1052
      %1054 = vrot.lane.b32.xlu0 %v1031, 8
      %v1055 = vpop.permute.xlu0 %1054
      %1056 = vrot.lane.b32.xlu0 %v1032, 8
      %v1057 = vpop.permute.xlu0 %1056
      %1058 = vrot.lane.b32.xlu0 %v1033, 8
      %v1059 = vpop.permute.xlu0 %1058
      %1060 = vrot.lane.b32.xlu0 %v1034, 8
      %v1061 = vpop.permute.xlu0 %1060
      %1062 = vrot.lane.b32.xlu0 %v1035, 8
      %v1063 = vpop.permute.xlu0 %1062
      %1064 = vrot.lane.b32.xlu0 %v1036, 8
      %v1065 = vpop.permute.xlu0 %1064
      %1066 = vrot.lane.b32.xlu0 %v1037, 8
      %v1067 = vpop.permute.xlu0 %1066
      %1068 = vrot.lane.b32.xlu0 %v1038, 8
      %v1069 = vpop.permute.xlu0 %1068
      %1070 = vrot.lane.b32.xlu0 %v1039, 8
      %v1071 = vpop.permute.xlu0 %1070
      %v1072 = vunpack.c.l.b16 %v767
      %v1073 = vunpack.c.l.b16 %v770
      %v1074 = vunpack.c.l.b16 %v774
      %v1075 = vunpack.c.l.b16 %v777
      %v1076 = vunpack.c.l.b16 %v781
      %v1077 = vunpack.c.l.b16 %v784
      %v1078 = vunpack.c.l.b16 %v788
      %v1079 = vunpack.c.l.b16 %v791
      %v1080 = vunpack.c.l.b16 %v795
      %v1081 = vunpack.c.l.b16 %v798
      %v1082 = vunpack.c.l.b16 %v802
      %v1083 = vunpack.c.l.b16 %v805
      %v1084 = vunpack.c.l.b16 %v809
      %v1085 = vunpack.c.l.b16 %v812
      %v1086 = vunpack.c.l.b16 %v816
      %v1087 = vunpack.c.l.b16 %v819
      %v1088 = vunpack.c.l.b16 %v823
      %v1089 = vunpack.c.l.b16 %v826
      %v1090 = vunpack.c.l.b16 %v830
      %v1091 = vunpack.c.l.b16 %v833
      %v1092 = vunpack.c.l.b16 %v837
      %v1093 = vunpack.c.l.b16 %v840
      %v1094 = vunpack.c.l.b16 %v844
      %v1095 = vunpack.c.l.b16 %v847
      %v1096 = vunpack.c.l.b16 %v851
      %v1097 = vunpack.c.l.b16 %v854
      %v1098 = vunpack.c.l.b16 %v858
      %v1099 = vunpack.c.l.b16 %v861
      %v1100 = vunpack.c.l.b16 %v865
      %v1101 = vunpack.c.l.b16 %v868
      %v1102 = vunpack.c.l.b16 %v872
      %v1103 = vunpack.c.l.b16 %v875
      %v1104 = vpack.c.b16 %v1073, %v1072
      %v1105 = vpack.c.b16 %v1075, %v1074
      %v1106 = vpack.c.b16 %v1077, %v1076
      %v1107 = vpack.c.b16 %v1079, %v1078
      %v1108 = vpack.c.b16 %v1081, %v1080
      %v1109 = vpack.c.b16 %v1083, %v1082
      %v1110 = vpack.c.b16 %v1085, %v1084
      %v1111 = vpack.c.b16 %v1087, %v1086
      %v1112 = vpack.c.b16 %v1089, %v1088
      %v1113 = vpack.c.b16 %v1091, %v1090
      %v1114 = vpack.c.b16 %v1093, %v1092
      %v1115 = vpack.c.b16 %v1095, %v1094
      %v1116 = vpack.c.b16 %v1097, %v1096
      %v1117 = vpack.c.b16 %v1099, %v1098
      %v1118 = vpack.c.b16 %v1101, %v1100
      %v1119 = vpack.c.b16 %v1103, %v1102
      %1120 = vrot.lane.b32.xlu0 %v1104, 16
      %v1121 = vpop.permute.xlu0 %1120
      %1122 = vrot.lane.b32.xlu0 %v1105, 16
      %v1123 = vpop.permute.xlu0 %1122
      %1124 = vrot.lane.b32.xlu0 %v1106, 16
      %v1125 = vpop.permute.xlu0 %1124
      %1126 = vrot.lane.b32.xlu0 %v1107, 16
      %v1127 = vpop.permute.xlu0 %1126
      %1128 = vrot.lane.b32.xlu0 %v1108, 16
      %v1129 = vpop.permute.xlu0 %1128
      %1130 = vrot.lane.b32.xlu0 %v1109, 16
      %v1131 = vpop.permute.xlu0 %1130
      %1132 = vrot.lane.b32.xlu0 %v1110, 16
      %v1133 = vpop.permute.xlu0 %1132
      %1134 = vrot.lane.b32.xlu0 %v1111, 16
      %v1135 = vpop.permute.xlu0 %1134
      %1136 = vrot.lane.b32.xlu0 %v1112, 16
      %v1137 = vpop.permute.xlu0 %1136
      %1138 = vrot.lane.b32.xlu0 %v1113, 16
      %v1139 = vpop.permute.xlu0 %1138
      %1140 = vrot.lane.b32.xlu0 %v1114, 16
      %v1141 = vpop.permute.xlu0 %1140
      %1142 = vrot.lane.b32.xlu0 %v1115, 16
      %v1143 = vpop.permute.xlu0 %1142
      %1144 = vrot.lane.b32.xlu0 %v1116, 16
      %v1145 = vpop.permute.xlu0 %1144
      %1146 = vrot.lane.b32.xlu0 %v1117, 16
      %v1147 = vpop.permute.xlu0 %1146
      %1148 = vrot.lane.b32.xlu0 %v1118, 16
      %v1149 = vpop.permute.xlu0 %1148
      %1150 = vrot.lane.b32.xlu0 %v1119, 16
      %v1151 = vpop.permute.xlu0 %1150
      %v1152 = vunpack.c.l.b16 %v320
      %v1153 = vunpack.c.l.b16 %v321
      %v1154 = vpack.c.b16 %v1153, %v1152
      %1155 = vrot.lane.b32.xlu0 %v977, 24
      %v1156 = vpop.permute.xlu0 %1155
      %1157 = vrot.lane.b32.xlu0 %v978, 24
      %v1158 = vpop.permute.xlu0 %1157
      %1159 = vrot.lane.b32.xlu0 %v979, 24
      %v1160 = vpop.permute.xlu0 %1159
      %1161 = vrot.lane.b32.xlu0 %v980, 24
      %v1162 = vpop.permute.xlu0 %1161
      %1163 = vrot.lane.b32.xlu0 %v981, 24
      %v1164 = vpop.permute.xlu0 %1163
      %1165 = vrot.lane.b32.xlu0 %v982, 24
      %v1166 = vpop.permute.xlu0 %1165
      %1167 = vrot.lane.b32.xlu0 %v983, 24
      %v1168 = vpop.permute.xlu0 %1167
      %1169 = vrot.lane.b32.xlu0 %v984, 24
      %v1170 = vpop.permute.xlu0 %1169
      %1171 = vrot.lane.b32.xlu0 %v985, 24
      %v1172 = vpop.permute.xlu0 %1171
      %1173 = vrot.lane.b32.xlu0 %v986, 24
      %v1174 = vpop.permute.xlu0 %1173
      %1175 = vrot.lane.b32.xlu0 %v987, 24
      %v1176 = vpop.permute.xlu0 %1175
      %1177 = vrot.lane.b32.xlu0 %v988, 24
      %v1178 = vpop.permute.xlu0 %1177
      %1179 = vrot.lane.b32.xlu0 %v989, 24
      %v1180 = vpop.permute.xlu0 %1179
      %1181 = vrot.lane.b32.xlu0 %v990, 24
      %v1182 = vpop.permute.xlu0 %1181
      %1183 = vrot.lane.b32.xlu0 %v991, 24
      %v1184 = vpop.permute.xlu0 %1183
      %1185 = vrot.lane.b32.xlu0 %v1154, 24
      %v1186 = vpop.permute.xlu0 %1185
      %v1187 = vunpack.c.l.b16 %v889
      %v1188 = vunpack.c.l.b16 %v899
      %v1189 = vpack.c.b16 %v1188, %v1187
      %1190 = vrot.lane.b32.xlu0 %v1025, 32
      %v1191 = vpop.permute.xlu0 %1190
      %1192 = vrot.lane.b32.xlu0 %v1026, 32
      %v1193 = vpop.permute.xlu0 %1192
      %1194 = vrot.lane.b32.xlu0 %v1027, 32
      %v1195 = vpop.permute.xlu0 %1194
      %1196 = vrot.lane.b32.xlu0 %v1028, 32
      %v1197 = vpop.permute.xlu0 %1196
      %1198 = vrot.lane.b32.xlu0 %v1029, 32
      %v1199 = vpop.permute.xlu0 %1198
      %1200 = vrot.lane.b32.xlu0 %v1030, 32
      %v1201 = vpop.permute.xlu0 %1200
      %1202 = vrot.lane.b32.xlu0 %v1031, 32
      %v1203 = vpop.permute.xlu0 %1202
      %1204 = vrot.lane.b32.xlu0 %v1032, 32
      %v1205 = vpop.permute.xlu0 %1204
      %1206 = vrot.lane.b32.xlu0 %v1033, 32
      %v1207 = vpop.permute.xlu0 %1206
      %1208 = vrot.lane.b32.xlu0 %v1034, 32
      %v1209 = vpop.permute.xlu0 %1208
      %1210 = vrot.lane.b32.xlu0 %v1035, 32
      %v1211 = vpop.permute.xlu0 %1210
      %1212 = vrot.lane.b32.xlu0 %v1036, 32
      %v1213 = vpop.permute.xlu0 %1212
      %1214 = vrot.lane.b32.xlu0 %v1037, 32
      %v1215 = vpop.permute.xlu0 %1214
      %1216 = vrot.lane.b32.xlu0 %v1038, 32
      %v1217 = vpop.permute.xlu0 %1216
      %1218 = vrot.lane.b32.xlu0 %v1039, 32
      %v1219 = vpop.permute.xlu0 %1218
      %1220 = vrot.lane.b32.xlu0 %v1189, 32
      %v1221 = vpop.permute.xlu0 %1220
      %v1222 = vunpack.c.l.b16 %v906
      %v1223 = vunpack.c.l.b16 %v909
      %v1224 = vpack.c.b16 %v1223, %v1222
      %1225 = vrot.lane.b32.xlu0 %v1105, 40
      %v1226 = vpop.permute.xlu0 %1225
      %1227 = vrot.lane.b32.xlu0 %v1106, 40
      %v1228 = vpop.permute.xlu0 %1227
      %1229 = vrot.lane.b32.xlu0 %v1107, 40
      %v1230 = vpop.permute.xlu0 %1229
      %1231 = vrot.lane.b32.xlu0 %v1108, 40
      %v1232 = vpop.permute.xlu0 %1231
      %1233 = vrot.lane.b32.xlu0 %v1109, 40
      %v1234 = vpop.permute.xlu0 %1233
      %1235 = vrot.lane.b32.xlu0 %v1110, 40
      %v1236 = vpop.permute.xlu0 %1235
      %1237 = vrot.lane.b32.xlu0 %v1111, 40
      %v1238 = vpop.permute.xlu0 %1237
      %1239 = vrot.lane.b32.xlu0 %v1112, 40
      %v1240 = vpop.permute.xlu0 %1239
      %1241 = vrot.lane.b32.xlu0 %v1113, 40
      %v1242 = vpop.permute.xlu0 %1241
      %1243 = vrot.lane.b32.xlu0 %v1114, 40
      %v1244 = vpop.permute.xlu0 %1243
      %1245 = vrot.lane.b32.xlu0 %v1115, 40
      %v1246 = vpop.permute.xlu0 %1245
      %1247 = vrot.lane.b32.xlu0 %v1116, 40
      %v1248 = vpop.permute.xlu0 %1247
      %1249 = vrot.lane.b32.xlu0 %v1117, 40
      %v1250 = vpop.permute.xlu0 %1249
      %1251 = vrot.lane.b32.xlu0 %v1118, 40
      %v1252 = vpop.permute.xlu0 %1251
      %1253 = vrot.lane.b32.xlu0 %v1119, 40
      %v1254 = vpop.permute.xlu0 %1253
      %1255 = vrot.lane.b32.xlu0 %v1224, 40
      %v1256 = vpop.permute.xlu0 %1255
      %v1257 = vunpack.c.l.b16 %v323
      %v1258 = vunpack.c.l.b16 %v324
      %v1259 = vpack.c.b16 %v1258, %v1257
      %1260 = vrot.lane.b32.xlu0 %v978, 48
      %v1261 = vpop.permute.xlu0 %1260
      %1262 = vrot.lane.b32.xlu0 %v979, 48
      %v1263 = vpop.permute.xlu0 %1262
      %1264 = vrot.lane.b32.xlu0 %v980, 48
      %v1265 = vpop.permute.xlu0 %1264
      %1266 = vrot.lane.b32.xlu0 %v981, 48
      %v1267 = vpop.permute.xlu0 %1266
      %1268 = vrot.lane.b32.xlu0 %v982, 48
      %v1269 = vpop.permute.xlu0 %1268
      %1270 = vrot.lane.b32.xlu0 %v983, 48
      %v1271 = vpop.permute.xlu0 %1270
      %1272 = vrot.lane.b32.xlu0 %v984, 48
      %v1273 = vpop.permute.xlu0 %1272
      %1274 = vrot.lane.b32.xlu0 %v985, 48
      %v1275 = vpop.permute.xlu0 %1274
      %1276 = vrot.lane.b32.xlu0 %v986, 48
      %v1277 = vpop.permute.xlu0 %1276
      %1278 = vrot.lane.b32.xlu0 %v987, 48
      %v1279 = vpop.permute.xlu0 %1278
      %1280 = vrot.lane.b32.xlu0 %v988, 48
      %v1281 = vpop.permute.xlu0 %1280
      %1282 = vrot.lane.b32.xlu0 %v989, 48
      %v1283 = vpop.permute.xlu0 %1282
      %1284 = vrot.lane.b32.xlu0 %v990, 48
      %v1285 = vpop.permute.xlu0 %1284
      %1286 = vrot.lane.b32.xlu0 %v991, 48
      %v1287 = vpop.permute.xlu0 %1286
      %1288 = vrot.lane.b32.xlu0 %v1154, 48
      %v1289 = vpop.permute.xlu0 %1288
      %1290 = vrot.lane.b32.xlu0 %v1259, 48
      %v1291 = vpop.permute.xlu0 %1290
      %v1292 = vunpack.c.l.b16 %v923
      %v1293 = vunpack.c.l.b16 %v933
      %v1294 = vpack.c.b16 %v1293, %v1292
      %1295 = vrot.lane.b32.xlu0 %v1026, 56
      %v1296 = vpop.permute.xlu0 %1295
      %1297 = vrot.lane.b32.xlu0 %v1027, 56
      %v1298 = vpop.permute.xlu0 %1297
      %1299 = vrot.lane.b32.xlu0 %v1028, 56
      %v1300 = vpop.permute.xlu0 %1299
      %1301 = vrot.lane.b32.xlu0 %v1029, 56
      %v1302 = vpop.permute.xlu0 %1301
      %1303 = vrot.lane.b32.xlu0 %v1030, 56
      %v1304 = vpop.permute.xlu0 %1303
      %1305 = vrot.lane.b32.xlu0 %v1031, 56
      %v1306 = vpop.permute.xlu0 %1305
      %1307 = vrot.lane.b32.xlu0 %v1032, 56
      %v1308 = vpop.permute.xlu0 %1307
      %1309 = vrot.lane.b32.xlu0 %v1033, 56
      %v1310 = vpop.permute.xlu0 %1309
      %1311 = vrot.lane.b32.xlu0 %v1034, 56
      %v1312 = vpop.permute.xlu0 %1311
      %1313 = vrot.lane.b32.xlu0 %v1035, 56
      %v1314 = vpop.permute.xlu0 %1313
      %1315 = vrot.lane.b32.xlu0 %v1036, 56
      %v1316 = vpop.permute.xlu0 %1315
      %1317 = vrot.lane.b32.xlu0 %v1037, 56
      %v1318 = vpop.permute.xlu0 %1317
      %1319 = vrot.lane.b32.xlu0 %v1038, 56
      %v1320 = vpop.permute.xlu0 %1319
      %1321 = vrot.lane.b32.xlu0 %v1039, 56
      %v1322 = vpop.permute.xlu0 %1321
      %1323 = vrot.lane.b32.xlu0 %v1189, 56
      %v1324 = vpop.permute.xlu0 %1323
      %1325 = vrot.lane.b32.xlu0 %v1294, 56
      %v1326 = vpop.permute.xlu0 %1325
      %v1327 = vunpack.c.l.b16 %v940
      %v1328 = vunpack.c.l.b16 %v943
      %v1329 = vpack.c.b16 %v1328, %v1327
      %1330 = vrot.lane.b32.xlu0 %v1106, 64
      %v1331 = vpop.permute.xlu0 %1330
      %1332 = vrot.lane.b32.xlu0 %v1107, 64
      %v1333 = vpop.permute.xlu0 %1332
      %1334 = vrot.lane.b32.xlu0 %v1108, 64
      %v1335 = vpop.permute.xlu0 %1334
      %1336 = vrot.lane.b32.xlu0 %v1109, 64
      %v1337 = vpop.permute.xlu0 %1336
      %1338 = vrot.lane.b32.xlu0 %v1110, 64
      %v1339 = vpop.permute.xlu0 %1338
      %1340 = vrot.lane.b32.xlu0 %v1111, 64
      %v1341 = vpop.permute.xlu0 %1340
      %1342 = vrot.lane.b32.xlu0 %v1112, 64
      %v1343 = vpop.permute.xlu0 %1342
      %1344 = vrot.lane.b32.xlu0 %v1113, 64
      %v1345 = vpop.permute.xlu0 %1344
      %1346 = vrot.lane.b32.xlu0 %v1114, 64
      %v1347 = vpop.permute.xlu0 %1346
      %1348 = vrot.lane.b32.xlu0 %v1115, 64
      %v1349 = vpop.permute.xlu0 %1348
      %1350 = vrot.lane.b32.xlu0 %v1116, 64
      %v1351 = vpop.permute.xlu0 %1350
      %1352 = vrot.lane.b32.xlu0 %v1117, 64
      %v1353 = vpop.permute.xlu0 %1352
      %1354 = vrot.lane.b32.xlu0 %v1118, 64
      %v1355 = vpop.permute.xlu0 %1354
      %1356 = vrot.lane.b32.xlu0 %v1119, 64
      %v1357 = vpop.permute.xlu0 %1356
      %1358 = vrot.lane.b32.xlu0 %v1224, 64
      %v1359 = vpop.permute.xlu0 %1358
      %1360 = vrot.lane.b32.xlu0 %v1329, 64
      %v1361 = vpop.permute.xlu0 %1360
      %vm1362 = vcmask 64512
      %v1365 = vsel %vm1362, %v976, %v1041
      %v1368 = vsel %vm1362, %v977, %v1043
      %v1371 = vsel %vm1362, %v978, %v1045
      %v1374 = vsel %vm1362, %v979, %v1047
      %v1377 = vsel %vm1362, %v980, %v1049
      %v1380 = vsel %vm1362, %v981, %v1051
      %v1383 = vsel %vm1362, %v982, %v1053
      %v1386 = vsel %vm1362, %v983, %v1055
      %v1389 = vsel %vm1362, %v984, %v1057
      %v1392 = vsel %vm1362, %v985, %v1059
      %v1395 = vsel %vm1362, %v986, %v1061
      %v1398 = vsel %vm1362, %v987, %v1063
      %v1401 = vsel %vm1362, %v988, %v1065
      %v1404 = vsel %vm1362, %v989, %v1067
      %v1407 = vsel %vm1362, %v990, %v1069
      %v1410 = vsel %vm1362, %v991, %v1071
      %vm1411 = vcmask 130048
      %v1413 = vsel %vm1411, %v1365, %v1121
      %v1415 = vsel %vm1411, %v1368, %v1123
      %v1417 = vsel %vm1411, %v1371, %v1125
      %v1419 = vsel %vm1411, %v1374, %v1127
      %v1421 = vsel %vm1411, %v1377, %v1129
      %v1423 = vsel %vm1411, %v1380, %v1131
      %v1425 = vsel %vm1411, %v1383, %v1133
      %v1427 = vsel %vm1411, %v1386, %v1135
      %v1429 = vsel %vm1411, %v1389, %v1137
      %v1431 = vsel %vm1411, %v1392, %v1139
      %v1433 = vsel %vm1411, %v1395, %v1141
      %v1435 = vsel %vm1411, %v1398, %v1143
      %v1437 = vsel %vm1411, %v1401, %v1145
      %v1439 = vsel %vm1411, %v1404, %v1147
      %v1441 = vsel %vm1411, %v1407, %v1149
      %v1443 = vsel %vm1411, %v1410, %v1151
      %vm1444 = vcmask 195584
      %v1446 = vsel %vm1444, %v1413, %v1156
      %v1448 = vsel %vm1444, %v1415, %v1158
      %v1450 = vsel %vm1444, %v1417, %v1160
      %v1452 = vsel %vm1444, %v1419, %v1162
      %v1454 = vsel %vm1444, %v1421, %v1164
      %v1456 = vsel %vm1444, %v1423, %v1166
      %v1458 = vsel %vm1444, %v1425, %v1168
      %v1460 = vsel %vm1444, %v1427, %v1170
      %v1462 = vsel %vm1444, %v1429, %v1172
      %v1464 = vsel %vm1444, %v1431, %v1174
      %v1466 = vsel %vm1444, %v1433, %v1176
      %v1468 = vsel %vm1444, %v1435, %v1178
      %v1470 = vsel %vm1444, %v1437, %v1180
      %v1472 = vsel %vm1444, %v1439, %v1182
      %v1474 = vsel %vm1444, %v1441, %v1184
      %v1476 = vsel %vm1444, %v1443, %v1186
      %vm1477 = vcmask 261120
      %v1479 = vsel %vm1477, %v1446, %v1191
      %v1481 = vsel %vm1477, %v1448, %v1193
      %v1483 = vsel %vm1477, %v1450, %v1195
      %v1485 = vsel %vm1477, %v1452, %v1197
      %v1487 = vsel %vm1477, %v1454, %v1199
      %v1489 = vsel %vm1477, %v1456, %v1201
      %v1491 = vsel %vm1477, %v1458, %v1203
      %v1493 = vsel %vm1477, %v1460, %v1205
      %v1495 = vsel %vm1477, %v1462, %v1207
      %v1497 = vsel %vm1477, %v1464, %v1209
      %v1499 = vsel %vm1477, %v1466, %v1211
      %v1501 = vsel %vm1477, %v1468, %v1213
      %v1503 = vsel %vm1477, %v1470, %v1215
      %v1505 = vsel %vm1477, %v1472, %v1217
      %v1507 = vsel %vm1477, %v1474, %v1219
      %v1509 = vsel %vm1477, %v1476, %v1221
      %vm1510 = vcmask 326656
      %v1512 = vsel %vm1510, %v1479, %v1226
      %v1514 = vsel %vm1510, %v1481, %v1228
      %v1516 = vsel %vm1510, %v1483, %v1230
      %v1518 = vsel %vm1510, %v1485, %v1232
      %v1520 = vsel %vm1510, %v1487, %v1234
      %v1522 = vsel %vm1510, %v1489, %v1236
      %v1524 = vsel %vm1510, %v1491, %v1238
      %v1526 = vsel %vm1510, %v1493, %v1240
      %v1528 = vsel %vm1510, %v1495, %v1242
      %v1530 = vsel %vm1510, %v1497, %v1244
      %v1532 = vsel %vm1510, %v1499, %v1246
      %v1534 = vsel %vm1510, %v1501, %v1248
      %v1536 = vsel %vm1510, %v1503, %v1250
      %v1538 = vsel %vm1510, %v1505, %v1252
      %v1540 = vsel %vm1510, %v1507, %v1254
      %v1542 = vsel %vm1510, %v1509, %v1256
      %vm1543 = vcmask 392192
      %v1545 = vsel %vm1543, %v1512, %v1261
      %v1547 = vsel %vm1543, %v1514, %v1263
      %v1549 = vsel %vm1543, %v1516, %v1265
      %v1551 = vsel %vm1543, %v1518, %v1267
      %v1553 = vsel %vm1543, %v1520, %v1269
      %v1555 = vsel %vm1543, %v1522, %v1271
      %v1557 = vsel %vm1543, %v1524, %v1273
      %v1559 = vsel %vm1543, %v1526, %v1275
      %v1561 = vsel %vm1543, %v1528, %v1277
      %v1563 = vsel %vm1543, %v1530, %v1279
      %v1565 = vsel %vm1543, %v1532, %v1281
      %v1567 = vsel %vm1543, %v1534, %v1283
      %v1569 = vsel %vm1543, %v1536, %v1285
      %v1571 = vsel %vm1543, %v1538, %v1287
      %v1573 = vsel %vm1543, %v1540, %v1289
      %v1575 = vsel %vm1543, %v1542, %v1291
      %vm1576 = vcmask 457728
      %v1578 = vsel %vm1576, %v1545, %v1296
      %v1580 = vsel %vm1576, %v1547, %v1298
      %v1582 = vsel %vm1576, %v1549, %v1300
      %v1584 = vsel %vm1576, %v1551, %v1302
      %v1586 = vsel %vm1576, %v1553, %v1304
      %v1588 = vsel %vm1576, %v1555, %v1306
      %v1590 = vsel %vm1576, %v1557, %v1308
      %v1592 = vsel %vm1576, %v1559, %v1310
      %v1594 = vsel %vm1576, %v1561, %v1312
      %v1596 = vsel %vm1576, %v1563, %v1314
      %v1598 = vsel %vm1576, %v1565, %v1316
      %v1600 = vsel %vm1576, %v1567, %v1318
      %v1602 = vsel %vm1576, %v1569, %v1320
      %v1604 = vsel %vm1576, %v1571, %v1322
      %v1606 = vsel %vm1576, %v1573, %v1324
      %v1608 = vsel %vm1576, %v1575, %v1326
      %vm1609 = vcmask 523264
      %v1611 = vsel %vm1609, %v1578, %v1331
      %v1613 = vsel %vm1609, %v1580, %v1333
      %v1615 = vsel %vm1609, %v1582, %v1335
      %v1617 = vsel %vm1609, %v1584, %v1337
      %v1619 = vsel %vm1609, %v1586, %v1339
      %v1621 = vsel %vm1609, %v1588, %v1341
      %v1623 = vsel %vm1609, %v1590, %v1343
      %v1625 = vsel %vm1609, %v1592, %v1345
      %v1627 = vsel %vm1609, %v1594, %v1347
      %v1629 = vsel %vm1609, %v1596, %v1349
      %v1631 = vsel %vm1609, %v1598, %v1351
      %v1633 = vsel %vm1609, %v1600, %v1353
      %v1635 = vsel %vm1609, %v1602, %v1355
      %v1637 = vsel %vm1609, %v1604, %v1357
      %v1639 = vsel %vm1609, %v1606, %v1359
      %v1641 = vsel %vm1609, %v1608, %v1361
      %v1642 = vld [vmem:[%s3] sm:$0xf]
      %v1643 = vld [vmem:[%s3 + $0x4] sm:$0xf]
      %v1644 = vld [vmem:[%s3 + $0x8] sm:$0xf]
      %v1645 = vld [vmem:[%s3 + $0xc] sm:$0xf]
      %v1646 = vld [vmem:[%s3 + $0x10] sm:$0xf]
      %v1647 = vld [vmem:[%s3 + $0x14] sm:$0xf]
      %v1648 = vld [vmem:[%s3 + $0x18] sm:$0xf]
      %v1649 = vld [vmem:[%s3 + $0x1c] sm:$0xf]
      %v1650 = vld [vmem:[%s3 + $0x20] sm:$0xf]
      %v1660 = vunpack.c.l.b16 %v1642
      %v1661 = vunpack.c.l.b16 %v1643
      %v1662 = vunpack.c.l.b16 %v1644
      %v1663 = vunpack.c.l.b16 %v1645
      %v1664 = vunpack.c.l.b16 %v1646
      %v1665 = vunpack.c.l.b16 %v1647
      %v1666 = vunpack.c.l.b16 %v1648
      %v1667 = vunpack.c.l.b16 %v1649
      %v1668 = vunpack.c.l.b16 %v1650
      %v1669 = vpack.c.b16 %v1661, %v1660
      %v1670 = vpack.c.b16 %v1663, %v1662
      %v1671 = vpack.c.b16 %v1665, %v1664
      %v1672 = vpack.c.b16 %v1667, %v1666
      %v1673 = vpack.c.b16 %v1668, %v1668
      %vm1678 = vcmask 588800
      %v1679 = vsel %vm1678, %v1611, 0
      %v1681 = vsel %vm1678, %v1613, 0
      %v1683 = vsel %vm1678, %v1615, 0
      %v1685 = vsel %vm1678, %v1617, 0
      %v1687 = vsel %vm1678, %v1619, 0
      %v1689 = vsel %vm1678, %v1621, 0
      %v1691 = vsel %vm1678, %v1623, 0
      %v1693 = vsel %vm1678, %v1625, 0
      %v1695 = vsel %vm1678, %v1627, 0
      %v1697 = vsel %vm1678, %v1629, 0
      %v1699 = vsel %vm1678, %v1631, 0
      %v1701 = vsel %vm1678, %v1633, 0
      %v1703 = vsel %vm1678, %v1635, 0
      %v1705 = vsel %vm1678, %v1637, 0
      %v1707 = vsel %vm1678, %v1639, 0
      %v1709 = vsel %vm1678, %v1641, 0
      %vm1711 = vcmask 1043456
      %v1713 = vsel %vm1711, %v1673, 0
      %1715 = vmatprep.subr.bf16.mxu0 0
      %1716 = vmatpush1.bf16.msra.mxu0 %v1669
      %1717 = vmatprep.subr.bf16.mxu0 0
      %1718 = vmatpush1.bf16.msra.mxu0 %v1670
      %1719 = vmatprep.subr.bf16.mxu0 0
      %1720 = vmatpush1.bf16.msra.mxu0 %v1671
      %1721 = vmatprep.subr.bf16.mxu0 0
      %1722 = vmatpush1.bf16.msra.mxu0 %v1672
      %1723 = vmatprep.subr.bf16.mxu0 0
      %1724 = vmatpush1.bf16.msra.mxu0 %v1713
      %1725 = vmatprep.subr.bf16.mxu0 0
      %1726 = vmatpush1.bf16.msra.mxu0 0
      %1727 = vmatprep.subr.bf16.mxu0 0
      %1728 = vmatpush1.bf16.msra.mxu0 0
      %1729 = vmatprep.subr.bf16.mxu0 0
      %1730 = vmatpush1.bf16.msra.mxu0 0
      %1731 = vmatprep.subr.bf16.mxu0 0
      %1732 = vmatpush1.bf16.msra.mxu0 0
      %1733 = vmatprep.subr.bf16.mxu0 0
      %1734 = vmatpush1.bf16.msra.mxu0 0
      %1735 = vmatprep.subr.bf16.mxu0 0
      %1736 = vmatpush1.bf16.msra.mxu0 0
      %1737 = vmatprep.subr.bf16.mxu0 0
      %1738 = vmatpush1.bf16.msra.mxu0 0
      %1739 = vmatprep.subr.bf16.mxu0 0
      %1740 = vmatpush1.bf16.msra.mxu0 0
      %1741 = vmatprep.subr.bf16.mxu0 0
      %1742 = vmatpush1.bf16.msra.mxu0 0
      %1743 = vmatprep.subr.bf16.mxu0 0
      %1744 = vmatpush1.bf16.msra.mxu0 0
      %1745 = vmatprep.subr.bf16.mxu0 0
      %1746 = vmatpush1.bf16.msra.mxu0 0
      %1747 = vmatprep.mubr.bf16.mxu0 0
      %1748 = vmatmul.mubr.bf16.gmra.mrb[0].mxu0 %v1679
      %v1749 = vpop.f32.mrb[0].mxu0
      %v1750 = vadd.f32 0.0, %v1749
      %v1751 = vpop.f32.mrb[0].mxu0
      %v1752 = vpop.f32.mrb[0].mxu0
      %v1753 = vadd.f32 0.0, %v1752
      %v1754 = vpop.f32.mrb[0].mxu0
      %1755 = vmatprep.mubr.bf16.mxu0 0
      %1756 = vmatmul.mubr.bf16.gmra.mrb[0].mxu0 %v1681
      %v1757 = vpop.f32.mrb[0].mxu0
      %v1758 = vadd.f32 0.0, %v1757
      %v1759 = vpop.f32.mrb[0].mxu0
      %v1760 = vpop.f32.mrb[0].mxu0
      %v1761 = vadd.f32 0.0, %v1760
      %v1762 = vpop.f32.mrb[0].mxu0
      %1763 = vmatprep.mubr.bf16.mxu0 0
      %1764 = vmatmul.mubr.bf16.gmra.mrb[0].mxu0 %v1683
      %v1765 = vpop.f32.mrb[0].mxu0
      %v1766 = vadd.f32 0.0, %v1765
      %v1767 = vpop.f32.mrb[0].mxu0
      %v1768 = vpop.f32.mrb[0].mxu0
      %v1769 = vadd.f32 0.0, %v1768
      %v1770 = vpop.f32.mrb[0].mxu0
      %1771 = vmatprep.mubr.bf16.mxu0 0
      %1772 = vmatmul.mubr.bf16.gmra.mrb[0].mxu0 %v1685
      %v1773 = vpop.f32.mrb[0].mxu0
      %v1774 = vadd.f32 0.0, %v1773
      %v1775 = vpop.f32.mrb[0].mxu0
      %v1776 = vpop.f32.mrb[0].mxu0
      %v1777 = vadd.f32 0.0, %v1776
      %v1778 = vpop.f32.mrb[0].mxu0
      %1779 = vmatprep.mubr.bf16.mxu0 0
      %1780 = vmatmul.mubr.bf16.gmra.mrb[0].mxu0 %v1687
      %v1781 = vpop.f32.mrb[0].mxu0
      %v1782 = vadd.f32 0.0, %v1781
      %v1783 = vpop.f32.mrb[0].mxu0
      %v1784 = vpop.f32.mrb[0].mxu0
      %v1785 = vadd.f32 0.0, %v1784
      %v1786 = vpop.f32.mrb[0].mxu0
      %1787 = vmatprep.mubr.bf16.mxu0 0
      %1788 = vmatmul.mubr.bf16.gmra.mrb[0].mxu0 %v1689
      %v1789 = vpop.f32.mrb[0].mxu0
      %v1790 = vadd.f32 0.0, %v1789
      %v1791 = vpop.f32.mrb[0].mxu0
      %v1792 = vpop.f32.mrb[0].mxu0
      %v1793 = vadd.f32 0.0, %v1792
      %v1794 = vpop.f32.mrb[0].mxu0
      %1795 = vmatprep.mubr.bf16.mxu0 0
      %1796 = vmatmul.mubr.bf16.gmra.mrb[0].mxu0 %v1691
      %v1797 = vpop.f32.mrb[0].mxu0
      %v1798 = vadd.f32 0.0, %v1797
      %v1799 = vpop.f32.mrb[0].mxu0
      %v1800 = vpop.f32.mrb[0].mxu0
      %v1801 = vadd.f32 0.0, %v1800
      %v1802 = vpop.f32.mrb[0].mxu0
      %1803 = vmatprep.mubr.bf16.mxu0 0
      %1804 = vmatmul.mubr.bf16.gmra.mrb[0].mxu0 %v1693
      %v1805 = vpop.f32.mrb[0].mxu0
      %v1806 = vadd.f32 0.0, %v1805
      %v1807 = vpop.f32.mrb[0].mxu0
      %v1808 = vpop.f32.mrb[0].mxu0
      %v1809 = vadd.f32 0.0, %v1808
      %v1810 = vpop.f32.mrb[0].mxu0
      %1811 = vmatprep.mubr.bf16.mxu0 0
      %1812 = vmatmul.mubr.bf16.gmra.mrb[0].mxu0 %v1695
      %v1813 = vpop.f32.mrb[0].mxu0
      %v1814 = vadd.f32 0.0, %v1813
      %v1815 = vpop.f32.mrb[0].mxu0
      %v1816 = vpop.f32.mrb[0].mxu0
      %v1817 = vadd.f32 0.0, %v1816
      %v1818 = vpop.f32.mrb[0].mxu0
      %1819 = vmatprep.mubr.bf16.mxu0 0
      %1820 = vmatmul.mubr.bf16.gmra.mrb[0].mxu0 %v1697
      %v1821 = vpop.f32.mrb[0].mxu0
      %v1822 = vadd.f32 0.0, %v1821
      %v1823 = vpop.f32.mrb[0].mxu0
      %v1824 = vpop.f32.mrb[0].mxu0
      %v1825 = vadd.f32 0.0, %v1824
      %v1826 = vpop.f32.mrb[0].mxu0
      %1827 = vmatprep.mubr.bf16.mxu0 0
      %1828 = vmatmul.mubr.bf16.gmra.mrb[0].mxu0 %v1699
      %v1829 = vpop.f32.mrb[0].mxu0
      %v1830 = vadd.f32 0.0, %v1829
      %v1831 = vpop.f32.mrb[0].mxu0
      %v1832 = vpop.f32.mrb[0].mxu0
      %v1833 = vadd.f32 0.0, %v1832
      %v1834 = vpop.f32.mrb[0].mxu0
      %1835 = vmatprep.mubr.bf16.mxu0 0
      %1836 = vmatmul.mubr.bf16.gmra.mrb[0].mxu0 %v1701
      %v1837 = vpop.f32.mrb[0].mxu0
      %v1838 = vadd.f32 0.0, %v1837
      %v1839 = vpop.f32.mrb[0].mxu0
      %v1840 = vpop.f32.mrb[0].mxu0
      %v1841 = vadd.f32 0.0, %v1840
      %v1842 = vpop.f32.mrb[0].mxu0
      %1843 = vmatprep.mubr.bf16.mxu0 0
      %1844 = vmatmul.mubr.bf16.gmra.mrb[0].mxu0 %v1703
      %v1845 = vpop.f32.mrb[0].mxu0
      %v1846 = vadd.f32 0.0, %v1845
      %v1847 = vpop.f32.mrb[0].mxu0
      %v1848 = vpop.f32.mrb[0].mxu0
      %v1849 = vadd.f32 0.0, %v1848
      %v1850 = vpop.f32.mrb[0].mxu0
      %1851 = vmatprep.mubr.bf16.mxu0 0
      %1852 = vmatmul.mubr.bf16.gmra.mrb[0].mxu0 %v1705
      %v1853 = vpop.f32.mrb[0].mxu0
      %v1854 = vadd.f32 0.0, %v1853
      %v1855 = vpop.f32.mrb[0].mxu0
      %v1856 = vpop.f32.mrb[0].mxu0
      %v1857 = vadd.f32 0.0, %v1856
      %v1858 = vpop.f32.mrb[0].mxu0
      %1859 = vmatprep.mubr.bf16.mxu0 0
      %1860 = vmatmul.mubr.bf16.gmra.mrb[0].mxu0 %v1707
      %v1861 = vpop.f32.mrb[0].mxu0
      %v1862 = vadd.f32 0.0, %v1861
      %v1863 = vpop.f32.mrb[0].mxu0
      %v1864 = vpop.f32.mrb[0].mxu0
      %v1865 = vadd.f32 0.0, %v1864
      %v1866 = vpop.f32.mrb[0].mxu0
      %1867 = vmatprep.mubr.bf16.mxu0 0
      %1868 = vmatmul.mubr.bf16.gmra.mrb[0].mxu0 %v1709
      %v1869 = vpop.f32.mrb[0].mxu0
      %v1870 = vadd.f32 0.0, %v1869
      %v1871 = vpop.f32.mrb[0].mxu0
      %v1872 = vpop.f32.mrb[0].mxu0
      %v1873 = vadd.f32 0.0, %v1872
      %v1874 = vpop.f32.mrb[0].mxu0
      %1875 = vdwg.mxu0
      %v1876 = vpack.c.bf16 %v1753, %v1750
      %v1877 = vpack.c.bf16 %v1761, %v1758
      %v1878 = vpack.c.bf16 %v1769, %v1766
      %v1879 = vpack.c.bf16 %v1777, %v1774
      %v1880 = vpack.c.bf16 %v1785, %v1782
      %v1881 = vpack.c.bf16 %v1793, %v1790
      %v1882 = vpack.c.bf16 %v1801, %v1798
      %v1883 = vpack.c.bf16 %v1809, %v1806
      %v1884 = vpack.c.bf16 %v1817, %v1814
      %v1885 = vpack.c.bf16 %v1825, %v1822
      %v1886 = vpack.c.bf16 %v1833, %v1830
      %v1887 = vpack.c.bf16 %v1841, %v1838
      %v1888 = vpack.c.bf16 %v1849, %v1846
      %v1889 = vpack.c.bf16 %v1857, %v1854
      %v1890 = vpack.c.bf16 %v1865, %v1862
      %v1891 = vpack.c.bf16 %v1873, %v1870
      %v1908 = vunpack.c.l.b16 %v1876
      %v1909 = vunpack.c.h.b16 %v1876
      %v1910 = vunpack.c.l.b16 %v1877
      %v1911 = vunpack.c.h.b16 %v1877
      %v1912 = vunpack.c.l.b16 %v1878
      %v1913 = vunpack.c.h.b16 %v1878
      %v1914 = vunpack.c.l.b16 %v1879
      %v1915 = vunpack.c.h.b16 %v1879
      %v1916 = vunpack.c.l.b16 %v1880
      %v1917 = vunpack.c.h.b16 %v1880
      %v1918 = vunpack.c.l.b16 %v1881
      %v1919 = vunpack.c.h.b16 %v1881
      %v1920 = vunpack.c.l.b16 %v1882
      %v1921 = vunpack.c.h.b16 %v1882
      %v1922 = vunpack.c.l.b16 %v1883
      %v1923 = vunpack.c.h.b16 %v1883
      %v1924 = vunpack.c.l.b16 %v1884
      %v1925 = vunpack.c.h.b16 %v1884
      %v1926 = vunpack.c.l.b16 %v1885
      %v1927 = vunpack.c.h.b16 %v1885
      %v1928 = vunpack.c.l.b16 %v1886
      %v1929 = vunpack.c.h.b16 %v1886
      %v1930 = vunpack.c.l.b16 %v1887
      %v1931 = vunpack.c.h.b16 %v1887
      %v1932 = vunpack.c.l.b16 %v1888
      %v1933 = vunpack.c.h.b16 %v1888
      %v1934 = vunpack.c.l.b16 %v1889
      %v1935 = vunpack.c.h.b16 %v1889
      %v1936 = vunpack.c.l.b16 %v1890
      %v1937 = vunpack.c.h.b16 %v1890
      %v1938 = vunpack.c.l.b16 %v1891
      %v1939 = vunpack.c.h.b16 %v1891
      %v1940 = vpack.c.b16 %v1908, %v1908
      %v1941 = vpack.c.b16 %v1909, %v1909
      %v1942 = vpack.c.b16 %v1910, %v1910
      %v1943 = vpack.c.b16 %v1911, %v1911
      %v1944 = vpack.c.b16 %v1912, %v1912
      %v1945 = vpack.c.b16 %v1913, %v1913
      %v1946 = vpack.c.b16 %v1914, %v1914
      %v1947 = vpack.c.b16 %v1915, %v1915
      %v1948 = vpack.c.b16 %v1916, %v1916
      %v1949 = vpack.c.b16 %v1917, %v1917
      %v1950 = vpack.c.b16 %v1918, %v1918
      %v1951 = vpack.c.b16 %v1919, %v1919
      %v1952 = vpack.c.b16 %v1920, %v1920
      %v1953 = vpack.c.b16 %v1921, %v1921
      %v1954 = vpack.c.b16 %v1922, %v1922
      %v1955 = vpack.c.b16 %v1923, %v1923
      %v1956 = vpack.c.b16 %v1924, %v1924
      %v1957 = vpack.c.b16 %v1925, %v1925
      %v1958 = vpack.c.b16 %v1926, %v1926
      %v1959 = vpack.c.b16 %v1927, %v1927
      %v1960 = vpack.c.b16 %v1928, %v1928
      %v1961 = vpack.c.b16 %v1929, %v1929
      %v1962 = vpack.c.b16 %v1930, %v1930
      %v1963 = vpack.c.b16 %v1931, %v1931
      %v1964 = vpack.c.b16 %v1932, %v1932
      %v1965 = vpack.c.b16 %v1933, %v1933
      %v1966 = vpack.c.b16 %v1934, %v1934
      %v1967 = vpack.c.b16 %v1935, %v1935
      %v1968 = vpack.c.b16 %v1936, %v1936
      %v1969 = vpack.c.b16 %v1937, %v1937
      %v1970 = vpack.c.b16 %v1938, %v1938
      %v1971 = vpack.c.b16 %v1939, %v1939
      %vm2004 = vcmask 60416
      %2005 = vst.msk [vmem:[%s258] sm:$0xf] %vm2004, %v1940
      %2006 = vst.msk [vmem:[%s258 + $0x4] sm:$0xf] %vm2004, %v1941
      %2007 = vst.msk [vmem:[%s258 + $0x8] sm:$0xf] %vm2004, %v1942
      %2008 = vst.msk [vmem:[%s258 + $0xc] sm:$0xf] %vm2004, %v1943
      %2009 = vst.msk [vmem:[%s258 + $0x10] sm:$0xf] %vm2004, %v1944
      %2010 = vst.msk [vmem:[%s258 + $0x14] sm:$0xf] %vm2004, %v1945
      %2011 = vst.msk [vmem:[%s258 + $0x18] sm:$0xf] %vm2004, %v1946
      %2012 = vst.msk [vmem:[%s258 + $0x1c] sm:$0xf] %vm2004, %v1947
      %2013 = vst.msk [vmem:[%s258 + $0x20] sm:$0xf] %vm2004, %v1948
      %2014 = vst.msk [vmem:[%s258 + $0x24] sm:$0xf] %vm2004, %v1949
      %2015 = vst.msk [vmem:[%s258 + $0x28] sm:$0xf] %vm2004, %v1950
      %2016 = vst.msk [vmem:[%s258 + $0x2c] sm:$0xf] %vm2004, %v1951
      %2017 = vst.msk [vmem:[%s258 + $0x30] sm:$0xf] %vm2004, %v1952
      %2018 = vst.msk [vmem:[%s258 + $0x34] sm:$0xf] %vm2004, %v1953
      %2019 = vst.msk [vmem:[%s258 + $0x38] sm:$0xf] %vm2004, %v1954
      %2020 = vst.msk [vmem:[%s258 + $0x3c] sm:$0xf] %vm2004, %v1955
      %2021 = vst.msk [vmem:[%s258 + $0x40] sm:$0xf] %vm2004, %v1956
      %2022 = vst.msk [vmem:[%s258 + $0x44] sm:$0xf] %vm2004, %v1957
      %2023 = vst.msk [vmem:[%s258 + $0x48] sm:$0xf] %vm2004, %v1958
      %2024 = vst.msk [vmem:[%s258 + $0x4c] sm:$0xf] %vm2004, %v1959
      %2025 = vst.msk [vmem:[%s258 + $0x50] sm:$0xf] %vm2004, %v1960
      %2026 = vst.msk [vmem:[%s258 + $0x54] sm:$0xf] %vm2004, %v1961
      %2027 = vst.msk [vmem:[%s258 + $0x58] sm:$0xf] %vm2004, %v1962
      %2028 = vst.msk [vmem:[%s258 + $0x5c] sm:$0xf] %vm2004, %v1963
      %2029 = vst.msk [vmem:[%s258 + $0x60] sm:$0xf] %vm2004, %v1964
      %2030 = vst.msk [vmem:[%s258 + $0x64] sm:$0xf] %vm2004, %v1965
      %2031 = vst.msk [vmem:[%s258 + $0x68] sm:$0xf] %vm2004, %v1966
      %2032 = vst.msk [vmem:[%s258 + $0x6c] sm:$0xf] %vm2004, %v1967
      %2033 = vst.msk [vmem:[%s258 + $0x70] sm:$0xf] %vm2004, %v1968
      %2034 = vst.msk [vmem:[%s258 + $0x74] sm:$0xf] %vm2004, %v1969
      %2035 = vst.msk [vmem:[%s258 + $0x78] sm:$0xf] %vm2004, %v1970
      %2036 = vst.msk [vmem:[%s258 + $0x7c] sm:$0xf] %vm2004, %v1971
      %v2037 = vsel %vm1362, %v1750, 0.0
      %v2038 = vsel %vm1362, %v1753, 0.0
      %v2039 = vadd.f32 %v2037, %v2038
      %v2040 = vsel %vm1362, %v1758, 0.0
      %v2041 = vadd.f32 %v2039, %v2040
      %v2042 = vsel %vm1362, %v1761, 0.0
      %v2043 = vadd.f32 %v2041, %v2042
      %v2044 = vsel %vm1362, %v1766, 0.0
      %v2045 = vadd.f32 %v2043, %v2044
      %v2046 = vsel %vm1362, %v1769, 0.0
      %v2047 = vadd.f32 %v2045, %v2046
      %v2048 = vsel %vm1362, %v1774, 0.0
      %v2049 = vadd.f32 %v2047, %v2048
      %v2050 = vsel %vm1362, %v1777, 0.0
      %v2051 = vadd.f32 %v2049, %v2050
      %v2052 = vsel %vm1362, %v1782, 0.0
      %v2053 = vadd.f32 %v2051, %v2052
      %v2054 = vsel %vm1362, %v1785, 0.0
      %v2055 = vadd.f32 %v2053, %v2054
      %v2056 = vsel %vm1362, %v1790, 0.0
      %v2057 = vadd.f32 %v2055, %v2056
      %v2058 = vsel %vm1362, %v1793, 0.0
      %v2059 = vadd.f32 %v2057, %v2058
      %v2060 = vsel %vm1362, %v1798, 0.0
      %v2061 = vadd.f32 %v2059, %v2060
      %v2062 = vsel %vm1362, %v1801, 0.0
      %v2063 = vadd.f32 %v2061, %v2062
      %v2064 = vsel %vm1362, %v1806, 0.0
      %v2065 = vadd.f32 %v2063, %v2064
      %v2066 = vsel %vm1362, %v1809, 0.0
      %v2067 = vadd.f32 %v2065, %v2066
      %v2068 = vsel %vm1362, %v1814, 0.0
      %v2069 = vadd.f32 %v2067, %v2068
      %v2070 = vsel %vm1362, %v1817, 0.0
      %v2071 = vadd.f32 %v2069, %v2070
      %v2072 = vsel %vm1362, %v1822, 0.0
      %v2073 = vadd.f32 %v2071, %v2072
      %v2074 = vsel %vm1362, %v1825, 0.0
      %v2075 = vadd.f32 %v2073, %v2074
      %v2076 = vsel %vm1362, %v1830, 0.0
      %v2077 = vadd.f32 %v2075, %v2076
      %v2078 = vsel %vm1362, %v1833, 0.0
      %v2079 = vadd.f32 %v2077, %v2078
      %v2080 = vsel %vm1362, %v1838, 0.0
      %v2081 = vadd.f32 %v2079, %v2080
      %v2082 = vsel %vm1362, %v1841, 0.0
      %v2083 = vadd.f32 %v2081, %v2082
      %v2084 = vsel %vm1362, %v1846, 0.0
      %v2085 = vadd.f32 %v2083, %v2084
      %v2086 = vsel %vm1362, %v1849, 0.0
      %v2087 = vadd.f32 %v2085, %v2086
      %v2088 = vsel %vm1362, %v1854, 0.0
      %v2089 = vadd.f32 %v2087, %v2088
      %v2090 = vsel %vm1362, %v1857, 0.0
      %v2091 = vadd.f32 %v2089, %v2090
      %v2092 = vsel %vm1362, %v1862, 0.0
      %v2093 = vadd.f32 %v2091, %v2092
      %v2094 = vsel %vm1362, %v1865, 0.0
      %v2095 = vadd.f32 %v2093, %v2094
      %v2096 = vsel %vm1362, %v1870, 0.0
      %v2097 = vadd.f32 %v2095, %v2096
      %v2098 = vsel %vm1362, %v1873, 0.0
      %v2099 = vadd.f32 %v2097, %v2098
      %v2100 = vrot.slane %v2099, 4
      %v2101 = vadd.f32 %v2099, %v2100
      %v2102 = vrot.slane %v2101, 2
      %v2103 = vadd.f32 %v2101, %v2102
      %v2104 = vrot.slane %v2103, 1
      %v2105 = vadd.f32 %v2103, %v2104
      %v2106 = vmul.f32 %v1750, %v1750
      %v2107 = vmul.f32 %v1753, %v1753
      %v2108 = vmul.f32 %v1758, %v1758
      %v2109 = vmul.f32 %v1761, %v1761
      %v2110 = vmul.f32 %v1766, %v1766
      %v2111 = vmul.f32 %v1769, %v1769
      %v2112 = vmul.f32 %v1774, %v1774
      %v2113 = vmul.f32 %v1777, %v1777
      %v2114 = vmul.f32 %v1782, %v1782
      %v2115 = vmul.f32 %v1785, %v1785
      %v2116 = vmul.f32 %v1790, %v1790
      %v2117 = vmul.f32 %v1793, %v1793
      %v2118 = vmul.f32 %v1798, %v1798
      %v2119 = vmul.f32 %v1801, %v1801
      %v2120 = vmul.f32 %v1806, %v1806
      %v2121 = vmul.f32 %v1809, %v1809
      %v2122 = vmul.f32 %v1814, %v1814
      %v2123 = vmul.f32 %v1817, %v1817
      %v2124 = vmul.f32 %v1822, %v1822
      %v2125 = vmul.f32 %v1825, %v1825
      %v2126 = vmul.f32 %v1830, %v1830
      %v2127 = vmul.f32 %v1833, %v1833
      %v2128 = vmul.f32 %v1838, %v1838
      %v2129 = vmul.f32 %v1841, %v1841
      %v2130 = vmul.f32 %v1846, %v1846
      %v2131 = vmul.f32 %v1849, %v1849
      %v2132 = vmul.f32 %v1854, %v1854
      %v2133 = vmul.f32 %v1857, %v1857
      %v2134 = vmul.f32 %v1862, %v1862
      %v2135 = vmul.f32 %v1865, %v1865
      %v2136 = vmul.f32 %v1870, %v1870
      %v2137 = vmul.f32 %v1873, %v1873
      %v2138 = vsel %vm1362, %v2106, 0.0
      %v2139 = vsel %vm1362, %v2107, 0.0
      %v2140 = vadd.f32 %v2138, %v2139
      %v2141 = vsel %vm1362, %v2108, 0.0
      %v2142 = vadd.f32 %v2140, %v2141
      %v2143 = vsel %vm1362, %v2109, 0.0
      %v2144 = vadd.f32 %v2142, %v2143
      %v2145 = vsel %vm1362, %v2110, 0.0
      %v2146 = vadd.f32 %v2144, %v2145
      %v2147 = vsel %vm1362, %v2111, 0.0
      %v2148 = vadd.f32 %v2146, %v2147
      %v2149 = vsel %vm1362, %v2112, 0.0
      %v2150 = vadd.f32 %v2148, %v2149
      %v2151 = vsel %vm1362, %v2113, 0.0
      %v2152 = vadd.f32 %v2150, %v2151
      %v2153 = vsel %vm1362, %v2114, 0.0
      %v2154 = vadd.f32 %v2152, %v2153
      %v2155 = vsel %vm1362, %v2115, 0.0
      %v2156 = vadd.f32 %v2154, %v2155
      %v2157 = vsel %vm1362, %v2116, 0.0
      %v2158 = vadd.f32 %v2156, %v2157
      %v2159 = vsel %vm1362, %v2117, 0.0
      %v2160 = vadd.f32 %v2158, %v2159
      %v2161 = vsel %vm1362, %v2118, 0.0
      %v2162 = vadd.f32 %v2160, %v2161
      %v2163 = vsel %vm1362, %v2119, 0.0
      %v2164 = vadd.f32 %v2162, %v2163
      %v2165 = vsel %vm1362, %v2120, 0.0
      %v2166 = vadd.f32 %v2164, %v2165
      %v2167 = vsel %vm1362, %v2121, 0.0
      %v2168 = vadd.f32 %v2166, %v2167
      %v2169 = vsel %vm1362, %v2122, 0.0
      %v2170 = vadd.f32 %v2168, %v2169
      %v2171 = vsel %vm1362, %v2123, 0.0
      %v2172 = vadd.f32 %v2170, %v2171
      %v2173 = vsel %vm1362, %v2124, 0.0
      %v2174 = vadd.f32 %v2172, %v2173
      %v2175 = vsel %vm1362, %v2125, 0.0
      %v2176 = vadd.f32 %v2174, %v2175
      %v2177 = vsel %vm1362, %v2126, 0.0
      %v2178 = vadd.f32 %v2176, %v2177
      %v2179 = vsel %vm1362, %v2127, 0.0
      %v2180 = vadd.f32 %v2178, %v2179
      %v2181 = vsel %vm1362, %v2128, 0.0
      %v2182 = vadd.f32 %v2180, %v2181
      %v2183 = vsel %vm1362, %v2129, 0.0
      %v2184 = vadd.f32 %v2182, %v2183
      %v2185 = vsel %vm1362, %v2130, 0.0
      %v2186 = vadd.f32 %v2184, %v2185
      %v2187 = vsel %vm1362, %v2131, 0.0
      %v2188 = vadd.f32 %v2186, %v2187
      %v2189 = vsel %vm1362, %v2132, 0.0
      %v2190 = vadd.f32 %v2188, %v2189
      %v2191 = vsel %vm1362, %v2133, 0.0
      %v2192 = vadd.f32 %v2190, %v2191
      %v2193 = vsel %vm1362, %v2134, 0.0
      %v2194 = vadd.f32 %v2192, %v2193
      %v2195 = vsel %vm1362, %v2135, 0.0
      %v2196 = vadd.f32 %v2194, %v2195
      %v2197 = vsel %vm1362, %v2136, 0.0
      %v2198 = vadd.f32 %v2196, %v2197
      %v2199 = vsel %vm1362, %v2137, 0.0
      %v2200 = vadd.f32 %v2198, %v2199
      %v2201 = vrot.slane %v2200, 4
      %v2202 = vadd.f32 %v2200, %v2201
      %v2203 = vrot.slane %v2202, 2
      %v2204 = vadd.f32 %v2202, %v2203
      %v2205 = vrot.slane %v2204, 1
      %v2206 = vadd.f32 %v2204, %v2205
      %vm2207 = vcmask 1040384
      %v2208 = vsel %vm2207, %v2105, %v2206
      %vm2209 = vcmask 58368
      %2210 = vst.msk [vmem:[%s266] sm:$0x3] %vm2209, %v2208
      %s2211 = smul.u32 32, %s22
      %p2212 = scmp.lt.s32.totalorder %s21, 1
      %s2213 = scalar_select %p2212, %s21, 1
      %p2214 = scmp.lt.s32.totalorder %s2211, 31
      %s2215 = scalar_select %p2214, %s2211, 31
      %s2216 = smul.addr %s2213, 32
      %s2217 = sadd.s32 %s2215, %s2216
      %s2218 = smul.addr %s2217, 4
      %s2219 = scalar_lea.vmem %s4, %s2218
      %p2220 = scmp.lt.s32.totalorder %s21, 1
      %s2221 = scalar_select %p2220, %s21, 1
      %p2222 = scmp.lt.s32.totalorder %s22, 0
      %s2223 = scalar_select %p2222, %s22, 0
      %s2224 = sadd.s32 %s2223, %s2221
      %s2225 = smul.addr %s2224, 2
      %s2226 = scalar_lea.vmem %s5, %s2225
      // Predicated region
      $region37: #{resblock_forward.3} parent=35 // pred_check
        %p2227 = pneg %p138
      $region38: #{resblock_forward.3} parent=35 // pred_check_branch
        %2229 = sbr.rel (%p2227) target = $region40
      $region39: #{resblock_forward.3} parent=35 // pred_region
        %s2230 = smul.u32 32, %s22
      $region40: #{resblock_forward.3} parent=35 // pred_fallthru
        _
      // Predicated region
      $region41: #{resblock_forward.3} parent=35 // pred_check
        %p2231 = pneg %p166
      $region42: #{resblock_forward.3} parent=35 // pred_check_branch
        %2233 = sbr.rel (%p2231) target = $region44
      $region43: #{resblock_forward.3} parent=35 // pred_region
        _
      $region44: #{resblock_forward.3} parent=35 // pred_fallthru
        _
    $region36: #{resblock_forward.3} parent=5 // pred_fallthru
      _
    %p2234 = scmp.le.s32.totalorder 2, %s12
    // Predicated region
    $region45: #{resblock_forward.3} parent=5 // pred_check
      %p2235 = pneg %p2234
    $region46: #{resblock_forward.3} parent=5 // pred_check_branch
      %2237 = sbr.rel (%p2235) target = $region48
    $region47: #{resblock_forward.3} parent=5 // pred_region
      %s2238 = ssub.s32 %s12, 2
      // Predicated region
      $region49: #{resblock_forward.3} parent=47 // pred_check
        %p2239 = pneg %p144
      $region50: #{resblock_forward.3} parent=47 // pred_check_branch
        %2241 = sbr.rel (%p2239) target = $region52
      $region51: #{resblock_forward.3} parent=47 // pred_region
        %s2242 = smul.u32 32, %s24
        %p2243 = scmp.lt.s32.totalorder %s23, 1
        %s2244 = scalar_select %p2243, %s23, 1
        %p2245 = scmp.lt.s32.totalorder %s2242, 31
        %s2246 = scalar_select %p2245, %s2242, 31
        %s2247 = smul.addr %s2244, 32
        %s2248 = sadd.s32 %s2246, %s2247
        %s2249 = smul.addr %s2248, 4
        %s2250 = scalar_lea.vmem %s4, %s2249
      $region52: #{resblock_forward.3} parent=47 // pred_fallthru
        _
      // Predicated region
      $region53: #{resblock_forward.3} parent=47 // pred_check
        %p2251 = pneg %p172
      $region54: #{resblock_forward.3} parent=47 // pred_check_branch
        %2253 = sbr.rel (%p2251) target = $region56
      $region55: #{resblock_forward.3} parent=47 // pred_region
        %p2254 = scmp.lt.s32.totalorder %s23, 1
        %s2255 = scalar_select %p2254, %s23, 1
        %p2256 = scmp.lt.s32.totalorder %s24, 0
        %s2257 = scalar_select %p2256, %s24, 0
        %s2258 = sadd.s32 %s2257, %s2255
        %s2259 = smul.addr %s2258, 2
        %s2260 = scalar_lea.vmem %s5, %s2259
      $region56: #{resblock_forward.3} parent=47 // pred_fallthru
        _
    $region48: #{resblock_forward.3} parent=5 // pred_fallthru
      _
  $region6: #{resblock_forward.3} parent=0 // loop_footer
    %s16 = sadd.s32 1, %s12
  $region7: #{resblock_forward.3} parent=0 // loop_footer_branch
    %11 = sbr.rel target = $region3
  $region8: #{resblock_forward.3} parent=0 // loop_exit
    _

</llo_original>
